<compile_context>
chip_gen: v5e
topology: v5e:2x2
jax: 0.10.0
libtpu: 0.0.40
codegen_flags: <defaults>
</compile_context>

<pallas_src>
import numpy as np
import jax
import jax.numpy as jnp
from jax.experimental import pallas as pl
from jax.experimental.pallas import tpu as pltpu

EPS = 1e-5
MM_DTYPE = jnp.bfloat16   # MXU matmul operand dtype (accumulation stays f32)


# ------------------------------ Pallas kernel ------------------------------ #

def _bottleneck_kernel(x_ref, mask_ref, w1_ref, b1_ref, w2_ref, b2_ref,
                       w3_ref, b3_ref, o_ref, h1_scr):
    """Fused conv1x1+bn+relu -> conv3x3+bn+relu -> conv1x1+bn + residual + relu.

    x_ref   : (1, Mp, Cin)  f32, Mp = (H+2)*(W+2), spatially zero-padded image
    mask_ref: (Mp, 1)       f32, 1 on valid pixels, 0 on the padded ring
    w*_ref  : bf16 weights with BN scale folded in; b*_ref: f32 biases
    o_ref   : (1, Mo, Cout) f32, Mo = H*(W+2) (2 garbage cols/row, host drops)
    h1_scr  : (Mp + 8, planes) bf16 VMEM scratch holding the padded h1 slab
    """
    Mp = x_ref.shape[1]           # (H+2) * (W+2)
    P = w1_ref.shape[1]           # planes
    Mo = o_ref.shape[1]           # H * (W+2)
    Wp = (Mp - Mo) // 2           # W + 2

    x = x_ref[0]                                  # (Mp, Cin) f32
    xc = x.astype(w1_ref.dtype)

    # --- conv1 (1x1) + bn1 (scale folded into w1) + relu -------------------
    h1 = jnp.dot(xc, w1_ref[...], preferred_element_type=jnp.float32)
    h1 = jnp.maximum(h1 + b1_ref[...], 0.0)
    h1 = h1 * mask_ref[...]        # zero the halo ring == conv2's zero padding

    h1_scr[...] = jnp.zeros(h1_scr.shape, h1_scr.dtype)
    h1_scr[0:Mp, :] = h1.astype(h1_scr.dtype)

    # --- conv2 (3x3, stride=1, pad=1): 9 shifted matmuls, f32 accumulation --
    acc = jnp.zeros((Mo, P), jnp.float32)
    for kh in range(3):
        for kw in range(3):
            off = kh * Wp + kw
            tap = h1_scr[off:off + Mo, :]                      # (Mo, P) bf16
            acc = acc + jnp.dot(tap, w2_ref[kh * 3 + kw],
                                preferred_element_type=jnp.float32)
    h2 = jnp.maximum(acc + b2_ref[...], 0.0)

    # --- conv3 (1x1) + bn3 + residual add + relu ----------------------------
    y = jnp.dot(h2.astype(w3_ref.dtype), w3_ref[...],
                preferred_element_type=jnp.float32)
    y = y + b3_ref[...] + x[Wp + 1:Wp + 1 + Mo, :]             # residual (f32)
    o_ref[0] = jnp.maximum(y, 0.0).astype(o_ref.dtype)


# ------------------------------- host helpers ------------------------------ #

def _fold_bn_into_weight(w, bn, eps=EPS):
    """Fold eval-mode BN scale into the output-channel (last) axis of w."""
    gamma, beta, mean, var = bn
    s = gamma / jnp.sqrt(var + eps)
    b = beta - mean * s
    w_folded = w * s.reshape((1,) * (w.ndim - 1) + (-1,))
    return w_folded, b.reshape(1, -1).astype(jnp.float32)


def _padded_vmem_bytes(shape, dtype):
    """Rough VMEM footprint of one buffer incl. (sublane, 128)-lane padding."""
    dt = np.dtype(dtype)
    sub_mult = 8 * (4 // dt.itemsize)           # 8 for f32, 16 for bf16
    shape = tuple(int(d) for d in shape)
    if len(shape) == 1:
        shape = (1,) + shape
    lead = 1
    for d in shape[:-2]:
        lead *= d
    sub = -(-shape[-2] // sub_mult) * sub_mult
    lane = -(-shape[-1] // 128) * 128
    return lead * sub * lane * dt.itemsize


def bottleneck_forward(x_nchw, w1_oihw, w2_oihw, w3_oihw, bn1, bn2, bn3):
    """Pallas implementation of Bottleneck.forward (stride=1, no downsample)."""
    N, C, H, W = x_nchw.shape
    P = w1_oihw.shape[0]                  # planes
    Cout = w3_oihw.shape[0]               # planes * expansion
    assert Cout == C, "residual add requires inplanes == planes * expansion"

    Hp, Wp = H + 2, W + 2
    Mp = Hp * Wp                          # rows of the padded slab
    Mo = H * Wp                           # output rows (2 garbage cols per row)

    # ---- layout: NCHW -> NHWC, zero-pad spatially, flatten rows ------------
    # TODO(synk): keep NHWC end-to-end across stacked blocks to avoid the
    #             per-block NCHW<->NHWC transposes.
    x_nhwc = jnp.transpose(x_nchw, (0, 2, 3, 1)).astype(jnp.float32)
    x_pad = jnp.pad(x_nhwc, ((0, 0), (1, 1), (1, 1), (0, 0)))
    x_flat = x_pad.reshape(N, Mp, C)

    # valid-pixel mask (0 on the padded ring)
    hh = jnp.arange(Hp)[:, None]
    ww = jnp.arange(Wp)[None, :]
    valid = (hh >= 1) & (hh <= H) & (ww >= 1) & (ww <= W)
    mask = valid.astype(jnp.float32).reshape(Mp, 1)

    # ---- fold BN scale into weights, repack for channels-last matmuls ------
    w1, b1 = _fold_bn_into_weight(jnp.transpose(w1_oihw[:, :, 0, 0], (1, 0)), bn1)
    w2_taps = jnp.transpose(w2_oihw, (2, 3, 1, 0)).reshape(9, P, P)  # [kh*3+kw, in, out]
    w2, b2 = _fold_bn_into_weight(w2_taps, bn2)
    w3, b3 = _fold_bn_into_weight(jnp.transpose(w3_oihw[:, :, 0, 0], (1, 0)), bn3)
    w1 = w1.astype(MM_DTYPE)
    w2 = w2.astype(MM_DTYPE)
    w3 = w3.astype(MM_DTYPE)

    # ---- VMEM budget + cost hints ------------------------------------------
    io_bytes = (_padded_vmem_bytes((1, Mp, C), jnp.float32)
                + _padded_vmem_bytes((1, Mo, Cout), jnp.float32))
    const_bytes = sum(_padded_vmem_bytes(a.shape, a.dtype)
                      for a in (mask, w1, b1, w2, b2, w3, b3))
    scratch_bytes = _padded_vmem_bytes((Mp + 8, P), MM_DTYPE)
    est = 3 * io_bytes + 2 * const_bytes + scratch_bytes
    vmem_limit = int(min(48 * 2**20, max(32 * 2**20, 2 * est)))

    flops = int(2 * N * (Mp * C * P + 9 * Mo * P * P + Mo * P * Cout))
    bytes_accessed = int(N * Mp * C * 4 + N * Mo * Cout * 4
                         + sum(int(a.size) * a.dtype.itemsize
                               for a in (mask, w1, b1, w2, b2, w3, b3)))
    cost = pl.CostEstimate(flops=flops, transcendentals=0,
                           bytes_accessed=bytes_accessed)

    out_flat = pl.pallas_call(
        _bottleneck_kernel,
        out_shape=jax.ShapeDtypeStruct((N, Mo, Cout), jnp.float32),
        grid=(N,),
        in_specs=[
            pl.BlockSpec((1, Mp, C), lambda n: (n, 0, 0)),        # x (per image)
            pl.BlockSpec((Mp, 1), lambda n: (0, 0)),              # mask (resident)
            pl.BlockSpec((C, P), lambda n: (0, 0)),               # w1
            pl.BlockSpec((1, P), lambda n: (0, 0)),               # b1
            pl.BlockSpec((9, P, P), lambda n: (0, 0, 0)),         # w2 taps
            pl.BlockSpec((1, P), lambda n: (0, 0)),               # b2
            pl.BlockSpec((P, Cout), lambda n: (0, 0)),            # w3
            pl.BlockSpec((1, Cout), lambda n: (0, 0)),            # b3
        ],
        out_specs=pl.BlockSpec((1, Mo, Cout), lambda n: (n, 0, 0)),
        scratch_shapes=[pltpu.VMEM((Mp + 8, P), MM_DTYPE)],
        compiler_params=pltpu.CompilerParams(
            dimension_semantics=("parallel",),
            vmem_limit_bytes=vmem_limit),
        cost_estimate=cost,
    )(x_flat, mask, w1, b1, w2, b2, w3, b3)

    # drop the 2 garbage columns per spatial row, restore NCHW
    out = out_flat.reshape(N, H, Wp, Cout)[:, :, :W, :]
    return jnp.transpose(out, (0, 3, 1, 2))


# ---------------------------- pure-JAX reference ---------------------------- #

def reference_forward(x, w1_oihw, w2_oihw, w3_oihw, bn1, bn2, bn3, eps=EPS):
    def conv(x, w, stride=1, pad=0):
        return jax.lax.conv_general_dilated(
            x, w, (stride, stride), [(pad, pad), (pad, pad)],
            dimension_numbers=("NCHW", "OIHW", "NCHW"))

    def bn(x, p):
        g, b, m, v = p
        return ((x - m[None, :, None, None])
                / jnp.sqrt(v[None, :, None, None] + eps)
                * g[None, :, None, None] + b[None, :, None, None])

    out = jnp.maximum(bn(conv(x, w1_oihw), bn1), 0.0)
    out = jnp.maximum(bn(conv(out, w2_oihw, 1, 1), bn2), 0.0)
    out = bn(conv(out, w3_oihw), bn3)
    return jnp.maximum(out + x, 0.0)


# ----------------------------------- main ----------------------------------- #

if __name__ == "__main__":
    N, H, W = 2, 16, 16
    planes = 4
    inplanes = planes * 4          # expansion = 4, required for residual add

    key = jax.random.PRNGKey(0)
    kx, k1, k2, k3 = jax.random.split(key, 4)

    # Input (NCHW, like PyTorch).
    x = jax.random.normal(kx, (N, inplanes, H, W), dtype=jnp.float32)

    # Conv weights, PyTorch OIHW layout.
    w1_oihw = 0.1 * jax.random.normal(k1, (planes, inplanes, 1, 1), jnp.float32)
    w2_oihw = 0.1 * jax.random.normal(k2, (planes, planes, 3, 3), jnp.float32)
    w3_oihw = 0.1 * jax.random.normal(k3, (planes * 4, planes, 1, 1), jnp.float32)

    # Deterministic BatchNorm params: (gamma, beta, running_mean, running_var).
    def make_bn(c):
        ar = jnp.arange(c, dtype=jnp.float32)
        return (1.0 + 0.1 * ar / c,      # gamma
                0.05 * ar,               # beta
                0.01 * ar,               # running_mean
                1.0 + 0.02 * ar)         # running_var (> 0)

    bn1, bn2, bn3 = make_bn(planes), make_bn(planes), make_bn(planes * 4)

    out = bottleneck_forward(x, w1_oihw, w2_oihw, w3_oihw, bn1, bn2, bn3)
    out = jax.block_until_ready(out)

    ref = reference_forward(x, w1_oihw, w2_oihw, w3_oihw, bn1, bn2, bn3)
    ref = jax.block_until_ready(ref)

    assert out.shape == (N, planes * 4, H, W), out.shape
    # bf16 matmul operands with f32 accumulation -> loosened tolerance.
    np.testing.assert_allclose(np.asarray(out), np.asarray(ref),
                               rtol=3e-2, atol=3e-2)
    print("KERNEL_OK")
</pallas_src>

<mosaic_0001>
module attributes {stable_mosaic.version = 11 : i64} {
  func.func @_bottleneck_kernel(%arg0: i32, %arg1: memref<1x324x16xf32, #tpu.memory_space<vmem>>, %arg2: memref<324x1xf32, #tpu.memory_space<vmem>>, %arg3: memref<16x4xbf16, #tpu.memory_space<vmem>>, %arg4: memref<1x4xf32, #tpu.memory_space<vmem>>, %arg5: memref<9x4x4xbf16, #tpu.memory_space<vmem>>, %arg6: memref<1x4xf32, #tpu.memory_space<vmem>>, %arg7: memref<4x16xbf16, #tpu.memory_space<vmem>>, %arg8: memref<1x16xf32, #tpu.memory_space<vmem>>, %arg9: memref<1x288x16xf32, #tpu.memory_space<vmem>>, %arg10: memref<332x4xbf16, #tpu.memory_space<vmem>>) attributes {dimension_semantics = [#tpu.dimension_semantics<parallel>], iteration_bounds = array<i64: 2>, scalar_prefetch = 0 : i64, scratch_operands = 1 : i64, tpu.core_type = #tpu.core_type<tc>, window_params = [{transform_indices = @transform_0, window_bounds = array<i64: 1, 324, 16>}, {pipeline_mode = #tpu.pipeline_mode<synchronous>, transform_indices = @transform_1, window_bounds = array<i64: 324, 1>}, {pipeline_mode = #tpu.pipeline_mode<synchronous>, transform_indices = @transform_2, window_bounds = array<i64: 16, 4>}, {pipeline_mode = #tpu.pipeline_mode<synchronous>, transform_indices = @transform_3, window_bounds = array<i64: 1, 4>}, {pipeline_mode = #tpu.pipeline_mode<synchronous>, transform_indices = @transform_4, window_bounds = array<i64: 9, 4, 4>}, {pipeline_mode = #tpu.pipeline_mode<synchronous>, transform_indices = @transform_5, window_bounds = array<i64: 1, 4>}, {pipeline_mode = #tpu.pipeline_mode<synchronous>, transform_indices = @transform_6, window_bounds = array<i64: 4, 16>}, {pipeline_mode = #tpu.pipeline_mode<synchronous>, transform_indices = @transform_7, window_bounds = array<i64: 1, 16>}, {transform_indices = @transform_8, window_bounds = array<i64: 1, 288, 16>}]} {
    %c0 = arith.constant 0 : index
    %c0_0 = arith.constant 0 : index
    %c0_1 = arith.constant 0 : index
    %0 = vector.load %arg1[%c0, %c0_0, %c0_1] : memref<1x324x16xf32, #tpu.memory_space<vmem>>, vector<1x324x16xf32>
    %1 = vector.shape_cast %0 : vector<1x324x16xf32> to vector<324x16xf32>
    %2 = arith.truncf %1 : vector<324x16xf32> to vector<324x16xbf16>
    %c0_2 = arith.constant 0 : index
    %c0_3 = arith.constant 0 : index
    %3 = vector.load %arg3[%c0_2, %c0_3] : memref<16x4xbf16, #tpu.memory_space<vmem>>, vector<16x4xbf16>
    %cst = arith.constant dense<0.000000e+00> : vector<324x4xf32>
    %4 = tpu.matmul %2, %3, %cst {dimension_numbers = #tpu.dot_dimension_numbers<[1], [0], [0], [1], [0, 0, 1, 1], [], []>} : vector<324x16xbf16>, vector<16x4xbf16>, vector<324x4xf32> -> vector<324x4xf32>
    %c0_4 = arith.constant 0 : index
    %c0_5 = arith.constant 0 : index
    %5 = vector.load %arg4[%c0_4, %c0_5] : memref<1x4xf32, #tpu.memory_space<vmem>>, vector<1x4xf32>
    %6 = vector.broadcast %5 : vector<1x4xf32> to vector<324x4xf32>
    %7 = arith.addf %4, %6 : vector<324x4xf32>
    %cst_6 = arith.constant 0.000000e+00 : f32
    %8 = vector.broadcast %cst_6 : f32 to vector<324x4xf32>
    %9 = arith.maximumf %7, %8 : vector<324x4xf32>
    %c0_7 = arith.constant 0 : index
    %c0_8 = arith.constant 0 : index
    %10 = vector.load %arg2[%c0_7, %c0_8] : memref<324x1xf32, #tpu.memory_space<vmem>>, vector<324x1xf32>
    %11 = vector.broadcast %10 : vector<324x1xf32> to vector<324x4xf32>
    %12 = arith.mulf %9, %11 : vector<324x4xf32>
    %cst_9 = arith.constant 0.000000e+00 : bf16
    %13 = vector.broadcast %cst_9 : bf16 to vector<332x4xbf16>
    %c0_10 = arith.constant 0 : index
    %c0_11 = arith.constant 0 : index
    %14 = vector.load %arg10[%c0_10, %c0_11] : memref<332x4xbf16, #tpu.memory_space<vmem>>, vector<332x4xbf16>
    tpu.vector_store %arg10[%c0_10, %c0_11], %13 {strides = array<i32>} : memref<332x4xbf16, #tpu.memory_space<vmem>>, vector<332x4xbf16>,
    %15 = arith.truncf %12 : vector<324x4xf32> to vector<324x4xbf16>
    %c0_12 = arith.constant 0 : index
    %c0_13 = arith.constant 0 : index
    %16 = vector.load %arg10[%c0_12, %c0_13] : memref<332x4xbf16, #tpu.memory_space<vmem>>, vector<324x4xbf16>
    tpu.vector_store %arg10[%c0_12, %c0_13], %15 {strides = array<i32>} : memref<332x4xbf16, #tpu.memory_space<vmem>>, vector<324x4xbf16>,
    %cst_14 = arith.constant 0.000000e+00 : f32
    %17 = vector.broadcast %cst_14 : f32 to vector<288x4xf32>
    %c0_15 = arith.constant 0 : index
    %c0_16 = arith.constant 0 : index
    %18 = vector.load %arg10[%c0_15, %c0_16] : memref<332x4xbf16, #tpu.memory_space<vmem>>, vector<288x4xbf16>
    %c0_17 = arith.constant 0 : index
    %c0_18 = arith.constant 0 : index
    %c0_19 = arith.constant 0 : index
    %19 = vector.load %arg5[%c0_17, %c0_18, %c0_19] : memref<9x4x4xbf16, #tpu.memory_space<vmem>>, vector<1x4x4xbf16>
    %20 = vector.shape_cast %19 : vector<1x4x4xbf16> to vector<4x4xbf16>
    %cst_20 = arith.constant dense<0.000000e+00> : vector<288x4xf32>
    %21 = tpu.matmul %18, %20, %cst_20 {dimension_numbers = #tpu.dot_dimension_numbers<[1], [0], [0], [1], [0, 0, 1, 1], [], []>} : vector<288x4xbf16>, vector<4x4xbf16>, vector<288x4xf32> -> vector<288x4xf32>
    %22 = arith.addf %17, %21 : vector<288x4xf32>
    %c1 = arith.constant 1 : index
    %c0_21 = arith.constant 0 : index
    %23 = vector.load %arg10[%c1, %c0_21] : memref<332x4xbf16, #tpu.memory_space<vmem>>, vector<288x4xbf16>
    %c1_22 = arith.constant 1 : index
    %c0_23 = arith.constant 0 : index
    %c0_24 = arith.constant 0 : index
    %24 = vector.load %arg5[%c1_22, %c0_23, %c0_24] : memref<9x4x4xbf16, #tpu.memory_space<vmem>>, vector<1x4x4xbf16>
    %25 = vector.shape_cast %24 : vector<1x4x4xbf16> to vector<4x4xbf16>
    %cst_25 = arith.constant dense<0.000000e+00> : vector<288x4xf32>
    %26 = tpu.matmul %23, %25, %cst_25 {dimension_numbers = #tpu.dot_dimension_numbers<[1], [0], [0], [1], [0, 0, 1, 1], [], []>} : vector<288x4xbf16>, vector<4x4xbf16>, vector<288x4xf32> -> vector<288x4xf32>
    %27 = arith.addf %22, %26 : vector<288x4xf32>
    %c2 = arith.constant 2 : index
    %c0_26 = arith.constant 0 : index
    %28 = vector.load %arg10[%c2, %c0_26] : memref<332x4xbf16, #tpu.memory_space<vmem>>, vector<288x4xbf16>
    %c2_27 = arith.constant 2 : index
    %c0_28 = arith.constant 0 : index
    %c0_29 = arith.constant 0 : index
    %29 = vector.load %arg5[%c2_27, %c0_28, %c0_29] : memref<9x4x4xbf16, #tpu.memory_space<vmem>>, vector<1x4x4xbf16>
    %30 = vector.shape_cast %29 : vector<1x4x4xbf16> to vector<4x4xbf16>
    %cst_30 = arith.constant dense<0.000000e+00> : vector<288x4xf32>
    %31 = tpu.matmul %28, %30, %cst_30 {dimension_numbers = #tpu.dot_dimension_numbers<[1], [0], [0], [1], [0, 0, 1, 1], [], []>} : vector<288x4xbf16>, vector<4x4xbf16>, vector<288x4xf32> -> vector<288x4xf32>
    %32 = arith.addf %27, %31 : vector<288x4xf32>
    %c18 = arith.constant 18 : index
    %c0_31 = arith.constant 0 : index
    %33 = vector.load %arg10[%c18, %c0_31] : memref<332x4xbf16, #tpu.memory_space<vmem>>, vector<288x4xbf16>
    %c3 = arith.constant 3 : index
    %c0_32 = arith.constant 0 : index
    %c0_33 = arith.constant 0 : index
    %34 = vector.load %arg5[%c3, %c0_32, %c0_33] : memref<9x4x4xbf16, #tpu.memory_space<vmem>>, vector<1x4x4xbf16>
    %35 = vector.shape_cast %34 : vector<1x4x4xbf16> to vector<4x4xbf16>
    %cst_34 = arith.constant dense<0.000000e+00> : vector<288x4xf32>
    %36 = tpu.matmul %33, %35, %cst_34 {dimension_numbers = #tpu.dot_dimension_numbers<[1], [0], [0], [1], [0, 0, 1, 1], [], []>} : vector<288x4xbf16>, vector<4x4xbf16>, vector<288x4xf32> -> vector<288x4xf32>
    %37 = arith.addf %32, %36 : vector<288x4xf32>
    %c19 = arith.constant 19 : index
    %c0_35 = arith.constant 0 : index
    %38 = vector.load %arg10[%c19, %c0_35] : memref<332x4xbf16, #tpu.memory_space<vmem>>, vector<288x4xbf16>
    %c4 = arith.constant 4 : index
    %c0_36 = arith.constant 0 : index
    %c0_37 = arith.constant 0 : index
    %39 = vector.load %arg5[%c4, %c0_36, %c0_37] : memref<9x4x4xbf16, #tpu.memory_space<vmem>>, vector<1x4x4xbf16>
    %40 = vector.shape_cast %39 : vector<1x4x4xbf16> to vector<4x4xbf16>
    %cst_38 = arith.constant dense<0.000000e+00> : vector<288x4xf32>
    %41 = tpu.matmul %38, %40, %cst_38 {dimension_numbers = #tpu.dot_dimension_numbers<[1], [0], [0], [1], [0, 0, 1, 1], [], []>} : vector<288x4xbf16>, vector<4x4xbf16>, vector<288x4xf32> -> vector<288x4xf32>
    %42 = arith.addf %37, %41 : vector<288x4xf32>
    %c20 = arith.constant 20 : index
    %c0_39 = arith.constant 0 : index
    %43 = vector.load %arg10[%c20, %c0_39] : memref<332x4xbf16, #tpu.memory_space<vmem>>, vector<288x4xbf16>
    %c5 = arith.constant 5 : index
    %c0_40 = arith.constant 0 : index
    %c0_41 = arith.constant 0 : index
    %44 = vector.load %arg5[%c5, %c0_40, %c0_41] : memref<9x4x4xbf16, #tpu.memory_space<vmem>>, vector<1x4x4xbf16>
    %45 = vector.shape_cast %44 : vector<1x4x4xbf16> to vector<4x4xbf16>
    %cst_42 = arith.constant dense<0.000000e+00> : vector<288x4xf32>
    %46 = tpu.matmul %43, %45, %cst_42 {dimension_numbers = #tpu.dot_dimension_numbers<[1], [0], [0], [1], [0, 0, 1, 1], [], []>} : vector<288x4xbf16>, vector<4x4xbf16>, vector<288x4xf32> -> vector<288x4xf32>
    %47 = arith.addf %42, %46 : vector<288x4xf32>
    %c36 = arith.constant 36 : index
    %c0_43 = arith.constant 0 : index
    %48 = vector.load %arg10[%c36, %c0_43] : memref<332x4xbf16, #tpu.memory_space<vmem>>, vector<288x4xbf16>
    %c6 = arith.constant 6 : index
    %c0_44 = arith.constant 0 : index
    %c0_45 = arith.constant 0 : index
    %49 = vector.load %arg5[%c6, %c0_44, %c0_45] : memref<9x4x4xbf16, #tpu.memory_space<vmem>>, vector<1x4x4xbf16>
    %50 = vector.shape_cast %49 : vector<1x4x4xbf16> to vector<4x4xbf16>
    %cst_46 = arith.constant dense<0.000000e+00> : vector<288x4xf32>
    %51 = tpu.matmul %48, %50, %cst_46 {dimension_numbers = #tpu.dot_dimension_numbers<[1], [0], [0], [1], [0, 0, 1, 1], [], []>} : vector<288x4xbf16>, vector<4x4xbf16>, vector<288x4xf32> -> vector<288x4xf32>
    %52 = arith.addf %47, %51 : vector<288x4xf32>
    %c37 = arith.constant 37 : index
    %c0_47 = arith.constant 0 : index
    %53 = vector.load %arg10[%c37, %c0_47] : memref<332x4xbf16, #tpu.memory_space<vmem>>, vector<288x4xbf16>
    %c7 = arith.constant 7 : index
    %c0_48 = arith.constant 0 : index
    %c0_49 = arith.constant 0 : index
    %54 = vector.load %arg5[%c7, %c0_48, %c0_49] : memref<9x4x4xbf16, #tpu.memory_space<vmem>>, vector<1x4x4xbf16>
    %55 = vector.shape_cast %54 : vector<1x4x4xbf16> to vector<4x4xbf16>
    %cst_50 = arith.constant dense<0.000000e+00> : vector<288x4xf32>
    %56 = tpu.matmul %53, %55, %cst_50 {dimension_numbers = #tpu.dot_dimension_numbers<[1], [0], [0], [1], [0, 0, 1, 1], [], []>} : vector<288x4xbf16>, vector<4x4xbf16>, vector<288x4xf32> -> vector<288x4xf32>
    %57 = arith.addf %52, %56 : vector<288x4xf32>
    %c38 = arith.constant 38 : index
    %c0_51 = arith.constant 0 : index
    %58 = vector.load %arg10[%c38, %c0_51] : memref<332x4xbf16, #tpu.memory_space<vmem>>, vector<288x4xbf16>
    %c8 = arith.constant 8 : index
    %c0_52 = arith.constant 0 : index
    %c0_53 = arith.constant 0 : index
    %59 = vector.load %arg5[%c8, %c0_52, %c0_53] : memref<9x4x4xbf16, #tpu.memory_space<vmem>>, vector<1x4x4xbf16>
    %60 = vector.shape_cast %59 : vector<1x4x4xbf16> to vector<4x4xbf16>
    %cst_54 = arith.constant dense<0.000000e+00> : vector<288x4xf32>
    %61 = tpu.matmul %58, %60, %cst_54 {dimension_numbers = #tpu.dot_dimension_numbers<[1], [0], [0], [1], [0, 0, 1, 1], [], []>} : vector<288x4xbf16>, vector<4x4xbf16>, vector<288x4xf32> -> vector<288x4xf32>
    %62 = arith.addf %57, %61 : vector<288x4xf32>
    %c0_55 = arith.constant 0 : index
    %c0_56 = arith.constant 0 : index
    %63 = vector.load %arg6[%c0_55, %c0_56] : memref<1x4xf32, #tpu.memory_space<vmem>>, vector<1x4xf32>
    %64 = vector.broadcast %63 : vector<1x4xf32> to vector<288x4xf32>
    %65 = arith.addf %62, %64 : vector<288x4xf32>
    %cst_57 = arith.constant 0.000000e+00 : f32
    %66 = vector.broadcast %cst_57 : f32 to vector<288x4xf32>
    %67 = arith.maximumf %65, %66 : vector<288x4xf32>
    %68 = arith.truncf %67 : vector<288x4xf32> to vector<288x4xbf16>
    %c0_58 = arith.constant 0 : index
    %c0_59 = arith.constant 0 : index
    %69 = vector.load %arg7[%c0_58, %c0_59] : memref<4x16xbf16, #tpu.memory_space<vmem>>, vector<4x16xbf16>
    %cst_60 = arith.constant dense<0.000000e+00> : vector<288x16xf32>
    %70 = tpu.matmul %68, %69, %cst_60 {dimension_numbers = #tpu.dot_dimension_numbers<[1], [0], [0], [1], [0, 0, 1, 1], [], []>} : vector<288x4xbf16>, vector<4x16xbf16>, vector<288x16xf32> -> vector<288x16xf32>
    %c0_61 = arith.constant 0 : index
    %c0_62 = arith.constant 0 : index
    %71 = vector.load %arg8[%c0_61, %c0_62] : memref<1x16xf32, #tpu.memory_space<vmem>>, vector<1x16xf32>
    %72 = vector.broadcast %71 : vector<1x16xf32> to vector<288x16xf32>
    %73 = arith.addf %70, %72 : vector<288x16xf32>
    %74 = vector.extract_strided_slice %1 {offsets = [19, 0], sizes = [288, 16], strides = [1, 1]} : vector<324x16xf32> to vector<288x16xf32>
    %75 = arith.addf %73, %74 : vector<288x16xf32>
    %cst_63 = arith.constant 0.000000e+00 : f32
    %76 = vector.broadcast %cst_63 : f32 to vector<288x16xf32>
    %77 = arith.maximumf %75, %76 : vector<288x16xf32>
    %c0_64 = arith.constant 0 : index
    %c0_65 = arith.constant 0 : index
    %c0_66 = arith.constant 0 : index
    %78 = vector.load %arg9[%c0_64, %c0_65, %c0_66] : memref<1x288x16xf32, #tpu.memory_space<vmem>>, vector<1x288x16xf32>
    %79 = vector.shape_cast %78 : vector<1x288x16xf32> to vector<288x16xf32>
    %80 = vector.shape_cast %77 : vector<288x16xf32> to vector<1x288x16xf32>
    tpu.vector_store %arg9[%c0_64, %c0_65, %c0_66], %80 {strides = array<i32>} : memref<1x288x16xf32, #tpu.memory_space<vmem>>, vector<1x288x16xf32>,
    return
  }
  func.func @transform_0(%arg0: i32) -> (i32, i32, i32) {
    %c0_i32 = arith.constant 0 : i32
    %c0_i32_0 = arith.constant 0 : i32
    %c0_i32_1 = arith.constant 0 : i32
    return %arg0, %c0_i32, %c0_i32_0 : i32, i32, i32
  }
  func.func @transform_1(%arg0: i32) -> (i32, i32) {
    %c0_i32 = arith.constant 0 : i32
    %c0_i32_0 = arith.constant 0 : i32
    %c0_i32_1 = arith.constant 0 : i32
    return %c0_i32, %c0_i32_0 : i32, i32
  }
  func.func @transform_2(%arg0: i32) -> (i32, i32) {
    %c0_i32 = arith.constant 0 : i32
    %c0_i32_0 = arith.constant 0 : i32
    %c0_i32_1 = arith.constant 0 : i32
    return %c0_i32, %c0_i32_0 : i32, i32
  }
  func.func @transform_3(%arg0: i32) -> (i32, i32) {
    %c0_i32 = arith.constant 0 : i32
    %c0_i32_0 = arith.constant 0 : i32
    %c0_i32_1 = arith.constant 0 : i32
    return %c0_i32, %c0_i32_0 : i32, i32
  }
  func.func @transform_4(%arg0: i32) -> (i32, i32, i32) {
    %c0_i32 = arith.constant 0 : i32
    %c0_i32_0 = arith.constant 0 : i32
    %c0_i32_1 = arith.constant 0 : i32
    %c0_i32_2 = arith.constant 0 : i32
    return %c0_i32, %c0_i32_0, %c0_i32_1 : i32, i32, i32
  }
  func.func @transform_5(%arg0: i32) -> (i32, i32) {
    %c0_i32 = arith.constant 0 : i32
    %c0_i32_0 = arith.constant 0 : i32
    %c0_i32_1 = arith.constant 0 : i32
    return %c0_i32, %c0_i32_0 : i32, i32
  }
  func.func @transform_6(%arg0: i32) -> (i32, i32) {
    %c0_i32 = arith.constant 0 : i32
    %c0_i32_0 = arith.constant 0 : i32
    %c0_i32_1 = arith.constant 0 : i32
    return %c0_i32, %c0_i32_0 : i32, i32
  }
  func.func @transform_7(%arg0: i32) -> (i32, i32) {
    %c0_i32 = arith.constant 0 : i32
    %c0_i32_0 = arith.constant 0 : i32
    %c0_i32_1 = arith.constant 0 : i32
    return %c0_i32, %c0_i32_0 : i32, i32
  }
  func.func @transform_8(%arg0: i32) -> (i32, i32, i32) {
    %c0_i32 = arith.constant 0 : i32
    %c0_i32_0 = arith.constant 0 : i32
    %c0_i32_1 = arith.constant 0 : i32
    return %arg0, %c0_i32, %c0_i32_0 : i32, i32, i32
  }
}

</mosaic_0001>

<llo_original>
// kernel: tpu_custom_call.1
$region0: #{tpu_custom_call.1}
  #allocation0 [shape = 'u32[]', space=smem, size = 0x4, offset = 0x4, fixed_abs, tag = 'smem constant byte address 0x4 - core index']
  #allocation1 [shape = 'u32[72,128]{1,0:T(1,128)}', space=vmem, size = 0x9000, scoped, tag = 'internal scratch']
  #allocation2 [shape = 'bf16[332,4]{1,0:T(8,128)(2,1)}', space=vmem, size = 0x15000, scoped, tag = 'scratch operand']
  %s0 = inlined_call_operand.vmem [shape: f32[2,324,16], index: 0, kind: input, shape index: {}]
  %s1 = inlined_call_operand.vmem [shape: f32[324,1], index: 1, kind: input, shape index: {}]
  %s2 = inlined_call_operand.vmem [shape: bf16[16,4], index: 2, kind: input, shape index: {}]
  %s3 = inlined_call_operand.vmem [shape: f32[1,4], index: 3, kind: input, shape index: {}]
  %s4 = inlined_call_operand.vmem [shape: bf16[9,4,4], index: 4, kind: input, shape index: {}]
  %s5 = inlined_call_operand.vmem [shape: f32[1,4], index: 5, kind: input, shape index: {}]
  %s6 = inlined_call_operand.vmem [shape: bf16[4,16], index: 6, kind: input, shape index: {}]
  %s7 = inlined_call_operand.vmem [shape: f32[1,16], index: 7, kind: input, shape index: {}]
  %s8 = inlined_call_operand.vmem [shape: f32[2,288,16], index: 8, kind: output, shape index: {}]
  %s9 = sld [smem:[#allocation0]]
  $region65: #{tpu_custom_call.1} parent=0
    _
  %s11 = ssub.s32 1, %s9
  %s12 = scalar_select 0, %s11, %s9
  loop: start=0, step=1, limit=4
  $region2: #{tpu_custom_call.1} parent=0 // loop_pre_header
    _
  $region3: #{tpu_custom_call.1} parent=0 // loop_header
    %s14 = sphi 0, %s18
    %p15 = scmp.ge.s32.totalorder %s14, 4
    %s24 = sphi 0, %s26
    %s27 = sphi 0, %s24
    %s28 = sphi 0, %s27
    %s44 = sphi 0, %s28
    %s48 = sphi 0, %s48
    %s50 = sphi 0, %s48
    %s51 = sphi 0, %s50
    %s65 = sphi 0, %s51
    %s69 = sphi 0, %s69
    %s71 = sphi 0, %s69
    %s72 = sphi 0, %s71
    %s86 = sphi 0, %s72
    %s90 = sphi 0, %s90
    %s92 = sphi 0, %s90
    %s93 = sphi 0, %s92
    %s107 = sphi 0, %s93
    %s111 = sphi 0, %s111
    %s113 = sphi 0, %s111
    %s114 = sphi 0, %s113
    %s128 = sphi 0, %s114
    %s132 = sphi 0, %s132
    %s134 = sphi 0, %s132
    %s135 = sphi 0, %s134
    %s149 = sphi 0, %s135
    %s153 = sphi 0, %s153
    %s155 = sphi 0, %s153
    %s156 = sphi 0, %s155
    %s170 = sphi 0, %s156
    %s174 = sphi 0, %s174
    %s176 = sphi 0, %s174
    %s177 = sphi 0, %s176
    %s191 = sphi 0, %s177
    %s197 = sphi 0, %s199
    %s200 = sphi 0, %s197
    %s201 = sphi 0, %s200
    %s217 = sphi 0, %s201
  $region4: #{tpu_custom_call.1} parent=0 // loop_header_branch
    %17 = sbr.rel (%p15) target = $region8
  $region5: #{tpu_custom_call.1} parent=0 // loop_body
    %s19 = ssub.s32 %s14, 1
    %s20 = ssub.s32 %s14, 2
    %s21 = sadd.s32 %s14, 1
    %s22 = ssub.s32 %s14, %s21
    %p23 = scmp.eq.s32.totalorder %s22, 0
    %s25 = sadd.s32 %s24, 1
    %s26 = scalar_select %p23, %s24, %s25
    %p29 = pneg %p23
    %p30 = scmp.eq.s32.totalorder %s14, 1
    %p31 = por %p29, %p30
    %p32 = scmp.ne.s32.totalorder %s24, %s27
    %p33 = scmp.eq.s32.totalorder %s14, 0
    %p34 = por %p32, %p33
    %p35 = scmp.ne.s32.totalorder %s24, %s27
    %p36 = scmp.eq.s32.totalorder %s19, 1
    %p37 = por %p35, %p36
    %p38 = scmp.ne.s32.totalorder %s27, %s28
    %p39 = scmp.eq.s32.totalorder %s19, 0
    %p40 = por %p38, %p39
    %p41 = scmp.ne.s32.totalorder %s27, %s28
    %p42 = scmp.eq.s32.totalorder %s20, 1
    %p43 = por %p41, %p42
    %p45 = scmp.ne.s32.totalorder %s28, %s44
    %p46 = scmp.eq.s32.totalorder %s20, 0
    %p47 = por %p45, %p46
    %s49 = sadd.s32 %s48, 1
    %p52 = scmp.eq.s32.totalorder %s14, 1
    %p53 = scmp.ne.s32.totalorder %s48, %s50
    %p54 = scmp.eq.s32.totalorder %s14, 0
    %p55 = por %p53, %p54
    %p56 = scmp.ne.s32.totalorder %s48, %s50
    %p57 = scmp.eq.s32.totalorder %s19, 1
    %p58 = por %p56, %p57
    %p59 = scmp.ne.s32.totalorder %s50, %s51
    %p60 = scmp.eq.s32.totalorder %s19, 0
    %p61 = por %p59, %p60
    %p62 = scmp.ne.s32.totalorder %s50, %s51
    %p63 = scmp.eq.s32.totalorder %s20, 1
    %p64 = por %p62, %p63
    %p66 = scmp.ne.s32.totalorder %s51, %s65
    %p67 = scmp.eq.s32.totalorder %s20, 0
    %p68 = por %p66, %p67
    %s70 = sadd.s32 %s69, 1
    %p73 = scmp.eq.s32.totalorder %s14, 1
    %p74 = scmp.ne.s32.totalorder %s69, %s71
    %p75 = scmp.eq.s32.totalorder %s14, 0
    %p76 = por %p74, %p75
    %p77 = scmp.ne.s32.totalorder %s69, %s71
    %p78 = scmp.eq.s32.totalorder %s19, 1
    %p79 = por %p77, %p78
    %p80 = scmp.ne.s32.totalorder %s71, %s72
    %p81 = scmp.eq.s32.totalorder %s19, 0
    %p82 = por %p80, %p81
    %p83 = scmp.ne.s32.totalorder %s71, %s72
    %p84 = scmp.eq.s32.totalorder %s20, 1
    %p85 = por %p83, %p84
    %p87 = scmp.ne.s32.totalorder %s72, %s86
    %p88 = scmp.eq.s32.totalorder %s20, 0
    %p89 = por %p87, %p88
    %s91 = sadd.s32 %s90, 1
    %p94 = scmp.eq.s32.totalorder %s14, 1
    %p95 = scmp.ne.s32.totalorder %s90, %s92
    %p96 = scmp.eq.s32.totalorder %s14, 0
    %p97 = por %p95, %p96
    %p98 = scmp.ne.s32.totalorder %s90, %s92
    %p99 = scmp.eq.s32.totalorder %s19, 1
    %p100 = por %p98, %p99
    %p101 = scmp.ne.s32.totalorder %s92, %s93
    %p102 = scmp.eq.s32.totalorder %s19, 0
    %p103 = por %p101, %p102
    %p104 = scmp.ne.s32.totalorder %s92, %s93
    %p105 = scmp.eq.s32.totalorder %s20, 1
    %p106 = por %p104, %p105
    %p108 = scmp.ne.s32.totalorder %s93, %s107
    %p109 = scmp.eq.s32.totalorder %s20, 0
    %p110 = por %p108, %p109
    %s112 = sadd.s32 %s111, 1
    %p115 = scmp.eq.s32.totalorder %s14, 1
    %p116 = scmp.ne.s32.totalorder %s111, %s113
    %p117 = scmp.eq.s32.totalorder %s14, 0
    %p118 = por %p116, %p117
    %p119 = scmp.ne.s32.totalorder %s111, %s113
    %p120 = scmp.eq.s32.totalorder %s19, 1
    %p121 = por %p119, %p120
    %p122 = scmp.ne.s32.totalorder %s113, %s114
    %p123 = scmp.eq.s32.totalorder %s19, 0
    %p124 = por %p122, %p123
    %p125 = scmp.ne.s32.totalorder %s113, %s114
    %p126 = scmp.eq.s32.totalorder %s20, 1
    %p127 = por %p125, %p126
    %p129 = scmp.ne.s32.totalorder %s114, %s128
    %p130 = scmp.eq.s32.totalorder %s20, 0
    %p131 = por %p129, %p130
    %s133 = sadd.s32 %s132, 1
    %p136 = scmp.eq.s32.totalorder %s14, 1
    %p137 = scmp.ne.s32.totalorder %s132, %s134
    %p138 = scmp.eq.s32.totalorder %s14, 0
    %p139 = por %p137, %p138
    %p140 = scmp.ne.s32.totalorder %s132, %s134
    %p141 = scmp.eq.s32.totalorder %s19, 1
    %p142 = por %p140, %p141
    %p143 = scmp.ne.s32.totalorder %s134, %s135
    %p144 = scmp.eq.s32.totalorder %s19, 0
    %p145 = por %p143, %p144
    %p146 = scmp.ne.s32.totalorder %s134, %s135
    %p147 = scmp.eq.s32.totalorder %s20, 1
    %p148 = por %p146, %p147
    %p150 = scmp.ne.s32.totalorder %s135, %s149
    %p151 = scmp.eq.s32.totalorder %s20, 0
    %p152 = por %p150, %p151
    %s154 = sadd.s32 %s153, 1
    %p157 = scmp.eq.s32.totalorder %s14, 1
    %p158 = scmp.ne.s32.totalorder %s153, %s155
    %p159 = scmp.eq.s32.totalorder %s14, 0
    %p160 = por %p158, %p159
    %p161 = scmp.ne.s32.totalorder %s153, %s155
    %p162 = scmp.eq.s32.totalorder %s19, 1
    %p163 = por %p161, %p162
    %p164 = scmp.ne.s32.totalorder %s155, %s156
    %p165 = scmp.eq.s32.totalorder %s19, 0
    %p166 = por %p164, %p165
    %p167 = scmp.ne.s32.totalorder %s155, %s156
    %p168 = scmp.eq.s32.totalorder %s20, 1
    %p169 = por %p167, %p168
    %p171 = scmp.ne.s32.totalorder %s156, %s170
    %p172 = scmp.eq.s32.totalorder %s20, 0
    %p173 = por %p171, %p172
    %s175 = sadd.s32 %s174, 1
    %p178 = scmp.eq.s32.totalorder %s14, 1
    %p179 = scmp.ne.s32.totalorder %s174, %s176
    %p180 = scmp.eq.s32.totalorder %s14, 0
    %p181 = por %p179, %p180
    %p182 = scmp.ne.s32.totalorder %s174, %s176
    %p183 = scmp.eq.s32.totalorder %s19, 1
    %p184 = por %p182, %p183
    %p185 = scmp.ne.s32.totalorder %s176, %s177
    %p186 = scmp.eq.s32.totalorder %s19, 0
    %p187 = por %p185, %p186
    %p188 = scmp.ne.s32.totalorder %s176, %s177
    %p189 = scmp.eq.s32.totalorder %s20, 1
    %p190 = por %p188, %p189
    %p192 = scmp.ne.s32.totalorder %s177, %s191
    %p193 = scmp.eq.s32.totalorder %s20, 0
    %p194 = por %p192, %p193
    %s195 = ssub.s32 %s14, %s21
    %p196 = scmp.eq.s32.totalorder %s195, 0
    %s198 = sadd.s32 %s197, 1
    %s199 = scalar_select %p196, %s197, %s198
    %p202 = pneg %p196
    %p203 = scmp.eq.s32.totalorder %s14, 1
    %p204 = por %p202, %p203
    %p205 = scmp.ne.s32.totalorder %s197, %s200
    %p206 = scmp.eq.s32.totalorder %s14, 0
    %p207 = por %p205, %p206
    %p208 = scmp.ne.s32.totalorder %s197, %s200
    %p209 = scmp.eq.s32.totalorder %s19, 1
    %p210 = por %p208, %p209
    %p211 = scmp.ne.s32.totalorder %s200, %s201
    %p212 = scmp.eq.s32.totalorder %s19, 0
    %p213 = por %p211, %p212
    %p214 = scmp.ne.s32.totalorder %s200, %s201
    %p215 = scmp.eq.s32.totalorder %s20, 1
    %p216 = por %p214, %p215
    %p218 = scmp.ne.s32.totalorder %s201, %s217
    %p219 = scmp.eq.s32.totalorder %s20, 0
    %p220 = por %p218, %p219
    %p221 = scmp.le.s32.totalorder 1, %s14
    %p222 = scmp.lt.s32.totalorder %s14, 3
    %p223 = pnand %p221, %p222
    %p224 = pneg %p223
    // Predicated region
    $region9: #{tpu_custom_call.1} parent=5 // pred_check
      _
    $region10: #{tpu_custom_call.1} parent=5 // pred_check_branch
      %226 = sbr.rel (%p223) target = $region12
    $region11: #{tpu_custom_call.1} parent=5 // pred_region
      %s227 = ssub.s32 %s14, 1
      // Predicated region
      $region13: #{tpu_custom_call.1} parent=11 // pred_check
        %p228 = pneg %p61
      $region14: #{tpu_custom_call.1} parent=11 // pred_check_branch
        %230 = sbr.rel (%p228) target = $region16
      $region15: #{tpu_custom_call.1} parent=11 // pred_region
        _
      $region16: #{tpu_custom_call.1} parent=11 // pred_fallthru
        _
      // Predicated region
      $region17: #{tpu_custom_call.1} parent=11 // pred_check
        %p231 = pneg %p82
      $region18: #{tpu_custom_call.1} parent=11 // pred_check_branch
        %233 = sbr.rel (%p231) target = $region20
      $region19: #{tpu_custom_call.1} parent=11 // pred_region
        _
      $region20: #{tpu_custom_call.1} parent=11 // pred_fallthru
        _
      // Predicated region
      $region21: #{tpu_custom_call.1} parent=11 // pred_check
        %p234 = pneg %p103
      $region22: #{tpu_custom_call.1} parent=11 // pred_check_branch
        %236 = sbr.rel (%p234) target = $region24
      $region23: #{tpu_custom_call.1} parent=11 // pred_region
        _
      $region24: #{tpu_custom_call.1} parent=11 // pred_fallthru
        _
      // Predicated region
      $region25: #{tpu_custom_call.1} parent=11 // pred_check
        %p237 = pneg %p124
      $region26: #{tpu_custom_call.1} parent=11 // pred_check_branch
        %239 = sbr.rel (%p237) target = $region28
      $region27: #{tpu_custom_call.1} parent=11 // pred_region
        _
      $region28: #{tpu_custom_call.1} parent=11 // pred_fallthru
        _
      // Predicated region
      $region29: #{tpu_custom_call.1} parent=11 // pred_check
        %p240 = pneg %p145
      $region30: #{tpu_custom_call.1} parent=11 // pred_check_branch
        %242 = sbr.rel (%p240) target = $region32
      $region31: #{tpu_custom_call.1} parent=11 // pred_region
        _
      $region32: #{tpu_custom_call.1} parent=11 // pred_fallthru
        _
      // Predicated region
      $region33: #{tpu_custom_call.1} parent=11 // pred_check
        %p243 = pneg %p166
      $region34: #{tpu_custom_call.1} parent=11 // pred_check_branch
        %245 = sbr.rel (%p243) target = $region36
      $region35: #{tpu_custom_call.1} parent=11 // pred_region
        _
      $region36: #{tpu_custom_call.1} parent=11 // pred_fallthru
        _
      // Predicated region
      $region37: #{tpu_custom_call.1} parent=11 // pred_check
        %p246 = pneg %p187
      $region38: #{tpu_custom_call.1} parent=11 // pred_check_branch
        %248 = sbr.rel (%p246) target = $region40
      $region39: #{tpu_custom_call.1} parent=11 // pred_region
        _
      $region40: #{tpu_custom_call.1} parent=11 // pred_fallthru
        _
    $region12: #{tpu_custom_call.1} parent=5 // pred_fallthru
      _
    %p249 = scmp.lt.s32.totalorder %s14, 2
    // Predicated region
    $region41: #{tpu_custom_call.1} parent=5 // pred_check
      %p250 = pneg %p249
    $region42: #{tpu_custom_call.1} parent=5 // pred_check_branch
      %252 = sbr.rel (%p250) target = $region44
    $region43: #{tpu_custom_call.1} parent=5 // pred_region
      // Predicated region
      $region45: #{tpu_custom_call.1} parent=43 // pred_check
        %p253 = pneg %p34
      $region46: #{tpu_custom_call.1} parent=43 // pred_check_branch
        %255 = sbr.rel (%p253) target = $region48
      $region47: #{tpu_custom_call.1} parent=43 // pred_region
        %p256 = scmp.lt.s32.totalorder %s14, 1
        %s257 = scalar_select %p256, %s14, 1
        %s258 = smul.addr %s257, 41
        %s259 = smul.addr %s258, 8
        %s260 = scalar_lea.vmem %s0, %s259
      $region48: #{tpu_custom_call.1} parent=43 // pred_fallthru
        _
    $region44: #{tpu_custom_call.1} parent=5 // pred_fallthru
      _
    %p261 = scmp.le.s32.totalorder 1, %s14
    %p262 = scmp.lt.s32.totalorder %s14, 3
    %p263 = pnand %p261, %p262
    %p264 = pneg %p263
    // Predicated region
    $region49: #{tpu_custom_call.1} parent=5 // pred_check
      _
    $region50: #{tpu_custom_call.1} parent=5 // pred_check_branch
      %266 = sbr.rel (%p263) target = $region52
    $region51: #{tpu_custom_call.1} parent=5 // pred_region
      %s267 = ssub.s32 %s14, 1
      %p268 = scmp.lt.s32.totalorder %s19, 1
      %s269 = scalar_select %p268, %s19, 1
      %s270 = smul.addr %s269, 41
      %s271 = smul.addr %s270, 8
      %s272 = scalar_lea.vmem %s0, %s271
      %p273 = pneg %p40
      %p274 = pneg %p37
      %p275 = pneg %p61
      %p276 = pneg %p58
      %p277 = pneg %p82
      %p278 = pneg %p79
      %p279 = pneg %p103
      %p280 = pneg %p100
      %p281 = pneg %p124
      %p282 = pneg %p121
      %p283 = pneg %p145
      %p284 = pneg %p142
      %p285 = pneg %p166
      %p286 = pneg %p163
      %p287 = pneg %p187
      %p288 = pneg %p184
      %p289 = pneg %p213
      %p290 = pneg %p210
      %p291 = scmp.lt.s32.totalorder %s19, 1
      %s292 = scalar_select %p291, %s19, 1
      %s293 = smul.addr %s292, 36
      %s294 = smul.addr %s293, 8
      %s295 = scalar_lea.vmem %s8, %s294
      %p296 = scmp.lt.s32.totalorder %s19, 1
      %s297 = scalar_select %p296, %s19, 1
      %s298 = smul.addr %s297, 41
      %s299 = smul.addr %s298, 8
      %s300 = scalar_lea.vmem %s0, %s299
      %p301 = scmp.lt.s32.totalorder %s19, 1
      %s302 = scalar_select %p301, %s19, 1
      %s303 = smul.addr %s302, 36
      %s304 = smul.addr %s303, 8
      %s305 = scalar_lea.vmem %s8, %s304
      %v307 = vld [vmem:[%s300] sm:$0xff]
      %v308 = vld [vmem:[%s300 + $0x8] sm:$0xff]
      %v309 = vld [vmem:[%s300 + $0x10] sm:$0xff]
      %v310 = vld [vmem:[%s300 + $0x18] sm:$0xff]
      %v311 = vld [vmem:[%s300 + $0x20] sm:$0xff]
      %v312 = vld [vmem:[%s300 + $0x28] sm:$0xff]
      %v313 = vld [vmem:[%s300 + $0x30] sm:$0xff]
      %v314 = vld [vmem:[%s300 + $0x38] sm:$0xff]
      %v315 = vld [vmem:[%s300 + $0x40] sm:$0xff]
      %v316 = vld [vmem:[%s300 + $0x48] sm:$0xff]
      %v317 = vld [vmem:[%s300 + $0x50] sm:$0xff]
      %v318 = vld [vmem:[%s300 + $0x58] sm:$0xff]
      %v319 = vld [vmem:[%s300 + $0x60] sm:$0xff]
      %v320 = vld [vmem:[%s300 + $0x68] sm:$0xff]
      %v321 = vld [vmem:[%s300 + $0x70] sm:$0xff]
      %v322 = vld [vmem:[%s300 + $0x78] sm:$0xff]
      %v323 = vld [vmem:[%s300 + $0x80] sm:$0xff]
      %v324 = vld [vmem:[%s300 + $0x88] sm:$0xff]
      %v325 = vld [vmem:[%s300 + $0x90] sm:$0xff]
      %v326 = vld [vmem:[%s300 + $0x98] sm:$0xff]
      %v327 = vld [vmem:[%s300 + $0xa0] sm:$0xff]
      %v328 = vld [vmem:[%s300 + $0xa8] sm:$0xff]
      %v329 = vld [vmem:[%s300 + $0xb0] sm:$0xff]
      %v330 = vld [vmem:[%s300 + $0xb8] sm:$0xff]
      %v331 = vld [vmem:[%s300 + $0xc0] sm:$0xff]
      %v332 = vld [vmem:[%s300 + $0xc8] sm:$0xff]
      %v333 = vld [vmem:[%s300 + $0xd0] sm:$0xff]
      %v334 = vld [vmem:[%s300 + $0xd8] sm:$0xff]
      %v335 = vld [vmem:[%s300 + $0xe0] sm:$0xff]
      %v336 = vld [vmem:[%s300 + $0xe8] sm:$0xff]
      %v337 = vld [vmem:[%s300 + $0xf0] sm:$0xff]
      %v338 = vld [vmem:[%s300 + $0xf8] sm:$0xff]
      %v339 = vld [vmem:[%s300 + $0x100] sm:$0xff]
      %v340 = vld [vmem:[%s300 + $0x108] sm:$0xff]
      %v341 = vld [vmem:[%s300 + $0x110] sm:$0xff]
      %v342 = vld [vmem:[%s300 + $0x118] sm:$0xff]
      %v343 = vld [vmem:[%s300 + $0x120] sm:$0xff]
      %v344 = vld [vmem:[%s300 + $0x128] sm:$0xff]
      %v345 = vld [vmem:[%s300 + $0x130] sm:$0xff]
      %v346 = vld [vmem:[%s300 + $0x138] sm:$0xff]
      %v347 = vld [vmem:[%s300 + $0x140] sm:$0xf]
      %v348 = vpack.c.bf16 %v308, %v307
      %v349 = vpack.c.bf16 %v310, %v309
      %v350 = vpack.c.bf16 %v312, %v311
      %v351 = vpack.c.bf16 %v314, %v313
      %v352 = vpack.c.bf16 %v316, %v315
      %v353 = vpack.c.bf16 %v318, %v317
      %v354 = vpack.c.bf16 %v320, %v319
      %v355 = vpack.c.bf16 %v322, %v321
      %v356 = vpack.c.bf16 %v324, %v323
      %v357 = vpack.c.bf16 %v326, %v325
      %v358 = vpack.c.bf16 %v328, %v327
      %v359 = vpack.c.bf16 %v330, %v329
      %v360 = vpack.c.bf16 %v332, %v331
      %v361 = vpack.c.bf16 %v334, %v333
      %v362 = vpack.c.bf16 %v336, %v335
      %v363 = vpack.c.bf16 %v338, %v337
      %v364 = vpack.c.bf16 %v340, %v339
      %v365 = vpack.c.bf16 %v342, %v341
      %v366 = vpack.c.bf16 %v344, %v343
      %v367 = vpack.c.bf16 %v346, %v345
      %v368 = vpack.c.bf16 %v347, %v347
      %v369 = vld [vmem:[%s2] sm:$0xf]
      %v370 = vld [vmem:[%s2 + $0x4] sm:$0xf]
      %v371 = vld [vmem:[%s3] sm:$0x1]
      %v373 = vperm.slane %v371, 0
      %v377 = vunpack.c.l.b16 %v369
      %v378 = vunpack.c.l.b16 %v370
      %v379 = vpack.c.b16 %v378, %v377
      %vm381 = vcmask 130048
      %v383 = vsel %vm381, %v348, 0
      %v386 = vsel %vm381, %v349, 0
      %v389 = vsel %vm381, %v350, 0
      %v392 = vsel %vm381, %v351, 0
      %v395 = vsel %vm381, %v352, 0
      %v398 = vsel %vm381, %v353, 0
      %v401 = vsel %vm381, %v354, 0
      %v404 = vsel %vm381, %v355, 0
      %v407 = vsel %vm381, %v356, 0
      %v410 = vsel %vm381, %v357, 0
      %v413 = vsel %vm381, %v358, 0
      %v416 = vsel %vm381, %v359, 0
      %v419 = vsel %vm381, %v360, 0
      %v422 = vsel %vm381, %v361, 0
      %v425 = vsel %vm381, %v362, 0
      %v428 = vsel %vm381, %v363, 0
      %v431 = vsel %vm381, %v364, 0
      %v434 = vsel %vm381, %v365, 0
      %v437 = vsel %vm381, %v366, 0
      %v440 = vsel %vm381, %v367, 0
      %v443 = vsel %vm381, %v368, 0
      %445 = vmatpush.bf16.msra.mxu0 0
      %446 = vmatpush.bf16.msra.mxu0 0
      %447 = vmatpush.bf16.msra.mxu0 0
      %448 = vmatpush.bf16.msra.mxu0 0
      %449 = vmatpush.bf16.msra.mxu0 0
      %450 = vmatpush.bf16.msra.mxu0 0
      %451 = vmatpush.bf16.msra.mxu0 0
      %452 = vmatpush.bf16.msra.mxu0 %v379
      %453 = vmatmul.bf16.gmra.mxu0 %v383
      %v454 = vpop.f32.mrf.mxu0
      %v455 = vadd.f32 %v373, %v454
      %v456 = vpop.f32.mrf.mxu0
      %v457 = vadd.f32 %v373, %v456
      %458 = vmatmul.bf16.gmra.mxu0 %v386
      %v459 = vpop.f32.mrf.mxu0
      %v460 = vadd.f32 %v373, %v459
      %v461 = vpop.f32.mrf.mxu0
      %v462 = vadd.f32 %v373, %v461
      %463 = vmatmul.bf16.gmra.mxu0 %v389
      %v464 = vpop.f32.mrf.mxu0
      %v465 = vadd.f32 %v373, %v464
      %v466 = vpop.f32.mrf.mxu0
      %v467 = vadd.f32 %v373, %v466
      %468 = vmatmul.bf16.gmra.mxu0 %v392
      %v469 = vpop.f32.mrf.mxu0
      %v470 = vadd.f32 %v373, %v469
      %v471 = vpop.f32.mrf.mxu0
      %v472 = vadd.f32 %v373, %v471
      %473 = vmatmul.bf16.gmra.mxu0 %v395
      %v474 = vpop.f32.mrf.mxu0
      %v475 = vadd.f32 %v373, %v474
      %v476 = vpop.f32.mrf.mxu0
      %v477 = vadd.f32 %v373, %v476
      %478 = vmatmul.bf16.gmra.mxu0 %v398
      %v479 = vpop.f32.mrf.mxu0
      %v480 = vadd.f32 %v373, %v479
      %v481 = vpop.f32.mrf.mxu0
      %v482 = vadd.f32 %v373, %v481
      %483 = vmatmul.bf16.gmra.mxu0 %v401
      %v484 = vpop.f32.mrf.mxu0
      %v485 = vadd.f32 %v373, %v484
      %v486 = vpop.f32.mrf.mxu0
      %v487 = vadd.f32 %v373, %v486
      %488 = vmatmul.bf16.gmra.mxu0 %v404
      %v489 = vpop.f32.mrf.mxu0
      %v490 = vadd.f32 %v373, %v489
      %v491 = vpop.f32.mrf.mxu0
      %v492 = vadd.f32 %v373, %v491
      %493 = vmatmul.bf16.gmra.mxu0 %v407
      %v494 = vpop.f32.mrf.mxu0
      %v495 = vadd.f32 %v373, %v494
      %v496 = vpop.f32.mrf.mxu0
      %v497 = vadd.f32 %v373, %v496
      %498 = vmatmul.bf16.gmra.mxu0 %v410
      %v499 = vpop.f32.mrf.mxu0
      %v500 = vadd.f32 %v373, %v499
      %v501 = vpop.f32.mrf.mxu0
      %v502 = vadd.f32 %v373, %v501
      %503 = vmatmul.bf16.gmra.mxu0 %v413
      %v504 = vpop.f32.mrf.mxu0
      %v505 = vadd.f32 %v373, %v504
      %v506 = vpop.f32.mrf.mxu0
      %v507 = vadd.f32 %v373, %v506
      %508 = vmatmul.bf16.gmra.mxu0 %v416
      %v509 = vpop.f32.mrf.mxu0
      %v510 = vadd.f32 %v373, %v509
      %v511 = vpop.f32.mrf.mxu0
      %v512 = vadd.f32 %v373, %v511
      %513 = vmatmul.bf16.gmra.mxu0 %v419
      %v514 = vpop.f32.mrf.mxu0
      %v515 = vadd.f32 %v373, %v514
      %v516 = vpop.f32.mrf.mxu0
      %v517 = vadd.f32 %v373, %v516
      %518 = vmatmul.bf16.gmra.mxu0 %v422
      %v519 = vpop.f32.mrf.mxu0
      %v520 = vadd.f32 %v373, %v519
      %v521 = vpop.f32.mrf.mxu0
      %v522 = vadd.f32 %v373, %v521
      %523 = vmatmul.bf16.gmra.mxu0 %v425
      %v524 = vpop.f32.mrf.mxu0
      %v525 = vadd.f32 %v373, %v524
      %v526 = vpop.f32.mrf.mxu0
      %v527 = vadd.f32 %v373, %v526
      %528 = vmatmul.bf16.gmra.mxu0 %v428
      %v529 = vpop.f32.mrf.mxu0
      %v530 = vadd.f32 %v373, %v529
      %v531 = vpop.f32.mrf.mxu0
      %v532 = vadd.f32 %v373, %v531
      %533 = vmatmul.bf16.gmra.mxu0 %v431
      %v534 = vpop.f32.mrf.mxu0
      %v535 = vadd.f32 %v373, %v534
      %v536 = vpop.f32.mrf.mxu0
      %v537 = vadd.f32 %v373, %v536
      %538 = vmatmul.bf16.gmra.mxu0 %v434
      %v539 = vpop.f32.mrf.mxu0
      %v540 = vadd.f32 %v373, %v539
      %v541 = vpop.f32.mrf.mxu0
      %v542 = vadd.f32 %v373, %v541
      %543 = vmatmul.bf16.gmra.mxu0 %v437
      %v544 = vpop.f32.mrf.mxu0
      %v545 = vadd.f32 %v373, %v544
      %v546 = vpop.f32.mrf.mxu0
      %v547 = vadd.f32 %v373, %v546
      %548 = vmatmul.bf16.gmra.mxu0 %v440
      %v549 = vpop.f32.mrf.mxu0
      %v550 = vadd.f32 %v373, %v549
      %v551 = vpop.f32.mrf.mxu0
      %v552 = vadd.f32 %v373, %v551
      %553 = vmatmul.bf16.gmra.mxu0 %v443
      %v554 = vpop.f32.mrf.mxu0
      %v555 = vadd.f32 %v373, %v554
      %v556 = vpop.f32.mrf.mxu0
      %557 = vdwg.mxu0
      %v558 = vmax.f32 %v455, 0.0
      %v559 = vmax.f32 %v457, 0.0
      %v560 = vmax.f32 %v460, 0.0
      %v561 = vmax.f32 %v462, 0.0
      %v562 = vmax.f32 %v465, 0.0
      %v563 = vmax.f32 %v467, 0.0
      %v564 = vmax.f32 %v470, 0.0
      %v565 = vmax.f32 %v472, 0.0
      %v566 = vmax.f32 %v475, 0.0
      %v567 = vmax.f32 %v477, 0.0
      %v568 = vmax.f32 %v480, 0.0
      %v569 = vmax.f32 %v482, 0.0
      %v570 = vmax.f32 %v485, 0.0
      %v571 = vmax.f32 %v487, 0.0
      %v572 = vmax.f32 %v490, 0.0
      %v573 = vmax.f32 %v492, 0.0
      %v574 = vmax.f32 %v495, 0.0
      %v575 = vmax.f32 %v497, 0.0
      %v576 = vmax.f32 %v500, 0.0
      %v577 = vmax.f32 %v502, 0.0
      %v578 = vmax.f32 %v505, 0.0
      %v579 = vmax.f32 %v507, 0.0
      %v580 = vmax.f32 %v510, 0.0
      %v581 = vmax.f32 %v512, 0.0
      %v582 = vmax.f32 %v515, 0.0
      %v583 = vmax.f32 %v517, 0.0
      %v584 = vmax.f32 %v520, 0.0
      %v585 = vmax.f32 %v522, 0.0
      %v586 = vmax.f32 %v525, 0.0
      %v587 = vmax.f32 %v527, 0.0
      %v588 = vmax.f32 %v530, 0.0
      %v589 = vmax.f32 %v532, 0.0
      %v590 = vmax.f32 %v535, 0.0
      %v591 = vmax.f32 %v537, 0.0
      %v592 = vmax.f32 %v540, 0.0
      %v593 = vmax.f32 %v542, 0.0
      %v594 = vmax.f32 %v545, 0.0
      %v595 = vmax.f32 %v547, 0.0
      %v596 = vmax.f32 %v550, 0.0
      %v597 = vmax.f32 %v552, 0.0
      %v598 = vmax.f32 %v555, 0.0
      %v599 = vld [vmem:[%s1] sm:$0xff]
      %v600 = vld [vmem:[%s1 + $0x8] sm:$0xff]
      %v601 = vld [vmem:[%s1 + $0x10] sm:$0xff]
      %v602 = vld [vmem:[%s1 + $0x18] sm:$0xff]
      %v603 = vld [vmem:[%s1 + $0x20] sm:$0xff]
      %v604 = vld [vmem:[%s1 + $0x28] sm:$0xff]
      %v605 = vld [vmem:[%s1 + $0x30] sm:$0xff]
      %v606 = vld [vmem:[%s1 + $0x38] sm:$0xff]
      %v607 = vld [vmem:[%s1 + $0x40] sm:$0xff]
      %v608 = vld [vmem:[%s1 + $0x48] sm:$0xff]
      %v609 = vld [vmem:[%s1 + $0x50] sm:$0xff]
      %v610 = vld [vmem:[%s1 + $0x58] sm:$0xff]
      %v611 = vld [vmem:[%s1 + $0x60] sm:$0xff]
      %v612 = vld [vmem:[%s1 + $0x68] sm:$0xff]
      %v613 = vld [vmem:[%s1 + $0x70] sm:$0xff]
      %v614 = vld [vmem:[%s1 + $0x78] sm:$0xff]
      %v615 = vld [vmem:[%s1 + $0x80] sm:$0xff]
      %v616 = vld [vmem:[%s1 + $0x88] sm:$0xff]
      %v617 = vld [vmem:[%s1 + $0x90] sm:$0xff]
      %v618 = vld [vmem:[%s1 + $0x98] sm:$0xff]
      %v619 = vld [vmem:[%s1 + $0xa0] sm:$0xff]
      %v620 = vld [vmem:[%s1 + $0xa8] sm:$0xff]
      %v621 = vld [vmem:[%s1 + $0xb0] sm:$0xff]
      %v622 = vld [vmem:[%s1 + $0xb8] sm:$0xff]
      %v623 = vld [vmem:[%s1 + $0xc0] sm:$0xff]
      %v624 = vld [vmem:[%s1 + $0xc8] sm:$0xff]
      %v625 = vld [vmem:[%s1 + $0xd0] sm:$0xff]
      %v626 = vld [vmem:[%s1 + $0xd8] sm:$0xff]
      %v627 = vld [vmem:[%s1 + $0xe0] sm:$0xff]
      %v628 = vld [vmem:[%s1 + $0xe8] sm:$0xff]
      %v629 = vld [vmem:[%s1 + $0xf0] sm:$0xff]
      %v630 = vld [vmem:[%s1 + $0xf8] sm:$0xff]
      %v631 = vld [vmem:[%s1 + $0x100] sm:$0xff]
      %v632 = vld [vmem:[%s1 + $0x108] sm:$0xff]
      %v633 = vld [vmem:[%s1 + $0x110] sm:$0xff]
      %v634 = vld [vmem:[%s1 + $0x118] sm:$0xff]
      %v635 = vld [vmem:[%s1 + $0x120] sm:$0xff]
      %v636 = vld [vmem:[%s1 + $0x128] sm:$0xff]
      %v637 = vld [vmem:[%s1 + $0x130] sm:$0xff]
      %v638 = vld [vmem:[%s1 + $0x138] sm:$0xff]
      %v639 = vld [vmem:[%s1 + $0x140] sm:$0xf]
      %641 = vset.pattern.permute.xlu0 0
      %642 = vperm.xlu0 %641, %v599
      %v643 = vpop.permute.xlu0 %642
      %646 = vset.pattern.permute.xlu0 0
      %647 = vperm.xlu0 %646, %v600
      %v648 = vpop.permute.xlu0 %647
      %651 = vset.pattern.permute.xlu0 0
      %652 = vperm.xlu0 %651, %v601
      %v653 = vpop.permute.xlu0 %652
      %656 = vset.pattern.permute.xlu0 0
      %657 = vperm.xlu0 %656, %v602
      %v658 = vpop.permute.xlu0 %657
      %661 = vset.pattern.permute.xlu0 0
      %662 = vperm.xlu0 %661, %v603
      %v663 = vpop.permute.xlu0 %662
      %666 = vset.pattern.permute.xlu0 0
      %667 = vperm.xlu0 %666, %v604
      %v668 = vpop.permute.xlu0 %667
      %671 = vset.pattern.permute.xlu0 0
      %672 = vperm.xlu0 %671, %v605
      %v673 = vpop.permute.xlu0 %672
      %676 = vset.pattern.permute.xlu0 0
      %677 = vperm.xlu0 %676, %v606
      %v678 = vpop.permute.xlu0 %677
      %681 = vset.pattern.permute.xlu0 0
      %682 = vperm.xlu0 %681, %v607
      %v683 = vpop.permute.xlu0 %682
      %686 = vset.pattern.permute.xlu0 0
      %687 = vperm.xlu0 %686, %v608
      %v688 = vpop.permute.xlu0 %687
      %691 = vset.pattern.permute.xlu0 0
      %692 = vperm.xlu0 %691, %v609
      %v693 = vpop.permute.xlu0 %692
      %696 = vset.pattern.permute.xlu0 0
      %697 = vperm.xlu0 %696, %v610
      %v698 = vpop.permute.xlu0 %697
      %701 = vset.pattern.permute.xlu0 0
      %702 = vperm.xlu0 %701, %v611
      %v703 = vpop.permute.xlu0 %702
      %706 = vset.pattern.permute.xlu0 0
      %707 = vperm.xlu0 %706, %v612
      %v708 = vpop.permute.xlu0 %707
      %711 = vset.pattern.permute.xlu0 0
      %712 = vperm.xlu0 %711, %v613
      %v713 = vpop.permute.xlu0 %712
      %716 = vset.pattern.permute.xlu0 0
      %717 = vperm.xlu0 %716, %v614
      %v718 = vpop.permute.xlu0 %717
      %721 = vset.pattern.permute.xlu0 0
      %722 = vperm.xlu0 %721, %v615
      %v723 = vpop.permute.xlu0 %722
      %726 = vset.pattern.permute.xlu0 0
      %727 = vperm.xlu0 %726, %v616
      %v728 = vpop.permute.xlu0 %727
      %731 = vset.pattern.permute.xlu0 0
      %732 = vperm.xlu0 %731, %v617
      %v733 = vpop.permute.xlu0 %732
      %736 = vset.pattern.permute.xlu0 0
      %737 = vperm.xlu0 %736, %v618
      %v738 = vpop.permute.xlu0 %737
      %741 = vset.pattern.permute.xlu0 0
      %742 = vperm.xlu0 %741, %v619
      %v743 = vpop.permute.xlu0 %742
      %746 = vset.pattern.permute.xlu0 0
      %747 = vperm.xlu0 %746, %v620
      %v748 = vpop.permute.xlu0 %747
      %751 = vset.pattern.permute.xlu0 0
      %752 = vperm.xlu0 %751, %v621
      %v753 = vpop.permute.xlu0 %752
      %756 = vset.pattern.permute.xlu0 0
      %757 = vperm.xlu0 %756, %v622
      %v758 = vpop.permute.xlu0 %757
      %761 = vset.pattern.permute.xlu0 0
      %762 = vperm.xlu0 %761, %v623
      %v763 = vpop.permute.xlu0 %762
      %766 = vset.pattern.permute.xlu0 0
      %767 = vperm.xlu0 %766, %v624
      %v768 = vpop.permute.xlu0 %767
      %771 = vset.pattern.permute.xlu0 0
      %772 = vperm.xlu0 %771, %v625
      %v773 = vpop.permute.xlu0 %772
      %776 = vset.pattern.permute.xlu0 0
      %777 = vperm.xlu0 %776, %v626
      %v778 = vpop.permute.xlu0 %777
      %781 = vset.pattern.permute.xlu0 0
      %782 = vperm.xlu0 %781, %v627
      %v783 = vpop.permute.xlu0 %782
      %786 = vset.pattern.permute.xlu0 0
      %787 = vperm.xlu0 %786, %v628
      %v788 = vpop.permute.xlu0 %787
      %791 = vset.pattern.permute.xlu0 0
      %792 = vperm.xlu0 %791, %v629
      %v793 = vpop.permute.xlu0 %792
      %796 = vset.pattern.permute.xlu0 0
      %797 = vperm.xlu0 %796, %v630
      %v798 = vpop.permute.xlu0 %797
      %801 = vset.pattern.permute.xlu0 0
      %802 = vperm.xlu0 %801, %v631
      %v803 = vpop.permute.xlu0 %802
      %806 = vset.pattern.permute.xlu0 0
      %807 = vperm.xlu0 %806, %v632
      %v808 = vpop.permute.xlu0 %807
      %811 = vset.pattern.permute.xlu0 0
      %812 = vperm.xlu0 %811, %v633
      %v813 = vpop.permute.xlu0 %812
      %816 = vset.pattern.permute.xlu0 0
      %817 = vperm.xlu0 %816, %v634
      %v818 = vpop.permute.xlu0 %817
      %821 = vset.pattern.permute.xlu0 0
      %822 = vperm.xlu0 %821, %v635
      %v823 = vpop.permute.xlu0 %822
      %826 = vset.pattern.permute.xlu0 0
      %827 = vperm.xlu0 %826, %v636
      %v828 = vpop.permute.xlu0 %827
      %831 = vset.pattern.permute.xlu0 0
      %832 = vperm.xlu0 %831, %v637
      %v833 = vpop.permute.xlu0 %832
      %836 = vset.pattern.permute.xlu0 0
      %837 = vperm.xlu0 %836, %v638
      %v838 = vpop.permute.xlu0 %837
      %841 = vset.pattern.permute.xlu0 0
      %842 = vperm.xlu0 %841, %v639
      %v843 = vpop.permute.xlu0 %842
      %v845 = vmul.f32 %v558, %v643
      %v846 = vmul.f32 %v559, %v648
      %v847 = vmul.f32 %v560, %v653
      %v848 = vmul.f32 %v561, %v658
      %v849 = vmul.f32 %v562, %v663
      %v850 = vmul.f32 %v563, %v668
      %v851 = vmul.f32 %v564, %v673
      %v852 = vmul.f32 %v565, %v678
      %v853 = vmul.f32 %v566, %v683
      %v854 = vmul.f32 %v567, %v688
      %v855 = vmul.f32 %v568, %v693
      %v856 = vmul.f32 %v569, %v698
      %v857 = vmul.f32 %v570, %v703
      %v858 = vmul.f32 %v571, %v708
      %v859 = vmul.f32 %v572, %v713
      %v860 = vmul.f32 %v573, %v718
      %v861 = vmul.f32 %v574, %v723
      %v862 = vmul.f32 %v575, %v728
      %v863 = vmul.f32 %v576, %v733
      %v864 = vmul.f32 %v577, %v738
      %v865 = vmul.f32 %v578, %v743
      %v866 = vmul.f32 %v579, %v748
      %v867 = vmul.f32 %v580, %v753
      %v868 = vmul.f32 %v581, %v758
      %v869 = vmul.f32 %v582, %v763
      %v870 = vmul.f32 %v583, %v768
      %v871 = vmul.f32 %v584, %v773
      %v872 = vmul.f32 %v585, %v778
      %v873 = vmul.f32 %v586, %v783
      %v874 = vmul.f32 %v587, %v788
      %v875 = vmul.f32 %v588, %v793
      %v876 = vmul.f32 %v589, %v798
      %v877 = vmul.f32 %v590, %v803
      %v878 = vmul.f32 %v591, %v808
      %v879 = vmul.f32 %v592, %v813
      %v880 = vmul.f32 %v593, %v818
      %v881 = vmul.f32 %v594, %v823
      %v882 = vmul.f32 %v595, %v828
      %v883 = vmul.f32 %v596, %v833
      %v884 = vmul.f32 %v597, %v838
      %v885 = vmul.f32 %v598, %v843
      %vm886 = vcmask 27648
      %887 = vst.msk [vmem:[#allocation2] sm:$0xf] %vm886, 0
      %888 = vst.msk [vmem:[#allocation2 + $0x4] sm:$0xf] %vm886, 0
      %889 = vst.msk [vmem:[#allocation2 + $0x8] sm:$0xf] %vm886, 0
      %890 = vst.msk [vmem:[#allocation2 + $0xc] sm:$0xf] %vm886, 0
      %891 = vst.msk [vmem:[#allocation2 + $0x10] sm:$0xf] %vm886, 0
      %892 = vst.msk [vmem:[#allocation2 + $0x14] sm:$0xf] %vm886, 0
      %893 = vst.msk [vmem:[#allocation2 + $0x18] sm:$0xf] %vm886, 0
      %894 = vst.msk [vmem:[#allocation2 + $0x1c] sm:$0xf] %vm886, 0
      %895 = vst.msk [vmem:[#allocation2 + $0x20] sm:$0xf] %vm886, 0
      %896 = vst.msk [vmem:[#allocation2 + $0x24] sm:$0xf] %vm886, 0
      %897 = vst.msk [vmem:[#allocation2 + $0x28] sm:$0xf] %vm886, 0
      %898 = vst.msk [vmem:[#allocation2 + $0x2c] sm:$0xf] %vm886, 0
      %899 = vst.msk [vmem:[#allocation2 + $0x30] sm:$0xf] %vm886, 0
      %900 = vst.msk [vmem:[#allocation2 + $0x34] sm:$0xf] %vm886, 0
      %901 = vst.msk [vmem:[#allocation2 + $0x38] sm:$0xf] %vm886, 0
      %902 = vst.msk [vmem:[#allocation2 + $0x3c] sm:$0xf] %vm886, 0
      %903 = vst.msk [vmem:[#allocation2 + $0x40] sm:$0xf] %vm886, 0
      %904 = vst.msk [vmem:[#allocation2 + $0x44] sm:$0xf] %vm886, 0
      %905 = vst.msk [vmem:[#allocation2 + $0x48] sm:$0xf] %vm886, 0
      %906 = vst.msk [vmem:[#allocation2 + $0x4c] sm:$0xf] %vm886, 0
      %907 = vst.msk [vmem:[#allocation2 + $0x50] sm:$0xf] %vm886, 0
      %908 = vst.msk [vmem:[#allocation2 + $0x54] sm:$0xf] %vm886, 0
      %909 = vst.msk [vmem:[#allocation2 + $0x58] sm:$0xf] %vm886, 0
      %910 = vst.msk [vmem:[#allocation2 + $0x5c] sm:$0xf] %vm886, 0
      %911 = vst.msk [vmem:[#allocation2 + $0x60] sm:$0xf] %vm886, 0
      %912 = vst.msk [vmem:[#allocation2 + $0x64] sm:$0xf] %vm886, 0
      %913 = vst.msk [vmem:[#allocation2 + $0x68] sm:$0xf] %vm886, 0
      %914 = vst.msk [vmem:[#allocation2 + $0x6c] sm:$0xf] %vm886, 0
      %915 = vst.msk [vmem:[#allocation2 + $0x70] sm:$0xf] %vm886, 0
      %916 = vst.msk [vmem:[#allocation2 + $0x74] sm:$0xf] %vm886, 0
      %917 = vst.msk [vmem:[#allocation2 + $0x78] sm:$0xf] %vm886, 0
      %918 = vst.msk [vmem:[#allocation2 + $0x7c] sm:$0xf] %vm886, 0
      %919 = vst.msk [vmem:[#allocation2 + $0x80] sm:$0xf] %vm886, 0
      %920 = vst.msk [vmem:[#allocation2 + $0x84] sm:$0xf] %vm886, 0
      %921 = vst.msk [vmem:[#allocation2 + $0x88] sm:$0xf] %vm886, 0
      %922 = vst.msk [vmem:[#allocation2 + $0x8c] sm:$0xf] %vm886, 0
      %923 = vst.msk [vmem:[#allocation2 + $0x90] sm:$0xf] %vm886, 0
      %924 = vst.msk [vmem:[#allocation2 + $0x94] sm:$0xf] %vm886, 0
      %925 = vst.msk [vmem:[#allocation2 + $0x98] sm:$0xf] %vm886, 0
      %926 = vst.msk [vmem:[#allocation2 + $0x9c] sm:$0xf] %vm886, 0
      %927 = vst.msk [vmem:[#allocation2 + $0xa0] sm:$0xf] %vm886, 0
      %vm928 = vcmask 25600
      %929 = vst.msk [vmem:[#allocation2 + $0xa4] sm:$0x3] %vm928, 0
      %v930 = vpack.c.bf16 %v845, %v845
      %v931 = vpack.c.bf16 %v846, %v846
      %v932 = vpack.c.bf16 %v847, %v847
      %v933 = vpack.c.bf16 %v848, %v848
      %v934 = vpack.c.bf16 %v849, %v849
      %v935 = vpack.c.bf16 %v850, %v850
      %v936 = vpack.c.bf16 %v851, %v851
      %v937 = vpack.c.bf16 %v852, %v852
      %v938 = vpack.c.bf16 %v853, %v853
      %v939 = vpack.c.bf16 %v854, %v854
      %v940 = vpack.c.bf16 %v855, %v855
      %v941 = vpack.c.bf16 %v856, %v856
      %v942 = vpack.c.bf16 %v857, %v857
      %v943 = vpack.c.bf16 %v858, %v858
      %v944 = vpack.c.bf16 %v859, %v859
      %v945 = vpack.c.bf16 %v860, %v860
      %v946 = vpack.c.bf16 %v861, %v861
      %v947 = vpack.c.bf16 %v862, %v862
      %v948 = vpack.c.bf16 %v863, %v863
      %v949 = vpack.c.bf16 %v864, %v864
      %v950 = vpack.c.bf16 %v865, %v865
      %v951 = vpack.c.bf16 %v866, %v866
      %v952 = vpack.c.bf16 %v867, %v867
      %v953 = vpack.c.bf16 %v868, %v868
      %v954 = vpack.c.bf16 %v869, %v869
      %v955 = vpack.c.bf16 %v870, %v870
      %v956 = vpack.c.bf16 %v871, %v871
      %v957 = vpack.c.bf16 %v872, %v872
      %v958 = vpack.c.bf16 %v873, %v873
      %v959 = vpack.c.bf16 %v874, %v874
      %v960 = vpack.c.bf16 %v875, %v875
      %v961 = vpack.c.bf16 %v876, %v876
      %v962 = vpack.c.bf16 %v877, %v877
      %v963 = vpack.c.bf16 %v878, %v878
      %v964 = vpack.c.bf16 %v879, %v879
      %v965 = vpack.c.bf16 %v880, %v880
      %v966 = vpack.c.bf16 %v881, %v881
      %v967 = vpack.c.bf16 %v882, %v882
      %v968 = vpack.c.bf16 %v883, %v883
      %v969 = vpack.c.bf16 %v884, %v884
      %v970 = vpack.c.bf16 %v885, %v885
      %971 = vst.msk [vmem:[#allocation2] sm:$0xf] %vm886, %v930
      %972 = vst.msk [vmem:[#allocation2 + $0x4] sm:$0xf] %vm886, %v931
      %973 = vst.msk [vmem:[#allocation2 + $0x8] sm:$0xf] %vm886, %v932
      %974 = vst.msk [vmem:[#allocation2 + $0xc] sm:$0xf] %vm886, %v933
      %975 = vst.msk [vmem:[#allocation2 + $0x10] sm:$0xf] %vm886, %v934
      %976 = vst.msk [vmem:[#allocation2 + $0x14] sm:$0xf] %vm886, %v935
      %977 = vst.msk [vmem:[#allocation2 + $0x18] sm:$0xf] %vm886, %v936
      %978 = vst.msk [vmem:[#allocation2 + $0x1c] sm:$0xf] %vm886, %v937
      %979 = vst.msk [vmem:[#allocation2 + $0x20] sm:$0xf] %vm886, %v938
      %980 = vst.msk [vmem:[#allocation2 + $0x24] sm:$0xf] %vm886, %v939
      %981 = vst.msk [vmem:[#allocation2 + $0x28] sm:$0xf] %vm886, %v940
      %982 = vst.msk [vmem:[#allocation2 + $0x2c] sm:$0xf] %vm886, %v941
      %983 = vst.msk [vmem:[#allocation2 + $0x30] sm:$0xf] %vm886, %v942
      %984 = vst.msk [vmem:[#allocation2 + $0x34] sm:$0xf] %vm886, %v943
      %985 = vst.msk [vmem:[#allocation2 + $0x38] sm:$0xf] %vm886, %v944
      %986 = vst.msk [vmem:[#allocation2 + $0x3c] sm:$0xf] %vm886, %v945
      %987 = vst.msk [vmem:[#allocation2 + $0x40] sm:$0xf] %vm886, %v946
      %988 = vst.msk [vmem:[#allocation2 + $0x44] sm:$0xf] %vm886, %v947
      %989 = vst.msk [vmem:[#allocation2 + $0x48] sm:$0xf] %vm886, %v948
      %990 = vst.msk [vmem:[#allocation2 + $0x4c] sm:$0xf] %vm886, %v949
      %991 = vst.msk [vmem:[#allocation2 + $0x50] sm:$0xf] %vm886, %v950
      %992 = vst.msk [vmem:[#allocation2 + $0x54] sm:$0xf] %vm886, %v951
      %993 = vst.msk [vmem:[#allocation2 + $0x58] sm:$0xf] %vm886, %v952
      %994 = vst.msk [vmem:[#allocation2 + $0x5c] sm:$0xf] %vm886, %v953
      %995 = vst.msk [vmem:[#allocation2 + $0x60] sm:$0xf] %vm886, %v954
      %996 = vst.msk [vmem:[#allocation2 + $0x64] sm:$0xf] %vm886, %v955
      %997 = vst.msk [vmem:[#allocation2 + $0x68] sm:$0xf] %vm886, %v956
      %998 = vst.msk [vmem:[#allocation2 + $0x6c] sm:$0xf] %vm886, %v957
      %999 = vst.msk [vmem:[#allocation2 + $0x70] sm:$0xf] %vm886, %v958
      %1000 = vst.msk [vmem:[#allocation2 + $0x74] sm:$0xf] %vm886, %v959
      %1001 = vst.msk [vmem:[#allocation2 + $0x78] sm:$0xf] %vm886, %v960
      %1002 = vst.msk [vmem:[#allocation2 + $0x7c] sm:$0xf] %vm886, %v961
      %1003 = vst.msk [vmem:[#allocation2 + $0x80] sm:$0xf] %vm886, %v962
      %1004 = vst.msk [vmem:[#allocation2 + $0x84] sm:$0xf] %vm886, %v963
      %1005 = vst.msk [vmem:[#allocation2 + $0x88] sm:$0xf] %vm886, %v964
      %1006 = vst.msk [vmem:[#allocation2 + $0x8c] sm:$0xf] %vm886, %v965
      %1007 = vst.msk [vmem:[#allocation2 + $0x90] sm:$0xf] %vm886, %v966
      %1008 = vst.msk [vmem:[#allocation2 + $0x94] sm:$0xf] %vm886, %v967
      %1009 = vst.msk [vmem:[#allocation2 + $0x98] sm:$0xf] %vm886, %v968
      %1010 = vst.msk [vmem:[#allocation2 + $0x9c] sm:$0xf] %vm886, %v969
      %1011 = vst.msk [vmem:[#allocation2 + $0xa0] sm:$0x3] %vm928, %v970
      %v1012 = vld [vmem:[#allocation2] sm:$0xf]
      %v1013 = vld [vmem:[#allocation2 + $0x4] sm:$0xf]
      %v1014 = vld [vmem:[#allocation2 + $0x8] sm:$0xf]
      %v1015 = vld [vmem:[#allocation2 + $0xc] sm:$0xf]
      %v1016 = vld [vmem:[#allocation2 + $0x10] sm:$0xf]
      %v1017 = vld [vmem:[#allocation2 + $0x14] sm:$0xf]
      %v1018 = vld [vmem:[#allocation2 + $0x18] sm:$0xf]
      %v1019 = vld [vmem:[#allocation2 + $0x1c] sm:$0xf]
      %v1020 = vld [vmem:[#allocation2 + $0x20] sm:$0xf]
      %v1021 = vld [vmem:[#allocation2 + $0x24] sm:$0xf]
      %v1022 = vld [vmem:[#allocation2 + $0x28] sm:$0xf]
      %v1023 = vld [vmem:[#allocation2 + $0x2c] sm:$0xf]
      %v1024 = vld [vmem:[#allocation2 + $0x30] sm:$0xf]
      %v1025 = vld [vmem:[#allocation2 + $0x34] sm:$0xf]
      %v1026 = vld [vmem:[#allocation2 + $0x38] sm:$0xf]
      %v1027 = vld [vmem:[#allocation2 + $0x3c] sm:$0xf]
      %v1028 = vld [vmem:[#allocation2 + $0x40] sm:$0xf]
      %v1029 = vld [vmem:[#allocation2 + $0x44] sm:$0xf]
      %v1030 = vld [vmem:[#allocation2 + $0x48] sm:$0xf]
      %v1031 = vld [vmem:[#allocation2 + $0x4c] sm:$0xf]
      %v1032 = vld [vmem:[#allocation2 + $0x50] sm:$0xf]
      %v1033 = vld [vmem:[#allocation2 + $0x54] sm:$0xf]
      %v1034 = vld [vmem:[#allocation2 + $0x58] sm:$0xf]
      %v1035 = vld [vmem:[#allocation2 + $0x5c] sm:$0xf]
      %v1036 = vld [vmem:[#allocation2 + $0x60] sm:$0xf]
      %v1037 = vld [vmem:[#allocation2 + $0x64] sm:$0xf]
      %v1038 = vld [vmem:[#allocation2 + $0x68] sm:$0xf]
      %v1039 = vld [vmem:[#allocation2 + $0x6c] sm:$0xf]
      %v1040 = vld [vmem:[#allocation2 + $0x70] sm:$0xf]
      %v1041 = vld [vmem:[#allocation2 + $0x74] sm:$0xf]
      %v1042 = vld [vmem:[#allocation2 + $0x78] sm:$0xf]
      %v1043 = vld [vmem:[#allocation2 + $0x7c] sm:$0xf]
      %v1044 = vld [vmem:[#allocation2 + $0x80] sm:$0xf]
      %v1045 = vld [vmem:[#allocation2 + $0x84] sm:$0xf]
      %v1046 = vld [vmem:[#allocation2 + $0x88] sm:$0xf]
      %v1047 = vld [vmem:[#allocation2 + $0x8c] sm:$0xf]
      %v1048 = vld [vmem:[%s4] sm:$0x3]
      %v1049 = vld [vmem:[#allocation2 + $0x90] sm:$0x1]
      %s1050 = scalar_lea.vmem %s4, 2
      %v1051 = vld [vmem:[%s1050] sm:$0x3]
      %v1089 = vunpack.c.l.b16 %v1012
      %v1090 = vunpack.c.l.b16 %v1013
      %v1091 = vunpack.c.l.b16 %v1014
      %v1092 = vunpack.c.l.b16 %v1015
      %v1093 = vunpack.c.l.b16 %v1016
      %v1094 = vunpack.c.l.b16 %v1017
      %v1095 = vunpack.c.l.b16 %v1018
      %v1096 = vunpack.c.l.b16 %v1019
      %v1097 = vunpack.c.l.b16 %v1020
      %v1098 = vunpack.c.l.b16 %v1021
      %v1099 = vunpack.c.l.b16 %v1022
      %v1100 = vunpack.c.l.b16 %v1023
      %v1101 = vunpack.c.l.b16 %v1024
      %v1102 = vunpack.c.l.b16 %v1025
      %v1103 = vunpack.c.l.b16 %v1026
      %v1104 = vunpack.c.l.b16 %v1027
      %v1105 = vunpack.c.l.b16 %v1028
      %v1106 = vunpack.c.l.b16 %v1029
      %v1107 = vunpack.c.l.b16 %v1030
      %v1108 = vunpack.c.l.b16 %v1031
      %v1109 = vunpack.c.l.b16 %v1032
      %v1110 = vunpack.c.l.b16 %v1033
      %v1111 = vunpack.c.l.b16 %v1034
      %v1112 = vunpack.c.l.b16 %v1035
      %v1113 = vunpack.c.l.b16 %v1036
      %v1114 = vunpack.c.l.b16 %v1037
      %v1115 = vunpack.c.l.b16 %v1038
      %v1116 = vunpack.c.l.b16 %v1039
      %v1117 = vunpack.c.l.b16 %v1040
      %v1118 = vunpack.c.l.b16 %v1041
      %v1119 = vunpack.c.l.b16 %v1042
      %v1120 = vunpack.c.l.b16 %v1043
      %v1121 = vunpack.c.l.b16 %v1044
      %v1122 = vunpack.c.l.b16 %v1045
      %v1123 = vunpack.c.l.b16 %v1046
      %v1124 = vunpack.c.l.b16 %v1047
      %v1125 = vunpack.c.l.b16 %v1049
      %v1126 = vpack.c.b16 %v1090, %v1089
      %v1127 = vpack.c.b16 %v1092, %v1091
      %v1128 = vpack.c.b16 %v1094, %v1093
      %v1129 = vpack.c.b16 %v1096, %v1095
      %v1130 = vpack.c.b16 %v1098, %v1097
      %v1131 = vpack.c.b16 %v1100, %v1099
      %v1132 = vpack.c.b16 %v1102, %v1101
      %v1133 = vpack.c.b16 %v1104, %v1103
      %v1134 = vpack.c.b16 %v1106, %v1105
      %v1135 = vpack.c.b16 %v1108, %v1107
      %v1136 = vpack.c.b16 %v1110, %v1109
      %v1137 = vpack.c.b16 %v1112, %v1111
      %v1138 = vpack.c.b16 %v1114, %v1113
      %v1139 = vpack.c.b16 %v1116, %v1115
      %v1140 = vpack.c.b16 %v1118, %v1117
      %v1141 = vpack.c.b16 %v1120, %v1119
      %v1142 = vpack.c.b16 %v1122, %v1121
      %v1143 = vpack.c.b16 %v1124, %v1123
      %v1144 = vpack.c.b16 %v1125, %v1125
      %vm1145 = vsmask.f32 7424
      %v1147 = vshrl.u32 %v1126, 16
      %v1149 = vshll.u32 %v1126, 16
      %v1151 = vrot.slane %v1149, 1
      %v1152 = vor.u32 %v1147, %v1151
      %v1154 = vshll.u32 %v1127, 16
      %v1156 = vrot.slane %v1154, 1
      %v1157 = vsel %vm1145, %v1152, %v1156
      %v1158 = vshrl.u32 %v1127, 16
      %v1160 = vor.u32 %v1158, %v1156
      %v1162 = vshll.u32 %v1128, 16
      %v1164 = vrot.slane %v1162, 1
      %v1165 = vsel %vm1145, %v1160, %v1164
      %v1166 = vshrl.u32 %v1128, 16
      %v1168 = vor.u32 %v1166, %v1164
      %v1170 = vshll.u32 %v1129, 16
      %v1172 = vrot.slane %v1170, 1
      %v1173 = vsel %vm1145, %v1168, %v1172
      %v1174 = vshrl.u32 %v1129, 16
      %v1176 = vor.u32 %v1174, %v1172
      %v1178 = vshll.u32 %v1130, 16
      %v1180 = vrot.slane %v1178, 1
      %v1181 = vsel %vm1145, %v1176, %v1180
      %v1182 = vshrl.u32 %v1130, 16
      %v1184 = vor.u32 %v1182, %v1180
      %v1186 = vshll.u32 %v1131, 16
      %v1188 = vrot.slane %v1186, 1
      %v1189 = vsel %vm1145, %v1184, %v1188
      %v1190 = vshrl.u32 %v1131, 16
      %v1192 = vor.u32 %v1190, %v1188
      %v1194 = vshll.u32 %v1132, 16
      %v1196 = vrot.slane %v1194, 1
      %v1197 = vsel %vm1145, %v1192, %v1196
      %v1198 = vshrl.u32 %v1132, 16
      %v1200 = vor.u32 %v1198, %v1196
      %v1202 = vshll.u32 %v1133, 16
      %v1204 = vrot.slane %v1202, 1
      %v1205 = vsel %vm1145, %v1200, %v1204
      %v1206 = vshrl.u32 %v1133, 16
      %v1208 = vor.u32 %v1206, %v1204
      %v1210 = vshll.u32 %v1134, 16
      %v1212 = vrot.slane %v1210, 1
      %v1213 = vsel %vm1145, %v1208, %v1212
      %v1214 = vshrl.u32 %v1134, 16
      %v1216 = vor.u32 %v1214, %v1212
      %v1218 = vshll.u32 %v1135, 16
      %v1220 = vrot.slane %v1218, 1
      %v1221 = vsel %vm1145, %v1216, %v1220
      %v1222 = vshrl.u32 %v1135, 16
      %v1224 = vor.u32 %v1222, %v1220
      %v1226 = vshll.u32 %v1136, 16
      %v1228 = vrot.slane %v1226, 1
      %v1229 = vsel %vm1145, %v1224, %v1228
      %v1230 = vshrl.u32 %v1136, 16
      %v1232 = vor.u32 %v1230, %v1228
      %v1234 = vshll.u32 %v1137, 16
      %v1236 = vrot.slane %v1234, 1
      %v1237 = vsel %vm1145, %v1232, %v1236
      %v1238 = vshrl.u32 %v1137, 16
      %v1240 = vor.u32 %v1238, %v1236
      %v1242 = vshll.u32 %v1138, 16
      %v1244 = vrot.slane %v1242, 1
      %v1245 = vsel %vm1145, %v1240, %v1244
      %v1246 = vshrl.u32 %v1138, 16
      %v1248 = vor.u32 %v1246, %v1244
      %v1250 = vshll.u32 %v1139, 16
      %v1252 = vrot.slane %v1250, 1
      %v1253 = vsel %vm1145, %v1248, %v1252
      %v1254 = vshrl.u32 %v1139, 16
      %v1256 = vor.u32 %v1254, %v1252
      %v1258 = vshll.u32 %v1140, 16
      %v1260 = vrot.slane %v1258, 1
      %v1261 = vsel %vm1145, %v1256, %v1260
      %v1262 = vshrl.u32 %v1140, 16
      %v1264 = vor.u32 %v1262, %v1260
      %v1266 = vshll.u32 %v1141, 16
      %v1268 = vrot.slane %v1266, 1
      %v1269 = vsel %vm1145, %v1264, %v1268
      %v1270 = vshrl.u32 %v1141, 16
      %v1272 = vor.u32 %v1270, %v1268
      %v1274 = vshll.u32 %v1142, 16
      %v1276 = vrot.slane %v1274, 1
      %v1277 = vsel %vm1145, %v1272, %v1276
      %v1278 = vshrl.u32 %v1142, 16
      %v1280 = vor.u32 %v1278, %v1276
      %v1282 = vshll.u32 %v1143, 16
      %v1284 = vrot.slane %v1282, 1
      %v1285 = vsel %vm1145, %v1280, %v1284
      %v1286 = vshrl.u32 %v1143, 16
      %v1288 = vor.u32 %v1286, %v1284
      %v1290 = vshll.u32 %v1144, 16
      %v1292 = vrot.slane %v1290, 1
      %v1293 = vsel %vm1145, %v1288, %v1292
      %vm1294 = vcmask 31744
      %v1296 = vsel %vm1294, %v1157, 0
      %v1299 = vsel %vm1294, %v1165, 0
      %v1302 = vsel %vm1294, %v1173, 0
      %v1305 = vsel %vm1294, %v1181, 0
      %v1308 = vsel %vm1294, %v1189, 0
      %v1311 = vsel %vm1294, %v1197, 0
      %v1314 = vsel %vm1294, %v1205, 0
      %v1317 = vsel %vm1294, %v1213, 0
      %v1320 = vsel %vm1294, %v1221, 0
      %v1323 = vsel %vm1294, %v1229, 0
      %v1326 = vsel %vm1294, %v1237, 0
      %v1329 = vsel %vm1294, %v1245, 0
      %v1332 = vsel %vm1294, %v1253, 0
      %v1335 = vsel %vm1294, %v1261, 0
      %v1338 = vsel %vm1294, %v1269, 0
      %v1341 = vsel %vm1294, %v1277, 0
      %v1344 = vsel %vm1294, %v1285, 0
      %v1347 = vsel %vm1294, %v1293, 0
      %vm1349 = vcmask 1041408
      %v1351 = vsel %vm1349, %v1051, 0
      %1353 = vmatpush.bf16.msra.mxu0 0
      %1354 = vmatpush.bf16.msra.mxu0 0
      %1355 = vmatpush.bf16.msra.mxu0 0
      %1356 = vmatpush.bf16.msra.mxu0 0
      %1357 = vmatpush.bf16.msra.mxu0 0
      %1358 = vmatpush.bf16.msra.mxu0 0
      %1359 = vmatpush.bf16.msra.mxu0 0
      %1360 = vmatpush.bf16.msra.mxu0 %v1351
      %1361 = vmatmul.bf16.gmra.mxu0 %v1296
      %v1362 = vpop.f32.mrf.mxu0
      %v1363 = vadd.f32 0.0, %v1362
      %v1364 = vpop.f32.mrf.mxu0
      %v1365 = vadd.f32 0.0, %v1364
      %1366 = vmatmul.bf16.gmra.mxu0 %v1299
      %v1367 = vpop.f32.mrf.mxu0
      %v1368 = vadd.f32 0.0, %v1367
      %v1369 = vpop.f32.mrf.mxu0
      %v1370 = vadd.f32 0.0, %v1369
      %1371 = vmatmul.bf16.gmra.mxu0 %v1302
      %v1372 = vpop.f32.mrf.mxu0
      %v1373 = vadd.f32 0.0, %v1372
      %v1374 = vpop.f32.mrf.mxu0
      %v1375 = vadd.f32 0.0, %v1374
      %1376 = vmatmul.bf16.gmra.mxu0 %v1305
      %v1377 = vpop.f32.mrf.mxu0
      %v1378 = vadd.f32 0.0, %v1377
      %v1379 = vpop.f32.mrf.mxu0
      %v1380 = vadd.f32 0.0, %v1379
      %1381 = vmatmul.bf16.gmra.mxu0 %v1308
      %v1382 = vpop.f32.mrf.mxu0
      %v1383 = vadd.f32 0.0, %v1382
      %v1384 = vpop.f32.mrf.mxu0
      %v1385 = vadd.f32 0.0, %v1384
      %1386 = vmatmul.bf16.gmra.mxu0 %v1311
      %v1387 = vpop.f32.mrf.mxu0
      %v1388 = vadd.f32 0.0, %v1387
      %v1389 = vpop.f32.mrf.mxu0
      %v1390 = vadd.f32 0.0, %v1389
      %1391 = vmatmul.bf16.gmra.mxu0 %v1314
      %v1392 = vpop.f32.mrf.mxu0
      %v1393 = vadd.f32 0.0, %v1392
      %v1394 = vpop.f32.mrf.mxu0
      %v1395 = vadd.f32 0.0, %v1394
      %1396 = vmatmul.bf16.gmra.mxu0 %v1317
      %v1397 = vpop.f32.mrf.mxu0
      %v1398 = vadd.f32 0.0, %v1397
      %v1399 = vpop.f32.mrf.mxu0
      %v1400 = vadd.f32 0.0, %v1399
      %1401 = vmatmul.bf16.gmra.mxu0 %v1320
      %v1402 = vpop.f32.mrf.mxu0
      %v1403 = vadd.f32 0.0, %v1402
      %v1404 = vpop.f32.mrf.mxu0
      %v1405 = vadd.f32 0.0, %v1404
      %1406 = vmatmul.bf16.gmra.mxu0 %v1323
      %v1407 = vpop.f32.mrf.mxu0
      %v1408 = vadd.f32 0.0, %v1407
      %v1409 = vpop.f32.mrf.mxu0
      %v1410 = vadd.f32 0.0, %v1409
      %1411 = vmatmul.bf16.gmra.mxu0 %v1326
      %v1412 = vpop.f32.mrf.mxu0
      %v1413 = vadd.f32 0.0, %v1412
      %v1414 = vpop.f32.mrf.mxu0
      %v1415 = vadd.f32 0.0, %v1414
      %1416 = vmatmul.bf16.gmra.mxu0 %v1329
      %v1417 = vpop.f32.mrf.mxu0
      %v1418 = vadd.f32 0.0, %v1417
      %v1419 = vpop.f32.mrf.mxu0
      %v1420 = vadd.f32 0.0, %v1419
      %1421 = vmatmul.bf16.gmra.mxu0 %v1332
      %v1422 = vpop.f32.mrf.mxu0
      %v1423 = vadd.f32 0.0, %v1422
      %v1424 = vpop.f32.mrf.mxu0
      %v1425 = vadd.f32 0.0, %v1424
      %1426 = vmatmul.bf16.gmra.mxu0 %v1335
      %v1427 = vpop.f32.mrf.mxu0
      %v1428 = vadd.f32 0.0, %v1427
      %v1429 = vpop.f32.mrf.mxu0
      %v1430 = vadd.f32 0.0, %v1429
      %1431 = vmatmul.bf16.gmra.mxu0 %v1338
      %v1432 = vpop.f32.mrf.mxu0
      %v1433 = vadd.f32 0.0, %v1432
      %v1434 = vpop.f32.mrf.mxu0
      %v1435 = vadd.f32 0.0, %v1434
      %1436 = vmatmul.bf16.gmra.mxu0 %v1341
      %v1437 = vpop.f32.mrf.mxu0
      %v1438 = vadd.f32 0.0, %v1437
      %v1439 = vpop.f32.mrf.mxu0
      %v1440 = vadd.f32 0.0, %v1439
      %1441 = vmatmul.bf16.gmra.mxu0 %v1344
      %v1442 = vpop.f32.mrf.mxu0
      %v1443 = vadd.f32 0.0, %v1442
      %v1444 = vpop.f32.mrf.mxu0
      %v1445 = vadd.f32 0.0, %v1444
      %1446 = vmatmul.bf16.gmra.mxu0 %v1347
      %v1447 = vpop.f32.mrf.mxu0
      %v1448 = vadd.f32 0.0, %v1447
      %v1449 = vpop.f32.mrf.mxu0
      %v1450 = vadd.f32 0.0, %v1449
      %1451 = vdwg.mxu0
      %v1452 = vsel %vm1294, %v1126, 0
      %v1454 = vsel %vm1294, %v1127, 0
      %v1456 = vsel %vm1294, %v1128, 0
      %v1458 = vsel %vm1294, %v1129, 0
      %v1460 = vsel %vm1294, %v1130, 0
      %v1462 = vsel %vm1294, %v1131, 0
      %v1464 = vsel %vm1294, %v1132, 0
      %v1466 = vsel %vm1294, %v1133, 0
      %v1468 = vsel %vm1294, %v1134, 0
      %v1470 = vsel %vm1294, %v1135, 0
      %v1472 = vsel %vm1294, %v1136, 0
      %v1474 = vsel %vm1294, %v1137, 0
      %v1476 = vsel %vm1294, %v1138, 0
      %v1478 = vsel %vm1294, %v1139, 0
      %v1480 = vsel %vm1294, %v1140, 0
      %v1482 = vsel %vm1294, %v1141, 0
      %v1484 = vsel %vm1294, %v1142, 0
      %v1486 = vsel %vm1294, %v1143, 0
      %v1489 = vsel %vm1349, %v1048, 0
      %1491 = vmatpush.bf16.msra.mxu0 0
      %1492 = vmatpush.bf16.msra.mxu0 0
      %1493 = vmatpush.bf16.msra.mxu0 0
      %1494 = vmatpush.bf16.msra.mxu0 0
      %1495 = vmatpush.bf16.msra.mxu0 0
      %1496 = vmatpush.bf16.msra.mxu0 0
      %1497 = vmatpush.bf16.msra.mxu0 0
      %1498 = vmatpush.bf16.msra.mxu0 %v1489
      %1499 = vmatmul.bf16.gmra.mxu0 %v1452
      %v1500 = vpop.f32.mrf.mxu0
      %v1501 = vadd.f32 %v1363, %v1500
      %v1502 = vpop.f32.mrf.mxu0
      %v1503 = vadd.f32 %v1365, %v1502
      %1504 = vmatmul.bf16.gmra.mxu0 %v1454
      %v1505 = vpop.f32.mrf.mxu0
      %v1506 = vadd.f32 %v1368, %v1505
      %v1507 = vpop.f32.mrf.mxu0
      %v1508 = vadd.f32 %v1370, %v1507
      %1509 = vmatmul.bf16.gmra.mxu0 %v1456
      %v1510 = vpop.f32.mrf.mxu0
      %v1511 = vadd.f32 %v1373, %v1510
      %v1512 = vpop.f32.mrf.mxu0
      %v1513 = vadd.f32 %v1375, %v1512
      %1514 = vmatmul.bf16.gmra.mxu0 %v1458
      %v1515 = vpop.f32.mrf.mxu0
      %v1516 = vadd.f32 %v1378, %v1515
      %v1517 = vpop.f32.mrf.mxu0
      %v1518 = vadd.f32 %v1380, %v1517
      %1519 = vmatmul.bf16.gmra.mxu0 %v1460
      %v1520 = vpop.f32.mrf.mxu0
      %v1521 = vadd.f32 %v1383, %v1520
      %v1522 = vpop.f32.mrf.mxu0
      %v1523 = vadd.f32 %v1385, %v1522
      %1524 = vmatmul.bf16.gmra.mxu0 %v1462
      %v1525 = vpop.f32.mrf.mxu0
      %v1526 = vadd.f32 %v1388, %v1525
      %v1527 = vpop.f32.mrf.mxu0
      %v1528 = vadd.f32 %v1390, %v1527
      %1529 = vmatmul.bf16.gmra.mxu0 %v1464
      %v1530 = vpop.f32.mrf.mxu0
      %v1531 = vadd.f32 %v1393, %v1530
      %v1532 = vpop.f32.mrf.mxu0
      %v1533 = vadd.f32 %v1395, %v1532
      %1534 = vmatmul.bf16.gmra.mxu0 %v1466
      %v1535 = vpop.f32.mrf.mxu0
      %v1536 = vadd.f32 %v1398, %v1535
      %v1537 = vpop.f32.mrf.mxu0
      %v1538 = vadd.f32 %v1400, %v1537
      %1539 = vmatmul.bf16.gmra.mxu0 %v1468
      %v1540 = vpop.f32.mrf.mxu0
      %v1541 = vadd.f32 %v1403, %v1540
      %v1542 = vpop.f32.mrf.mxu0
      %v1543 = vadd.f32 %v1405, %v1542
      %1544 = vmatmul.bf16.gmra.mxu0 %v1470
      %v1545 = vpop.f32.mrf.mxu0
      %v1546 = vadd.f32 %v1408, %v1545
      %v1547 = vpop.f32.mrf.mxu0
      %v1548 = vadd.f32 %v1410, %v1547
      %1549 = vmatmul.bf16.gmra.mxu0 %v1472
      %v1550 = vpop.f32.mrf.mxu0
      %v1551 = vadd.f32 %v1413, %v1550
      %v1552 = vpop.f32.mrf.mxu0
      %v1553 = vadd.f32 %v1415, %v1552
      %1554 = vmatmul.bf16.gmra.mxu0 %v1474
      %v1555 = vpop.f32.mrf.mxu0
      %v1556 = vadd.f32 %v1418, %v1555
      %v1557 = vpop.f32.mrf.mxu0
      %v1558 = vadd.f32 %v1420, %v1557
      %1559 = vmatmul.bf16.gmra.mxu0 %v1476
      %v1560 = vpop.f32.mrf.mxu0
      %v1561 = vadd.f32 %v1423, %v1560
      %v1562 = vpop.f32.mrf.mxu0
      %v1563 = vadd.f32 %v1425, %v1562
      %1564 = vmatmul.bf16.gmra.mxu0 %v1478
      %v1565 = vpop.f32.mrf.mxu0
      %v1566 = vadd.f32 %v1428, %v1565
      %v1567 = vpop.f32.mrf.mxu0
      %v1568 = vadd.f32 %v1430, %v1567
      %1569 = vmatmul.bf16.gmra.mxu0 %v1480
      %v1570 = vpop.f32.mrf.mxu0
      %v1571 = vadd.f32 %v1433, %v1570
      %v1572 = vpop.f32.mrf.mxu0
      %v1573 = vadd.f32 %v1435, %v1572
      %1574 = vmatmul.bf16.gmra.mxu0 %v1482
      %v1575 = vpop.f32.mrf.mxu0
      %v1576 = vadd.f32 %v1438, %v1575
      %v1577 = vpop.f32.mrf.mxu0
      %v1578 = vadd.f32 %v1440, %v1577
      %1579 = vmatmul.bf16.gmra.mxu0 %v1484
      %v1580 = vpop.f32.mrf.mxu0
      %v1581 = vadd.f32 %v1443, %v1580
      %v1582 = vpop.f32.mrf.mxu0
      %v1583 = vadd.f32 %v1445, %v1582
      %1584 = vmatmul.bf16.gmra.mxu0 %v1486
      %v1585 = vpop.f32.mrf.mxu0
      %v1586 = vadd.f32 %v1448, %v1585
      %v1587 = vpop.f32.mrf.mxu0
      %v1588 = vadd.f32 %v1450, %v1587
      %1589 = vdwg.mxu0
      %v1590 = vld [vmem:[#allocation2] sm:$0xe]
      %s1591 = scalar_lea.vmem %s4, 4
      %v1592 = vld [vmem:[%s1591] sm:$0x3]
      %v1594 = vunpack.c.l.b16 %v1590
      %v1595 = vpack.c.b16 %v1090, %v1594
      %vm1596 = vcmask 1046528
      %v1597 = vrot.slane %v1595, 1
      %v1598 = vrot.slane %v1127, 1
      %v1599 = vsel %vm1596, %v1597, %v1598
      %v1600 = vrot.slane %v1128, 1
      %v1601 = vsel %vm1596, %v1598, %v1600
      %v1602 = vrot.slane %v1129, 1
      %v1603 = vsel %vm1596, %v1600, %v1602
      %v1604 = vrot.slane %v1130, 1
      %v1605 = vsel %vm1596, %v1602, %v1604
      %v1606 = vrot.slane %v1131, 1
      %v1607 = vsel %vm1596, %v1604, %v1606
      %v1608 = vrot.slane %v1132, 1
      %v1609 = vsel %vm1596, %v1606, %v1608
      %v1610 = vrot.slane %v1133, 1
      %v1611 = vsel %vm1596, %v1608, %v1610
      %v1612 = vrot.slane %v1134, 1
      %v1613 = vsel %vm1596, %v1610, %v1612
      %v1614 = vrot.slane %v1135, 1
      %v1615 = vsel %vm1596, %v1612, %v1614
      %v1616 = vrot.slane %v1136, 1
      %v1617 = vsel %vm1596, %v1614, %v1616
      %v1618 = vrot.slane %v1137, 1
      %v1619 = vsel %vm1596, %v1616, %v1618
      %v1620 = vrot.slane %v1138, 1
      %v1621 = vsel %vm1596, %v1618, %v1620
      %v1622 = vrot.slane %v1139, 1
      %v1623 = vsel %vm1596, %v1620, %v1622
      %v1624 = vrot.slane %v1140, 1
      %v1625 = vsel %vm1596, %v1622, %v1624
      %v1626 = vrot.slane %v1141, 1
      %v1627 = vsel %vm1596, %v1624, %v1626
      %v1628 = vrot.slane %v1142, 1
      %v1629 = vsel %vm1596, %v1626, %v1628
      %v1630 = vrot.slane %v1143, 1
      %v1631 = vsel %vm1596, %v1628, %v1630
      %v1632 = vrot.slane %v1144, 1
      %v1633 = vsel %vm1596, %v1630, %v1632
      %v1635 = vsel %vm1294, %v1599, 0
      %v1638 = vsel %vm1294, %v1601, 0
      %v1641 = vsel %vm1294, %v1603, 0
      %v1644 = vsel %vm1294, %v1605, 0
      %v1647 = vsel %vm1294, %v1607, 0
      %v1650 = vsel %vm1294, %v1609, 0
      %v1653 = vsel %vm1294, %v1611, 0
      %v1656 = vsel %vm1294, %v1613, 0
      %v1659 = vsel %vm1294, %v1615, 0
      %v1662 = vsel %vm1294, %v1617, 0
      %v1665 = vsel %vm1294, %v1619, 0
      %v1668 = vsel %vm1294, %v1621, 0
      %v1671 = vsel %vm1294, %v1623, 0
      %v1674 = vsel %vm1294, %v1625, 0
      %v1677 = vsel %vm1294, %v1627, 0
      %v1680 = vsel %vm1294, %v1629, 0
      %v1683 = vsel %vm1294, %v1631, 0
      %v1686 = vsel %vm1294, %v1633, 0
      %v1689 = vsel %vm1349, %v1592, 0
      %1691 = vmatpush.bf16.msra.mxu0 0
      %1692 = vmatpush.bf16.msra.mxu0 0
      %1693 = vmatpush.bf16.msra.mxu0 0
      %1694 = vmatpush.bf16.msra.mxu0 0
      %1695 = vmatpush.bf16.msra.mxu0 0
      %1696 = vmatpush.bf16.msra.mxu0 0
      %1697 = vmatpush.bf16.msra.mxu0 0
      %1698 = vmatpush.bf16.msra.mxu0 %v1689
      %1699 = vmatmul.bf16.gmra.mxu0 %v1635
      %v1700 = vpop.f32.mrf.mxu0
      %v1701 = vadd.f32 0.0, %v1700
      %v1702 = vpop.f32.mrf.mxu0
      %v1703 = vadd.f32 0.0, %v1702
      %1704 = vmatmul.bf16.gmra.mxu0 %v1638
      %v1705 = vpop.f32.mrf.mxu0
      %v1706 = vadd.f32 0.0, %v1705
      %v1707 = vpop.f32.mrf.mxu0
      %v1708 = vadd.f32 0.0, %v1707
      %1709 = vmatmul.bf16.gmra.mxu0 %v1641
      %v1710 = vpop.f32.mrf.mxu0
      %v1711 = vadd.f32 0.0, %v1710
      %v1712 = vpop.f32.mrf.mxu0
      %v1713 = vadd.f32 0.0, %v1712
      %1714 = vmatmul.bf16.gmra.mxu0 %v1644
      %v1715 = vpop.f32.mrf.mxu0
      %v1716 = vadd.f32 0.0, %v1715
      %v1717 = vpop.f32.mrf.mxu0
      %v1718 = vadd.f32 0.0, %v1717
      %1719 = vmatmul.bf16.gmra.mxu0 %v1647
      %v1720 = vpop.f32.mrf.mxu0
      %v1721 = vadd.f32 0.0, %v1720
      %v1722 = vpop.f32.mrf.mxu0
      %v1723 = vadd.f32 0.0, %v1722
      %1724 = vmatmul.bf16.gmra.mxu0 %v1650
      %v1725 = vpop.f32.mrf.mxu0
      %v1726 = vadd.f32 0.0, %v1725
      %v1727 = vpop.f32.mrf.mxu0
      %v1728 = vadd.f32 0.0, %v1727
      %1729 = vmatmul.bf16.gmra.mxu0 %v1653
      %v1730 = vpop.f32.mrf.mxu0
      %v1731 = vadd.f32 0.0, %v1730
      %v1732 = vpop.f32.mrf.mxu0
      %v1733 = vadd.f32 0.0, %v1732
      %1734 = vmatmul.bf16.gmra.mxu0 %v1656
      %v1735 = vpop.f32.mrf.mxu0
      %v1736 = vadd.f32 0.0, %v1735
      %v1737 = vpop.f32.mrf.mxu0
      %v1738 = vadd.f32 0.0, %v1737
      %1739 = vmatmul.bf16.gmra.mxu0 %v1659
      %v1740 = vpop.f32.mrf.mxu0
      %v1741 = vadd.f32 0.0, %v1740
      %v1742 = vpop.f32.mrf.mxu0
      %v1743 = vadd.f32 0.0, %v1742
      %1744 = vmatmul.bf16.gmra.mxu0 %v1662
      %v1745 = vpop.f32.mrf.mxu0
      %v1746 = vadd.f32 0.0, %v1745
      %v1747 = vpop.f32.mrf.mxu0
      %v1748 = vadd.f32 0.0, %v1747
      %1749 = vmatmul.bf16.gmra.mxu0 %v1665
      %v1750 = vpop.f32.mrf.mxu0
      %v1751 = vadd.f32 0.0, %v1750
      %v1752 = vpop.f32.mrf.mxu0
      %v1753 = vadd.f32 0.0, %v1752
      %1754 = vmatmul.bf16.gmra.mxu0 %v1668
      %v1755 = vpop.f32.mrf.mxu0
      %v1756 = vadd.f32 0.0, %v1755
      %v1757 = vpop.f32.mrf.mxu0
      %v1758 = vadd.f32 0.0, %v1757
      %1759 = vmatmul.bf16.gmra.mxu0 %v1671
      %v1760 = vpop.f32.mrf.mxu0
      %v1761 = vadd.f32 0.0, %v1760
      %v1762 = vpop.f32.mrf.mxu0
      %v1763 = vadd.f32 0.0, %v1762
      %1764 = vmatmul.bf16.gmra.mxu0 %v1674
      %v1765 = vpop.f32.mrf.mxu0
      %v1766 = vadd.f32 0.0, %v1765
      %v1767 = vpop.f32.mrf.mxu0
      %v1768 = vadd.f32 0.0, %v1767
      %1769 = vmatmul.bf16.gmra.mxu0 %v1677
      %v1770 = vpop.f32.mrf.mxu0
      %v1771 = vadd.f32 0.0, %v1770
      %v1772 = vpop.f32.mrf.mxu0
      %v1773 = vadd.f32 0.0, %v1772
      %1774 = vmatmul.bf16.gmra.mxu0 %v1680
      %v1775 = vpop.f32.mrf.mxu0
      %v1776 = vadd.f32 0.0, %v1775
      %v1777 = vpop.f32.mrf.mxu0
      %v1778 = vadd.f32 0.0, %v1777
      %1779 = vmatmul.bf16.gmra.mxu0 %v1683
      %v1780 = vpop.f32.mrf.mxu0
      %v1781 = vadd.f32 0.0, %v1780
      %v1782 = vpop.f32.mrf.mxu0
      %v1783 = vadd.f32 0.0, %v1782
      %1784 = vmatmul.bf16.gmra.mxu0 %v1686
      %v1785 = vpop.f32.mrf.mxu0
      %v1786 = vadd.f32 0.0, %v1785
      %v1787 = vpop.f32.mrf.mxu0
      %v1788 = vadd.f32 0.0, %v1787
      %1789 = vdwg.mxu0
      %v1790 = vadd.f32 %v1501, %v1701
      %v1791 = vadd.f32 %v1503, %v1703
      %v1792 = vadd.f32 %v1506, %v1706
      %v1793 = vadd.f32 %v1508, %v1708
      %v1794 = vadd.f32 %v1511, %v1711
      %v1795 = vadd.f32 %v1513, %v1713
      %v1796 = vadd.f32 %v1516, %v1716
      %v1797 = vadd.f32 %v1518, %v1718
      %v1798 = vadd.f32 %v1521, %v1721
      %v1799 = vadd.f32 %v1523, %v1723
      %v1800 = vadd.f32 %v1526, %v1726
      %v1801 = vadd.f32 %v1528, %v1728
      %v1802 = vadd.f32 %v1531, %v1731
      %v1803 = vadd.f32 %v1533, %v1733
      %v1804 = vadd.f32 %v1536, %v1736
      %v1805 = vadd.f32 %v1538, %v1738
      %v1806 = vadd.f32 %v1541, %v1741
      %v1807 = vadd.f32 %v1543, %v1743
      %v1808 = vadd.f32 %v1546, %v1746
      %v1809 = vadd.f32 %v1548, %v1748
      %v1810 = vadd.f32 %v1551, %v1751
      %v1811 = vadd.f32 %v1553, %v1753
      %v1812 = vadd.f32 %v1556, %v1756
      %v1813 = vadd.f32 %v1558, %v1758
      %v1814 = vadd.f32 %v1561, %v1761
      %v1815 = vadd.f32 %v1563, %v1763
      %v1816 = vadd.f32 %v1566, %v1766
      %v1817 = vadd.f32 %v1568, %v1768
      %v1818 = vadd.f32 %v1571, %v1771
      %v1819 = vadd.f32 %v1573, %v1773
      %v1820 = vadd.f32 %v1576, %v1776
      %v1821 = vadd.f32 %v1578, %v1778
      %v1822 = vadd.f32 %v1581, %v1781
      %v1823 = vadd.f32 %v1583, %v1783
      %v1824 = vadd.f32 %v1586, %v1786
      %v1825 = vadd.f32 %v1588, %v1788
      %v1826 = vld [vmem:[#allocation2 + $0x8] sm:$0xe]
      %v1827 = vld [vmem:[#allocation2 + $0xc] sm:$0xf]
      %v1828 = vld [vmem:[#allocation2 + $0x10] sm:$0xf]
      %v1829 = vld [vmem:[#allocation2 + $0x14] sm:$0xf]
      %v1830 = vld [vmem:[#allocation2 + $0x18] sm:$0xf]
      %v1831 = vld [vmem:[#allocation2 + $0x1c] sm:$0xf]
      %v1832 = vld [vmem:[#allocation2 + $0x20] sm:$0xf]
      %v1833 = vld [vmem:[#allocation2 + $0x24] sm:$0xf]
      %v1834 = vld [vmem:[#allocation2 + $0x28] sm:$0xf]
      %v1835 = vld [vmem:[#allocation2 + $0x2c] sm:$0xf]
      %v1836 = vld [vmem:[#allocation2 + $0x30] sm:$0xf]
      %v1837 = vld [vmem:[#allocation2 + $0x34] sm:$0xf]
      %v1838 = vld [vmem:[#allocation2 + $0x38] sm:$0xf]
      %v1839 = vld [vmem:[#allocation2 + $0x3c] sm:$0xf]
      %v1840 = vld [vmem:[#allocation2 + $0x40] sm:$0xf]
      %v1841 = vld [vmem:[#allocation2 + $0x44] sm:$0xf]
      %v1842 = vld [vmem:[#allocation2 + $0x48] sm:$0xf]
      %v1843 = vld [vmem:[#allocation2 + $0x4c] sm:$0xf]
      %v1844 = vld [vmem:[#allocation2 + $0x50] sm:$0xf]
      %v1845 = vld [vmem:[#allocation2 + $0x54] sm:$0xf]
      %v1846 = vld [vmem:[#allocation2 + $0x58] sm:$0xf]
      %v1847 = vld [vmem:[#allocation2 + $0x5c] sm:$0xf]
      %v1848 = vld [vmem:[#allocation2 + $0x60] sm:$0xf]
      %v1849 = vld [vmem:[#allocation2 + $0x64] sm:$0xf]
      %v1850 = vld [vmem:[#allocation2 + $0x68] sm:$0xf]
      %v1851 = vld [vmem:[#allocation2 + $0x6c] sm:$0xf]
      %v1852 = vld [vmem:[#allocation2 + $0x70] sm:$0xf]
      %v1853 = vld [vmem:[#allocation2 + $0x74] sm:$0xf]
      %v1854 = vld [vmem:[#allocation2 + $0x78] sm:$0xf]
      %v1855 = vld [vmem:[#allocation2 + $0x7c] sm:$0xf]
      %v1856 = vld [vmem:[#allocation2 + $0x80] sm:$0xf]
      %v1857 = vld [vmem:[#allocation2 + $0x84] sm:$0xf]
      %v1858 = vld [vmem:[#allocation2 + $0x88] sm:$0xf]
      %v1859 = vld [vmem:[#allocation2 + $0x8c] sm:$0xf]
      %v1860 = vld [vmem:[#allocation2 + $0x90] sm:$0xf]
      %v1861 = vld [vmem:[#allocation2 + $0x94] sm:$0xf]
      %v1862 = vld [vmem:[#allocation2 + $0x98] sm:$0x1]
      %s1863 = scalar_lea.vmem %s4, 6
      %v1864 = vld [vmem:[%s1863] sm:$0x3]
      %v1902 = vunpack.c.l.b16 %v1826
      %v1903 = vunpack.c.l.b16 %v1827
      %v1904 = vunpack.c.l.b16 %v1828
      %v1905 = vunpack.c.l.b16 %v1829
      %v1906 = vunpack.c.l.b16 %v1830
      %v1907 = vunpack.c.l.b16 %v1831
      %v1908 = vunpack.c.l.b16 %v1832
      %v1909 = vunpack.c.l.b16 %v1833
      %v1910 = vunpack.c.l.b16 %v1834
      %v1911 = vunpack.c.l.b16 %v1835
      %v1912 = vunpack.c.l.b16 %v1836
      %v1913 = vunpack.c.l.b16 %v1837
      %v1914 = vunpack.c.l.b16 %v1838
      %v1915 = vunpack.c.l.b16 %v1839
      %v1916 = vunpack.c.l.b16 %v1840
      %v1917 = vunpack.c.l.b16 %v1841
      %v1918 = vunpack.c.l.b16 %v1842
      %v1919 = vunpack.c.l.b16 %v1843
      %v1920 = vunpack.c.l.b16 %v1844
      %v1921 = vunpack.c.l.b16 %v1845
      %v1922 = vunpack.c.l.b16 %v1846
      %v1923 = vunpack.c.l.b16 %v1847
      %v1924 = vunpack.c.l.b16 %v1848
      %v1925 = vunpack.c.l.b16 %v1849
      %v1926 = vunpack.c.l.b16 %v1850
      %v1927 = vunpack.c.l.b16 %v1851
      %v1928 = vunpack.c.l.b16 %v1852
      %v1929 = vunpack.c.l.b16 %v1853
      %v1930 = vunpack.c.l.b16 %v1854
      %v1931 = vunpack.c.l.b16 %v1855
      %v1932 = vunpack.c.l.b16 %v1856
      %v1933 = vunpack.c.l.b16 %v1857
      %v1934 = vunpack.c.l.b16 %v1858
      %v1935 = vunpack.c.l.b16 %v1859
      %v1936 = vunpack.c.l.b16 %v1860
      %v1937 = vunpack.c.l.b16 %v1861
      %v1938 = vunpack.c.l.b16 %v1862
      %v1939 = vpack.c.b16 %v1903, %v1902
      %v1940 = vpack.c.b16 %v1905, %v1904
      %v1941 = vpack.c.b16 %v1907, %v1906
      %v1942 = vpack.c.b16 %v1909, %v1908
      %v1943 = vpack.c.b16 %v1911, %v1910
      %v1944 = vpack.c.b16 %v1913, %v1912
      %v1945 = vpack.c.b16 %v1915, %v1914
      %v1946 = vpack.c.b16 %v1917, %v1916
      %v1947 = vpack.c.b16 %v1919, %v1918
      %v1948 = vpack.c.b16 %v1921, %v1920
      %v1949 = vpack.c.b16 %v1923, %v1922
      %v1950 = vpack.c.b16 %v1925, %v1924
      %v1951 = vpack.c.b16 %v1927, %v1926
      %v1952 = vpack.c.b16 %v1929, %v1928
      %v1953 = vpack.c.b16 %v1931, %v1930
      %v1954 = vpack.c.b16 %v1933, %v1932
      %v1955 = vpack.c.b16 %v1935, %v1934
      %v1956 = vpack.c.b16 %v1937, %v1936
      %v1957 = vpack.c.b16 %v1938, %v1938
      %v1958 = vrot.slane %v1939, 1
      %v1959 = vrot.slane %v1940, 1
      %v1960 = vsel %vm1596, %v1958, %v1959
      %v1961 = vrot.slane %v1941, 1
      %v1962 = vsel %vm1596, %v1959, %v1961
      %v1963 = vrot.slane %v1942, 1
      %v1964 = vsel %vm1596, %v1961, %v1963
      %v1965 = vrot.slane %v1943, 1
      %v1966 = vsel %vm1596, %v1963, %v1965
      %v1967 = vrot.slane %v1944, 1
      %v1968 = vsel %vm1596, %v1965, %v1967
      %v1969 = vrot.slane %v1945, 1
      %v1970 = vsel %vm1596, %v1967, %v1969
      %v1971 = vrot.slane %v1946, 1
      %v1972 = vsel %vm1596, %v1969, %v1971
      %v1973 = vrot.slane %v1947, 1
      %v1974 = vsel %vm1596, %v1971, %v1973
      %v1975 = vrot.slane %v1948, 1
      %v1976 = vsel %vm1596, %v1973, %v1975
      %v1977 = vrot.slane %v1949, 1
      %v1978 = vsel %vm1596, %v1975, %v1977
      %v1979 = vrot.slane %v1950, 1
      %v1980 = vsel %vm1596, %v1977, %v1979
      %v1981 = vrot.slane %v1951, 1
      %v1982 = vsel %vm1596, %v1979, %v1981
      %v1983 = vrot.slane %v1952, 1
      %v1984 = vsel %vm1596, %v1981, %v1983
      %v1985 = vrot.slane %v1953, 1
      %v1986 = vsel %vm1596, %v1983, %v1985
      %v1987 = vrot.slane %v1954, 1
      %v1988 = vsel %vm1596, %v1985, %v1987
      %v1989 = vrot.slane %v1955, 1
      %v1990 = vsel %vm1596, %v1987, %v1989
      %v1991 = vrot.slane %v1956, 1
      %v1992 = vsel %vm1596, %v1989, %v1991
      %v1993 = vrot.slane %v1957, 1
      %v1994 = vsel %vm1596, %v1991, %v1993
      %v1996 = vsel %vm1294, %v1960, 0
      %v1999 = vsel %vm1294, %v1962, 0
      %v2002 = vsel %vm1294, %v1964, 0
      %v2005 = vsel %vm1294, %v1966, 0
      %v2008 = vsel %vm1294, %v1968, 0
      %v2011 = vsel %vm1294, %v1970, 0
      %v2014 = vsel %vm1294, %v1972, 0
      %v2017 = vsel %vm1294, %v1974, 0
      %v2020 = vsel %vm1294, %v1976, 0
      %v2023 = vsel %vm1294, %v1978, 0
      %v2026 = vsel %vm1294, %v1980, 0
      %v2029 = vsel %vm1294, %v1982, 0
      %v2032 = vsel %vm1294, %v1984, 0
      %v2035 = vsel %vm1294, %v1986, 0
      %v2038 = vsel %vm1294, %v1988, 0
      %v2041 = vsel %vm1294, %v1990, 0
      %v2044 = vsel %vm1294, %v1992, 0
      %v2047 = vsel %vm1294, %v1994, 0
      %v2050 = vsel %vm1349, %v1864, 0
      %2052 = vmatpush.bf16.msra.mxu0 0
      %2053 = vmatpush.bf16.msra.mxu0 0
      %2054 = vmatpush.bf16.msra.mxu0 0
      %2055 = vmatpush.bf16.msra.mxu0 0
      %2056 = vmatpush.bf16.msra.mxu0 0
      %2057 = vmatpush.bf16.msra.mxu0 0
      %2058 = vmatpush.bf16.msra.mxu0 0
      %2059 = vmatpush.bf16.msra.mxu0 %v2050
      %2060 = vmatmul.bf16.gmra.mxu0 %v1996
      %v2061 = vpop.f32.mrf.mxu0
      %v2062 = vadd.f32 0.0, %v2061
      %v2063 = vpop.f32.mrf.mxu0
      %v2064 = vadd.f32 0.0, %v2063
      %2065 = vmatmul.bf16.gmra.mxu0 %v1999
      %v2066 = vpop.f32.mrf.mxu0
      %v2067 = vadd.f32 0.0, %v2066
      %v2068 = vpop.f32.mrf.mxu0
      %v2069 = vadd.f32 0.0, %v2068
      %2070 = vmatmul.bf16.gmra.mxu0 %v2002
      %v2071 = vpop.f32.mrf.mxu0
      %v2072 = vadd.f32 0.0, %v2071
      %v2073 = vpop.f32.mrf.mxu0
      %v2074 = vadd.f32 0.0, %v2073
      %2075 = vmatmul.bf16.gmra.mxu0 %v2005
      %v2076 = vpop.f32.mrf.mxu0
      %v2077 = vadd.f32 0.0, %v2076
      %v2078 = vpop.f32.mrf.mxu0
      %v2079 = vadd.f32 0.0, %v2078
      %2080 = vmatmul.bf16.gmra.mxu0 %v2008
      %v2081 = vpop.f32.mrf.mxu0
      %v2082 = vadd.f32 0.0, %v2081
      %v2083 = vpop.f32.mrf.mxu0
      %v2084 = vadd.f32 0.0, %v2083
      %2085 = vmatmul.bf16.gmra.mxu0 %v2011
      %v2086 = vpop.f32.mrf.mxu0
      %v2087 = vadd.f32 0.0, %v2086
      %v2088 = vpop.f32.mrf.mxu0
      %v2089 = vadd.f32 0.0, %v2088
      %2090 = vmatmul.bf16.gmra.mxu0 %v2014
      %v2091 = vpop.f32.mrf.mxu0
      %v2092 = vadd.f32 0.0, %v2091
      %v2093 = vpop.f32.mrf.mxu0
      %v2094 = vadd.f32 0.0, %v2093
      %2095 = vmatmul.bf16.gmra.mxu0 %v2017
      %v2096 = vpop.f32.mrf.mxu0
      %v2097 = vadd.f32 0.0, %v2096
      %v2098 = vpop.f32.mrf.mxu0
      %v2099 = vadd.f32 0.0, %v2098
      %2100 = vmatmul.bf16.gmra.mxu0 %v2020
      %v2101 = vpop.f32.mrf.mxu0
      %v2102 = vadd.f32 0.0, %v2101
      %v2103 = vpop.f32.mrf.mxu0
      %v2104 = vadd.f32 0.0, %v2103
      %2105 = vmatmul.bf16.gmra.mxu0 %v2023
      %v2106 = vpop.f32.mrf.mxu0
      %v2107 = vadd.f32 0.0, %v2106
      %v2108 = vpop.f32.mrf.mxu0
      %v2109 = vadd.f32 0.0, %v2108
      %2110 = vmatmul.bf16.gmra.mxu0 %v2026
      %v2111 = vpop.f32.mrf.mxu0
      %v2112 = vadd.f32 0.0, %v2111
      %v2113 = vpop.f32.mrf.mxu0
      %v2114 = vadd.f32 0.0, %v2113
      %2115 = vmatmul.bf16.gmra.mxu0 %v2029
      %v2116 = vpop.f32.mrf.mxu0
      %v2117 = vadd.f32 0.0, %v2116
      %v2118 = vpop.f32.mrf.mxu0
      %v2119 = vadd.f32 0.0, %v2118
      %2120 = vmatmul.bf16.gmra.mxu0 %v2032
      %v2121 = vpop.f32.mrf.mxu0
      %v2122 = vadd.f32 0.0, %v2121
      %v2123 = vpop.f32.mrf.mxu0
      %v2124 = vadd.f32 0.0, %v2123
      %2125 = vmatmul.bf16.gmra.mxu0 %v2035
      %v2126 = vpop.f32.mrf.mxu0
      %v2127 = vadd.f32 0.0, %v2126
      %v2128 = vpop.f32.mrf.mxu0
      %v2129 = vadd.f32 0.0, %v2128
      %2130 = vmatmul.bf16.gmra.mxu0 %v2038
      %v2131 = vpop.f32.mrf.mxu0
      %v2132 = vadd.f32 0.0, %v2131
      %v2133 = vpop.f32.mrf.mxu0
      %v2134 = vadd.f32 0.0, %v2133
      %2135 = vmatmul.bf16.gmra.mxu0 %v2041
      %v2136 = vpop.f32.mrf.mxu0
      %v2137 = vadd.f32 0.0, %v2136
      %v2138 = vpop.f32.mrf.mxu0
      %v2139 = vadd.f32 0.0, %v2138
      %2140 = vmatmul.bf16.gmra.mxu0 %v2044
      %v2141 = vpop.f32.mrf.mxu0
      %v2142 = vadd.f32 0.0, %v2141
      %v2143 = vpop.f32.mrf.mxu0
      %v2144 = vadd.f32 0.0, %v2143
      %2145 = vmatmul.bf16.gmra.mxu0 %v2047
      %v2146 = vpop.f32.mrf.mxu0
      %v2147 = vadd.f32 0.0, %v2146
      %v2148 = vpop.f32.mrf.mxu0
      %v2149 = vadd.f32 0.0, %v2148
      %2150 = vdwg.mxu0
      %v2151 = vadd.f32 %v1790, %v2062
      %v2152 = vadd.f32 %v1791, %v2064
      %v2153 = vadd.f32 %v1792, %v2067
      %v2154 = vadd.f32 %v1793, %v2069
      %v2155 = vadd.f32 %v1794, %v2072
      %v2156 = vadd.f32 %v1795, %v2074
      %v2157 = vadd.f32 %v1796, %v2077
      %v2158 = vadd.f32 %v1797, %v2079
      %v2159 = vadd.f32 %v1798, %v2082
      %v2160 = vadd.f32 %v1799, %v2084
      %v2161 = vadd.f32 %v1800, %v2087
      %v2162 = vadd.f32 %v1801, %v2089
      %v2163 = vadd.f32 %v1802, %v2092
      %v2164 = vadd.f32 %v1803, %v2094
      %v2165 = vadd.f32 %v1804, %v2097
      %v2166 = vadd.f32 %v1805, %v2099
      %v2167 = vadd.f32 %v1806, %v2102
      %v2168 = vadd.f32 %v1807, %v2104
      %v2169 = vadd.f32 %v1808, %v2107
      %v2170 = vadd.f32 %v1809, %v2109
      %v2171 = vadd.f32 %v1810, %v2112
      %v2172 = vadd.f32 %v1811, %v2114
      %v2173 = vadd.f32 %v1812, %v2117
      %v2174 = vadd.f32 %v1813, %v2119
      %v2175 = vadd.f32 %v1814, %v2122
      %v2176 = vadd.f32 %v1815, %v2124
      %v2177 = vadd.f32 %v1816, %v2127
      %v2178 = vadd.f32 %v1817, %v2129
      %v2179 = vadd.f32 %v1818, %v2132
      %v2180 = vadd.f32 %v1819, %v2134
      %v2181 = vadd.f32 %v1820, %v2137
      %v2182 = vadd.f32 %v1821, %v2139
      %v2183 = vadd.f32 %v1822, %v2142
      %v2184 = vadd.f32 %v1823, %v2144
      %v2185 = vadd.f32 %v1824, %v2147
      %v2186 = vadd.f32 %v1825, %v2149
      %v2187 = vld [vmem:[#allocation2 + $0x98] sm:$0x3]
      %s2188 = scalar_lea.vmem %s4, 8
      %v2189 = vld [vmem:[%s2188] sm:$0x3]
      %v2191 = vunpack.c.l.b16 %v2187
      %v2192 = vpack.c.b16 %v2191, %v2191
      %vm2193 = vsmask.f32 6400
      %v2195 = vshrl.u32 %v1939, 16
      %v2197 = vrot.slane %v2195, 1
      %v2198 = vshll.u32 %v1939, 16
      %v2200 = vrot.slane %v2198, 2
      %v2201 = vor.u32 %v2197, %v2200
      %v2203 = vshrl.u32 %v1940, 16
      %v2205 = vrot.slane %v2203, 1
      %v2206 = vshll.u32 %v1940, 16
      %v2208 = vrot.slane %v2206, 2
      %v2209 = vor.u32 %v2205, %v2208
      %v2210 = vsel %vm2193, %v2201, %v2209
      %v2212 = vshrl.u32 %v1941, 16
      %v2214 = vrot.slane %v2212, 1
      %v2215 = vshll.u32 %v1941, 16
      %v2217 = vrot.slane %v2215, 2
      %v2218 = vor.u32 %v2214, %v2217
      %v2219 = vsel %vm2193, %v2209, %v2218
      %v2221 = vshrl.u32 %v1942, 16
      %v2223 = vrot.slane %v2221, 1
      %v2224 = vshll.u32 %v1942, 16
      %v2226 = vrot.slane %v2224, 2
      %v2227 = vor.u32 %v2223, %v2226
      %v2228 = vsel %vm2193, %v2218, %v2227
      %v2230 = vshrl.u32 %v1943, 16
      %v2232 = vrot.slane %v2230, 1
      %v2233 = vshll.u32 %v1943, 16
      %v2235 = vrot.slane %v2233, 2
      %v2236 = vor.u32 %v2232, %v2235
      %v2237 = vsel %vm2193, %v2227, %v2236
      %v2239 = vshrl.u32 %v1944, 16
      %v2241 = vrot.slane %v2239, 1
      %v2242 = vshll.u32 %v1944, 16
      %v2244 = vrot.slane %v2242, 2
      %v2245 = vor.u32 %v2241, %v2244
      %v2246 = vsel %vm2193, %v2236, %v2245
      %v2248 = vshrl.u32 %v1945, 16
      %v2250 = vrot.slane %v2248, 1
      %v2251 = vshll.u32 %v1945, 16
      %v2253 = vrot.slane %v2251, 2
      %v2254 = vor.u32 %v2250, %v2253
      %v2255 = vsel %vm2193, %v2245, %v2254
      %v2257 = vshrl.u32 %v1946, 16
      %v2259 = vrot.slane %v2257, 1
      %v2260 = vshll.u32 %v1946, 16
      %v2262 = vrot.slane %v2260, 2
      %v2263 = vor.u32 %v2259, %v2262
      %v2264 = vsel %vm2193, %v2254, %v2263
      %v2266 = vshrl.u32 %v1947, 16
      %v2268 = vrot.slane %v2266, 1
      %v2269 = vshll.u32 %v1947, 16
      %v2271 = vrot.slane %v2269, 2
      %v2272 = vor.u32 %v2268, %v2271
      %v2273 = vsel %vm2193, %v2263, %v2272
      %v2275 = vshrl.u32 %v1948, 16
      %v2277 = vrot.slane %v2275, 1
      %v2278 = vshll.u32 %v1948, 16
      %v2280 = vrot.slane %v2278, 2
      %v2281 = vor.u32 %v2277, %v2280
      %v2282 = vsel %vm2193, %v2272, %v2281
      %v2284 = vshrl.u32 %v1949, 16
      %v2286 = vrot.slane %v2284, 1
      %v2287 = vshll.u32 %v1949, 16
      %v2289 = vrot.slane %v2287, 2
      %v2290 = vor.u32 %v2286, %v2289
      %v2291 = vsel %vm2193, %v2281, %v2290
      %v2293 = vshrl.u32 %v1950, 16
      %v2295 = vrot.slane %v2293, 1
      %v2296 = vshll.u32 %v1950, 16
      %v2298 = vrot.slane %v2296, 2
      %v2299 = vor.u32 %v2295, %v2298
      %v2300 = vsel %vm2193, %v2290, %v2299
      %v2302 = vshrl.u32 %v1951, 16
      %v2304 = vrot.slane %v2302, 1
      %v2305 = vshll.u32 %v1951, 16
      %v2307 = vrot.slane %v2305, 2
      %v2308 = vor.u32 %v2304, %v2307
      %v2309 = vsel %vm2193, %v2299, %v2308
      %v2311 = vshrl.u32 %v1952, 16
      %v2313 = vrot.slane %v2311, 1
      %v2314 = vshll.u32 %v1952, 16
      %v2316 = vrot.slane %v2314, 2
      %v2317 = vor.u32 %v2313, %v2316
      %v2318 = vsel %vm2193, %v2308, %v2317
      %v2320 = vshrl.u32 %v1953, 16
      %v2322 = vrot.slane %v2320, 1
      %v2323 = vshll.u32 %v1953, 16
      %v2325 = vrot.slane %v2323, 2
      %v2326 = vor.u32 %v2322, %v2325
      %v2327 = vsel %vm2193, %v2317, %v2326
      %v2329 = vshrl.u32 %v1954, 16
      %v2331 = vrot.slane %v2329, 1
      %v2332 = vshll.u32 %v1954, 16
      %v2334 = vrot.slane %v2332, 2
      %v2335 = vor.u32 %v2331, %v2334
      %v2336 = vsel %vm2193, %v2326, %v2335
      %v2338 = vshrl.u32 %v1955, 16
      %v2340 = vrot.slane %v2338, 1
      %v2341 = vshll.u32 %v1955, 16
      %v2343 = vrot.slane %v2341, 2
      %v2344 = vor.u32 %v2340, %v2343
      %v2345 = vsel %vm2193, %v2335, %v2344
      %v2347 = vshrl.u32 %v1956, 16
      %v2349 = vrot.slane %v2347, 1
      %v2350 = vshll.u32 %v1956, 16
      %v2352 = vrot.slane %v2350, 2
      %v2353 = vor.u32 %v2349, %v2352
      %v2354 = vsel %vm2193, %v2344, %v2353
      %v2356 = vshrl.u32 %v2192, 16
      %v2358 = vrot.slane %v2356, 1
      %v2359 = vshll.u32 %v2192, 16
      %v2361 = vrot.slane %v2359, 2
      %v2362 = vor.u32 %v2358, %v2361
      %v2363 = vsel %vm2193, %v2353, %v2362
      %v2365 = vsel %vm1294, %v2210, 0
      %v2368 = vsel %vm1294, %v2219, 0
      %v2371 = vsel %vm1294, %v2228, 0
      %v2374 = vsel %vm1294, %v2237, 0
      %v2377 = vsel %vm1294, %v2246, 0
      %v2380 = vsel %vm1294, %v2255, 0
      %v2383 = vsel %vm1294, %v2264, 0
      %v2386 = vsel %vm1294, %v2273, 0
      %v2389 = vsel %vm1294, %v2282, 0
      %v2392 = vsel %vm1294, %v2291, 0
      %v2395 = vsel %vm1294, %v2300, 0
      %v2398 = vsel %vm1294, %v2309, 0
      %v2401 = vsel %vm1294, %v2318, 0
      %v2404 = vsel %vm1294, %v2327, 0
      %v2407 = vsel %vm1294, %v2336, 0
      %v2410 = vsel %vm1294, %v2345, 0
      %v2413 = vsel %vm1294, %v2354, 0
      %v2416 = vsel %vm1294, %v2363, 0
      %v2419 = vsel %vm1349, %v2189, 0
      %2421 = vmatpush.bf16.msra.mxu0 0
      %2422 = vmatpush.bf16.msra.mxu0 0
      %2423 = vmatpush.bf16.msra.mxu0 0
      %2424 = vmatpush.bf16.msra.mxu0 0
      %2425 = vmatpush.bf16.msra.mxu0 0
      %2426 = vmatpush.bf16.msra.mxu0 0
      %2427 = vmatpush.bf16.msra.mxu0 0
      %2428 = vmatpush.bf16.msra.mxu0 %v2419
      %2429 = vmatmul.bf16.gmra.mxu0 %v2365
      %v2430 = vpop.f32.mrf.mxu0
      %v2431 = vadd.f32 0.0, %v2430
      %v2432 = vpop.f32.mrf.mxu0
      %v2433 = vadd.f32 0.0, %v2432
      %2434 = vmatmul.bf16.gmra.mxu0 %v2368
      %v2435 = vpop.f32.mrf.mxu0
      %v2436 = vadd.f32 0.0, %v2435
      %v2437 = vpop.f32.mrf.mxu0
      %v2438 = vadd.f32 0.0, %v2437
      %2439 = vmatmul.bf16.gmra.mxu0 %v2371
      %v2440 = vpop.f32.mrf.mxu0
      %v2441 = vadd.f32 0.0, %v2440
      %v2442 = vpop.f32.mrf.mxu0
      %v2443 = vadd.f32 0.0, %v2442
      %2444 = vmatmul.bf16.gmra.mxu0 %v2374
      %v2445 = vpop.f32.mrf.mxu0
      %v2446 = vadd.f32 0.0, %v2445
      %v2447 = vpop.f32.mrf.mxu0
      %v2448 = vadd.f32 0.0, %v2447
      %2449 = vmatmul.bf16.gmra.mxu0 %v2377
      %v2450 = vpop.f32.mrf.mxu0
      %v2451 = vadd.f32 0.0, %v2450
      %v2452 = vpop.f32.mrf.mxu0
      %v2453 = vadd.f32 0.0, %v2452
      %2454 = vmatmul.bf16.gmra.mxu0 %v2380
      %v2455 = vpop.f32.mrf.mxu0
      %v2456 = vadd.f32 0.0, %v2455
      %v2457 = vpop.f32.mrf.mxu0
      %v2458 = vadd.f32 0.0, %v2457
      %2459 = vmatmul.bf16.gmra.mxu0 %v2383
      %v2460 = vpop.f32.mrf.mxu0
      %v2461 = vadd.f32 0.0, %v2460
      %v2462 = vpop.f32.mrf.mxu0
      %v2463 = vadd.f32 0.0, %v2462
      %2464 = vmatmul.bf16.gmra.mxu0 %v2386
      %v2465 = vpop.f32.mrf.mxu0
      %v2466 = vadd.f32 0.0, %v2465
      %v2467 = vpop.f32.mrf.mxu0
      %v2468 = vadd.f32 0.0, %v2467
      %2469 = vmatmul.bf16.gmra.mxu0 %v2389
      %v2470 = vpop.f32.mrf.mxu0
      %v2471 = vadd.f32 0.0, %v2470
      %v2472 = vpop.f32.mrf.mxu0
      %v2473 = vadd.f32 0.0, %v2472
      %2474 = vmatmul.bf16.gmra.mxu0 %v2392
      %v2475 = vpop.f32.mrf.mxu0
      %v2476 = vadd.f32 0.0, %v2475
      %v2477 = vpop.f32.mrf.mxu0
      %v2478 = vadd.f32 0.0, %v2477
      %2479 = vmatmul.bf16.gmra.mxu0 %v2395
      %v2480 = vpop.f32.mrf.mxu0
      %v2481 = vadd.f32 0.0, %v2480
      %v2482 = vpop.f32.mrf.mxu0
      %v2483 = vadd.f32 0.0, %v2482
      %2484 = vmatmul.bf16.gmra.mxu0 %v2398
      %v2485 = vpop.f32.mrf.mxu0
      %v2486 = vadd.f32 0.0, %v2485
      %v2487 = vpop.f32.mrf.mxu0
      %v2488 = vadd.f32 0.0, %v2487
      %2489 = vmatmul.bf16.gmra.mxu0 %v2401
      %v2490 = vpop.f32.mrf.mxu0
      %v2491 = vadd.f32 0.0, %v2490
      %v2492 = vpop.f32.mrf.mxu0
      %v2493 = vadd.f32 0.0, %v2492
      %2494 = vmatmul.bf16.gmra.mxu0 %v2404
      %v2495 = vpop.f32.mrf.mxu0
      %v2496 = vadd.f32 0.0, %v2495
      %v2497 = vpop.f32.mrf.mxu0
      %v2498 = vadd.f32 0.0, %v2497
      %2499 = vmatmul.bf16.gmra.mxu0 %v2407
      %v2500 = vpop.f32.mrf.mxu0
      %v2501 = vadd.f32 0.0, %v2500
      %v2502 = vpop.f32.mrf.mxu0
      %v2503 = vadd.f32 0.0, %v2502
      %2504 = vmatmul.bf16.gmra.mxu0 %v2410
      %v2505 = vpop.f32.mrf.mxu0
      %v2506 = vadd.f32 0.0, %v2505
      %v2507 = vpop.f32.mrf.mxu0
      %v2508 = vadd.f32 0.0, %v2507
      %2509 = vmatmul.bf16.gmra.mxu0 %v2413
      %v2510 = vpop.f32.mrf.mxu0
      %v2511 = vadd.f32 0.0, %v2510
      %v2512 = vpop.f32.mrf.mxu0
      %v2513 = vadd.f32 0.0, %v2512
      %2514 = vmatmul.bf16.gmra.mxu0 %v2416
      %v2515 = vpop.f32.mrf.mxu0
      %v2516 = vadd.f32 0.0, %v2515
      %v2517 = vpop.f32.mrf.mxu0
      %v2518 = vadd.f32 0.0, %v2517
      %2519 = vdwg.mxu0
      %v2520 = vadd.f32 %v2151, %v2431
      %v2521 = vadd.f32 %v2152, %v2433
      %v2522 = vadd.f32 %v2153, %v2436
      %v2523 = vadd.f32 %v2154, %v2438
      %v2524 = vadd.f32 %v2155, %v2441
      %v2525 = vadd.f32 %v2156, %v2443
      %v2526 = vadd.f32 %v2157, %v2446
      %v2527 = vadd.f32 %v2158, %v2448
      %v2528 = vadd.f32 %v2159, %v2451
      %v2529 = vadd.f32 %v2160, %v2453
      %v2530 = vadd.f32 %v2161, %v2456
      %v2531 = vadd.f32 %v2162, %v2458
      %v2532 = vadd.f32 %v2163, %v2461
      %v2533 = vadd.f32 %v2164, %v2463
      %v2534 = vadd.f32 %v2165, %v2466
      %v2535 = vadd.f32 %v2166, %v2468
      %v2536 = vadd.f32 %v2167, %v2471
      %v2537 = vadd.f32 %v2168, %v2473
      %v2538 = vadd.f32 %v2169, %v2476
      %v2539 = vadd.f32 %v2170, %v2478
      %v2540 = vadd.f32 %v2171, %v2481
      %v2541 = vadd.f32 %v2172, %v2483
      %v2542 = vadd.f32 %v2173, %v2486
      %v2543 = vadd.f32 %v2174, %v2488
      %v2544 = vadd.f32 %v2175, %v2491
      %v2545 = vadd.f32 %v2176, %v2493
      %v2546 = vadd.f32 %v2177, %v2496
      %v2547 = vadd.f32 %v2178, %v2498
      %v2548 = vadd.f32 %v2179, %v2501
      %v2549 = vadd.f32 %v2180, %v2503
      %v2550 = vadd.f32 %v2181, %v2506
      %v2551 = vadd.f32 %v2182, %v2508
      %v2552 = vadd.f32 %v2183, %v2511
      %v2553 = vadd.f32 %v2184, %v2513
      %v2554 = vadd.f32 %v2185, %v2516
      %v2555 = vadd.f32 %v2186, %v2518
      %v2556 = vld [vmem:[#allocation2 + $0x8] sm:$0xc]
      %s2557 = scalar_lea.vmem %s4, 10
      %v2558 = vld [vmem:[%s2557] sm:$0x3]
      %v2560 = vunpack.c.l.b16 %v2556
      %v2561 = vpack.c.b16 %v1903, %v2560
      %vm2562 = vcmask 1045504
      %v2563 = vrot.slane %v2561, 2
      %v2564 = vrot.slane %v1940, 2
      %v2565 = vsel %vm2562, %v2563, %v2564
      %v2566 = vrot.slane %v1941, 2
      %v2567 = vsel %vm2562, %v2564, %v2566
      %v2568 = vrot.slane %v1942, 2
      %v2569 = vsel %vm2562, %v2566, %v2568
      %v2570 = vrot.slane %v1943, 2
      %v2571 = vsel %vm2562, %v2568, %v2570
      %v2572 = vrot.slane %v1944, 2
      %v2573 = vsel %vm2562, %v2570, %v2572
      %v2574 = vrot.slane %v1945, 2
      %v2575 = vsel %vm2562, %v2572, %v2574
      %v2576 = vrot.slane %v1946, 2
      %v2577 = vsel %vm2562, %v2574, %v2576
      %v2578 = vrot.slane %v1947, 2
      %v2579 = vsel %vm2562, %v2576, %v2578
      %v2580 = vrot.slane %v1948, 2
      %v2581 = vsel %vm2562, %v2578, %v2580
      %v2582 = vrot.slane %v1949, 2
      %v2583 = vsel %vm2562, %v2580, %v2582
      %v2584 = vrot.slane %v1950, 2
      %v2585 = vsel %vm2562, %v2582, %v2584
      %v2586 = vrot.slane %v1951, 2
      %v2587 = vsel %vm2562, %v2584, %v2586
      %v2588 = vrot.slane %v1952, 2
      %v2589 = vsel %vm2562, %v2586, %v2588
      %v2590 = vrot.slane %v1953, 2
      %v2591 = vsel %vm2562, %v2588, %v2590
      %v2592 = vrot.slane %v1954, 2
      %v2593 = vsel %vm2562, %v2590, %v2592
      %v2594 = vrot.slane %v1955, 2
      %v2595 = vsel %vm2562, %v2592, %v2594
      %v2596 = vrot.slane %v1956, 2
      %v2597 = vsel %vm2562, %v2594, %v2596
      %v2598 = vrot.slane %v2192, 2
      %v2599 = vsel %vm2562, %v2596, %v2598
      %v2601 = vsel %vm1294, %v2565, 0
      %v2604 = vsel %vm1294, %v2567, 0
      %v2607 = vsel %vm1294, %v2569, 0
      %v2610 = vsel %vm1294, %v2571, 0
      %v2613 = vsel %vm1294, %v2573, 0
      %v2616 = vsel %vm1294, %v2575, 0
      %v2619 = vsel %vm1294, %v2577, 0
      %v2622 = vsel %vm1294, %v2579, 0
      %v2625 = vsel %vm1294, %v2581, 0
      %v2628 = vsel %vm1294, %v2583, 0
      %v2631 = vsel %vm1294, %v2585, 0
      %v2634 = vsel %vm1294, %v2587, 0
      %v2637 = vsel %vm1294, %v2589, 0
      %v2640 = vsel %vm1294, %v2591, 0
      %v2643 = vsel %vm1294, %v2593, 0
      %v2646 = vsel %vm1294, %v2595, 0
      %v2649 = vsel %vm1294, %v2597, 0
      %v2652 = vsel %vm1294, %v2599, 0
      %v2655 = vsel %vm1349, %v2558, 0
      %2657 = vmatpush.bf16.msra.mxu0 0
      %2658 = vmatpush.bf16.msra.mxu0 0
      %2659 = vmatpush.bf16.msra.mxu0 0
      %2660 = vmatpush.bf16.msra.mxu0 0
      %2661 = vmatpush.bf16.msra.mxu0 0
      %2662 = vmatpush.bf16.msra.mxu0 0
      %2663 = vmatpush.bf16.msra.mxu0 0
      %2664 = vmatpush.bf16.msra.mxu0 %v2655
      %2665 = vmatmul.bf16.gmra.mxu0 %v2601
      %v2666 = vpop.f32.mrf.mxu0
      %v2667 = vadd.f32 0.0, %v2666
      %v2668 = vpop.f32.mrf.mxu0
      %v2669 = vadd.f32 0.0, %v2668
      %2670 = vmatmul.bf16.gmra.mxu0 %v2604
      %v2671 = vpop.f32.mrf.mxu0
      %v2672 = vadd.f32 0.0, %v2671
      %v2673 = vpop.f32.mrf.mxu0
      %v2674 = vadd.f32 0.0, %v2673
      %2675 = vmatmul.bf16.gmra.mxu0 %v2607
      %v2676 = vpop.f32.mrf.mxu0
      %v2677 = vadd.f32 0.0, %v2676
      %v2678 = vpop.f32.mrf.mxu0
      %v2679 = vadd.f32 0.0, %v2678
      %2680 = vmatmul.bf16.gmra.mxu0 %v2610
      %v2681 = vpop.f32.mrf.mxu0
      %v2682 = vadd.f32 0.0, %v2681
      %v2683 = vpop.f32.mrf.mxu0
      %v2684 = vadd.f32 0.0, %v2683
      %2685 = vmatmul.bf16.gmra.mxu0 %v2613
      %v2686 = vpop.f32.mrf.mxu0
      %v2687 = vadd.f32 0.0, %v2686
      %v2688 = vpop.f32.mrf.mxu0
      %v2689 = vadd.f32 0.0, %v2688
      %2690 = vmatmul.bf16.gmra.mxu0 %v2616
      %v2691 = vpop.f32.mrf.mxu0
      %v2692 = vadd.f32 0.0, %v2691
      %v2693 = vpop.f32.mrf.mxu0
      %v2694 = vadd.f32 0.0, %v2693
      %2695 = vmatmul.bf16.gmra.mxu0 %v2619
      %v2696 = vpop.f32.mrf.mxu0
      %v2697 = vadd.f32 0.0, %v2696
      %v2698 = vpop.f32.mrf.mxu0
      %v2699 = vadd.f32 0.0, %v2698
      %2700 = vmatmul.bf16.gmra.mxu0 %v2622
      %v2701 = vpop.f32.mrf.mxu0
      %v2702 = vadd.f32 0.0, %v2701
      %v2703 = vpop.f32.mrf.mxu0
      %v2704 = vadd.f32 0.0, %v2703
      %2705 = vmatmul.bf16.gmra.mxu0 %v2625
      %v2706 = vpop.f32.mrf.mxu0
      %v2707 = vadd.f32 0.0, %v2706
      %v2708 = vpop.f32.mrf.mxu0
      %v2709 = vadd.f32 0.0, %v2708
      %2710 = vmatmul.bf16.gmra.mxu0 %v2628
      %v2711 = vpop.f32.mrf.mxu0
      %v2712 = vadd.f32 0.0, %v2711
      %v2713 = vpop.f32.mrf.mxu0
      %v2714 = vadd.f32 0.0, %v2713
      %2715 = vmatmul.bf16.gmra.mxu0 %v2631
      %v2716 = vpop.f32.mrf.mxu0
      %v2717 = vadd.f32 0.0, %v2716
      %v2718 = vpop.f32.mrf.mxu0
      %v2719 = vadd.f32 0.0, %v2718
      %2720 = vmatmul.bf16.gmra.mxu0 %v2634
      %v2721 = vpop.f32.mrf.mxu0
      %v2722 = vadd.f32 0.0, %v2721
      %v2723 = vpop.f32.mrf.mxu0
      %v2724 = vadd.f32 0.0, %v2723
      %2725 = vmatmul.bf16.gmra.mxu0 %v2637
      %v2726 = vpop.f32.mrf.mxu0
      %v2727 = vadd.f32 0.0, %v2726
      %v2728 = vpop.f32.mrf.mxu0
      %v2729 = vadd.f32 0.0, %v2728
      %2730 = vmatmul.bf16.gmra.mxu0 %v2640
      %v2731 = vpop.f32.mrf.mxu0
      %v2732 = vadd.f32 0.0, %v2731
      %v2733 = vpop.f32.mrf.mxu0
      %v2734 = vadd.f32 0.0, %v2733
      %2735 = vmatmul.bf16.gmra.mxu0 %v2643
      %v2736 = vpop.f32.mrf.mxu0
      %v2737 = vadd.f32 0.0, %v2736
      %v2738 = vpop.f32.mrf.mxu0
      %v2739 = vadd.f32 0.0, %v2738
      %2740 = vmatmul.bf16.gmra.mxu0 %v2646
      %v2741 = vpop.f32.mrf.mxu0
      %v2742 = vadd.f32 0.0, %v2741
      %v2743 = vpop.f32.mrf.mxu0
      %v2744 = vadd.f32 0.0, %v2743
      %2745 = vmatmul.bf16.gmra.mxu0 %v2649
      %v2746 = vpop.f32.mrf.mxu0
      %v2747 = vadd.f32 0.0, %v2746
      %v2748 = vpop.f32.mrf.mxu0
      %v2749 = vadd.f32 0.0, %v2748
      %2750 = vmatmul.bf16.gmra.mxu0 %v2652
      %v2751 = vpop.f32.mrf.mxu0
      %v2752 = vadd.f32 0.0, %v2751
      %v2753 = vpop.f32.mrf.mxu0
      %v2754 = vadd.f32 0.0, %v2753
      %2755 = vdwg.mxu0
      %v2756 = vadd.f32 %v2520, %v2667
      %v2757 = vadd.f32 %v2521, %v2669
      %v2758 = vadd.f32 %v2522, %v2672
      %v2759 = vadd.f32 %v2523, %v2674
      %v2760 = vadd.f32 %v2524, %v2677
      %v2761 = vadd.f32 %v2525, %v2679
      %v2762 = vadd.f32 %v2526, %v2682
      %v2763 = vadd.f32 %v2527, %v2684
      %v2764 = vadd.f32 %v2528, %v2687
      %v2765 = vadd.f32 %v2529, %v2689
      %v2766 = vadd.f32 %v2530, %v2692
      %v2767 = vadd.f32 %v2531, %v2694
      %v2768 = vadd.f32 %v2532, %v2697
      %v2769 = vadd.f32 %v2533, %v2699
      %v2770 = vadd.f32 %v2534, %v2702
      %v2771 = vadd.f32 %v2535, %v2704
      %v2772 = vadd.f32 %v2536, %v2707
      %v2773 = vadd.f32 %v2537, %v2709
      %v2774 = vadd.f32 %v2538, %v2712
      %v2775 = vadd.f32 %v2539, %v2714
      %v2776 = vadd.f32 %v2540, %v2717
      %v2777 = vadd.f32 %v2541, %v2719
      %v2778 = vadd.f32 %v2542, %v2722
      %v2779 = vadd.f32 %v2543, %v2724
      %v2780 = vadd.f32 %v2544, %v2727
      %v2781 = vadd.f32 %v2545, %v2729
      %v2782 = vadd.f32 %v2546, %v2732
      %v2783 = vadd.f32 %v2547, %v2734
      %v2784 = vadd.f32 %v2548, %v2737
      %v2785 = vadd.f32 %v2549, %v2739
      %v2786 = vadd.f32 %v2550, %v2742
      %v2787 = vadd.f32 %v2551, %v2744
      %v2788 = vadd.f32 %v2552, %v2747
      %v2789 = vadd.f32 %v2553, %v2749
      %v2790 = vadd.f32 %v2554, %v2752
      %v2791 = vadd.f32 %v2555, %v2754
      %v2792 = vld [vmem:[#allocation2 + $0x10] sm:$0xc]
      %v2793 = vld [vmem:[#allocation2 + $0x14] sm:$0xf]
      %v2794 = vld [vmem:[#allocation2 + $0x18] sm:$0xf]
      %v2795 = vld [vmem:[#allocation2 + $0x1c] sm:$0xf]
      %v2796 = vld [vmem:[#allocation2 + $0x20] sm:$0xf]
      %v2797 = vld [vmem:[#allocation2 + $0x24] sm:$0xf]
      %v2798 = vld [vmem:[#allocation2 + $0x28] sm:$0xf]
      %v2799 = vld [vmem:[#allocation2 + $0x2c] sm:$0xf]
      %v2800 = vld [vmem:[#allocation2 + $0x30] sm:$0xf]
      %v2801 = vld [vmem:[#allocation2 + $0x34] sm:$0xf]
      %v2802 = vld [vmem:[#allocation2 + $0x38] sm:$0xf]
      %v2803 = vld [vmem:[#allocation2 + $0x3c] sm:$0xf]
      %v2804 = vld [vmem:[#allocation2 + $0x40] sm:$0xf]
      %v2805 = vld [vmem:[#allocation2 + $0x44] sm:$0xf]
      %v2806 = vld [vmem:[#allocation2 + $0x48] sm:$0xf]
      %v2807 = vld [vmem:[#allocation2 + $0x4c] sm:$0xf]
      %v2808 = vld [vmem:[#allocation2 + $0x50] sm:$0xf]
      %v2809 = vld [vmem:[#allocation2 + $0x54] sm:$0xf]
      %v2810 = vld [vmem:[#allocation2 + $0x58] sm:$0xf]
      %v2811 = vld [vmem:[#allocation2 + $0x5c] sm:$0xf]
      %v2812 = vld [vmem:[#allocation2 + $0x60] sm:$0xf]
      %v2813 = vld [vmem:[#allocation2 + $0x64] sm:$0xf]
      %v2814 = vld [vmem:[#allocation2 + $0x68] sm:$0xf]
      %v2815 = vld [vmem:[#allocation2 + $0x6c] sm:$0xf]
      %v2816 = vld [vmem:[#allocation2 + $0x70] sm:$0xf]
      %v2817 = vld [vmem:[#allocation2 + $0x74] sm:$0xf]
      %v2818 = vld [vmem:[#allocation2 + $0x78] sm:$0xf]
      %v2819 = vld [vmem:[#allocation2 + $0x7c] sm:$0xf]
      %v2820 = vld [vmem:[#allocation2 + $0x80] sm:$0xf]
      %v2821 = vld [vmem:[#allocation2 + $0x84] sm:$0xf]
      %v2822 = vld [vmem:[#allocation2 + $0x88] sm:$0xf]
      %v2823 = vld [vmem:[#allocation2 + $0x8c] sm:$0xf]
      %v2824 = vld [vmem:[#allocation2 + $0x90] sm:$0xf]
      %v2825 = vld [vmem:[#allocation2 + $0x94] sm:$0xf]
      %v2826 = vld [vmem:[#allocation2 + $0x98] sm:$0xf]
      %v2827 = vld [vmem:[#allocation2 + $0x9c] sm:$0xf]
      %v2828 = vld [vmem:[#allocation2 + $0xa0] sm:$0x3]
      %s2829 = scalar_lea.vmem %s4, 12
      %v2830 = vld [vmem:[%s2829] sm:$0x3]
      %v2868 = vunpack.c.l.b16 %v2792
      %v2869 = vunpack.c.l.b16 %v2793
      %v2870 = vunpack.c.l.b16 %v2794
      %v2871 = vunpack.c.l.b16 %v2795
      %v2872 = vunpack.c.l.b16 %v2796
      %v2873 = vunpack.c.l.b16 %v2797
      %v2874 = vunpack.c.l.b16 %v2798
      %v2875 = vunpack.c.l.b16 %v2799
      %v2876 = vunpack.c.l.b16 %v2800
      %v2877 = vunpack.c.l.b16 %v2801
      %v2878 = vunpack.c.l.b16 %v2802
      %v2879 = vunpack.c.l.b16 %v2803
      %v2880 = vunpack.c.l.b16 %v2804
      %v2881 = vunpack.c.l.b16 %v2805
      %v2882 = vunpack.c.l.b16 %v2806
      %v2883 = vunpack.c.l.b16 %v2807
      %v2884 = vunpack.c.l.b16 %v2808
      %v2885 = vunpack.c.l.b16 %v2809
      %v2886 = vunpack.c.l.b16 %v2810
      %v2887 = vunpack.c.l.b16 %v2811
      %v2888 = vunpack.c.l.b16 %v2812
      %v2889 = vunpack.c.l.b16 %v2813
      %v2890 = vunpack.c.l.b16 %v2814
      %v2891 = vunpack.c.l.b16 %v2815
      %v2892 = vunpack.c.l.b16 %v2816
      %v2893 = vunpack.c.l.b16 %v2817
      %v2894 = vunpack.c.l.b16 %v2818
      %v2895 = vunpack.c.l.b16 %v2819
      %v2896 = vunpack.c.l.b16 %v2820
      %v2897 = vunpack.c.l.b16 %v2821
      %v2898 = vunpack.c.l.b16 %v2822
      %v2899 = vunpack.c.l.b16 %v2823
      %v2900 = vunpack.c.l.b16 %v2824
      %v2901 = vunpack.c.l.b16 %v2825
      %v2902 = vunpack.c.l.b16 %v2826
      %v2903 = vunpack.c.l.b16 %v2827
      %v2904 = vunpack.c.l.b16 %v2828
      %v2905 = vpack.c.b16 %v2869, %v2868
      %v2906 = vpack.c.b16 %v2871, %v2870
      %v2907 = vpack.c.b16 %v2873, %v2872
      %v2908 = vpack.c.b16 %v2875, %v2874
      %v2909 = vpack.c.b16 %v2877, %v2876
      %v2910 = vpack.c.b16 %v2879, %v2878
      %v2911 = vpack.c.b16 %v2881, %v2880
      %v2912 = vpack.c.b16 %v2883, %v2882
      %v2913 = vpack.c.b16 %v2885, %v2884
      %v2914 = vpack.c.b16 %v2887, %v2886
      %v2915 = vpack.c.b16 %v2889, %v2888
      %v2916 = vpack.c.b16 %v2891, %v2890
      %v2917 = vpack.c.b16 %v2893, %v2892
      %v2918 = vpack.c.b16 %v2895, %v2894
      %v2919 = vpack.c.b16 %v2897, %v2896
      %v2920 = vpack.c.b16 %v2899, %v2898
      %v2921 = vpack.c.b16 %v2901, %v2900
      %v2922 = vpack.c.b16 %v2903, %v2902
      %v2923 = vpack.c.b16 %v2904, %v2904
      %v2924 = vrot.slane %v2905, 2
      %v2925 = vrot.slane %v2906, 2
      %v2926 = vsel %vm2562, %v2924, %v2925
      %v2927 = vrot.slane %v2907, 2
      %v2928 = vsel %vm2562, %v2925, %v2927
      %v2929 = vrot.slane %v2908, 2
      %v2930 = vsel %vm2562, %v2927, %v2929
      %v2931 = vrot.slane %v2909, 2
      %v2932 = vsel %vm2562, %v2929, %v2931
      %v2933 = vrot.slane %v2910, 2
      %v2934 = vsel %vm2562, %v2931, %v2933
      %v2935 = vrot.slane %v2911, 2
      %v2936 = vsel %vm2562, %v2933, %v2935
      %v2937 = vrot.slane %v2912, 2
      %v2938 = vsel %vm2562, %v2935, %v2937
      %v2939 = vrot.slane %v2913, 2
      %v2940 = vsel %vm2562, %v2937, %v2939
      %v2941 = vrot.slane %v2914, 2
      %v2942 = vsel %vm2562, %v2939, %v2941
      %v2943 = vrot.slane %v2915, 2
      %v2944 = vsel %vm2562, %v2941, %v2943
      %v2945 = vrot.slane %v2916, 2
      %v2946 = vsel %vm2562, %v2943, %v2945
      %v2947 = vrot.slane %v2917, 2
      %v2948 = vsel %vm2562, %v2945, %v2947
      %v2949 = vrot.slane %v2918, 2
      %v2950 = vsel %vm2562, %v2947, %v2949
      %v2951 = vrot.slane %v2919, 2
      %v2952 = vsel %vm2562, %v2949, %v2951
      %v2953 = vrot.slane %v2920, 2
      %v2954 = vsel %vm2562, %v2951, %v2953
      %v2955 = vrot.slane %v2921, 2
      %v2956 = vsel %vm2562, %v2953, %v2955
      %v2957 = vrot.slane %v2922, 2
      %v2958 = vsel %vm2562, %v2955, %v2957
      %v2959 = vrot.slane %v2923, 2
      %v2960 = vsel %vm2562, %v2957, %v2959
      %v2962 = vsel %vm1294, %v2926, 0
      %v2965 = vsel %vm1294, %v2928, 0
      %v2968 = vsel %vm1294, %v2930, 0
      %v2971 = vsel %vm1294, %v2932, 0
      %v2974 = vsel %vm1294, %v2934, 0
      %v2977 = vsel %vm1294, %v2936, 0
      %v2980 = vsel %vm1294, %v2938, 0
      %v2983 = vsel %vm1294, %v2940, 0
      %v2986 = vsel %vm1294, %v2942, 0
      %v2989 = vsel %vm1294, %v2944, 0
      %v2992 = vsel %vm1294, %v2946, 0
      %v2995 = vsel %vm1294, %v2948, 0
      %v2998 = vsel %vm1294, %v2950, 0
      %v3001 = vsel %vm1294, %v2952, 0
      %v3004 = vsel %vm1294, %v2954, 0
      %v3007 = vsel %vm1294, %v2956, 0
      %v3010 = vsel %vm1294, %v2958, 0
      %v3013 = vsel %vm1294, %v2960, 0
      %v3016 = vsel %vm1349, %v2830, 0
      %3018 = vmatpush.bf16.msra.mxu0 0
      %3019 = vmatpush.bf16.msra.mxu0 0
      %3020 = vmatpush.bf16.msra.mxu0 0
      %3021 = vmatpush.bf16.msra.mxu0 0
      %3022 = vmatpush.bf16.msra.mxu0 0
      %3023 = vmatpush.bf16.msra.mxu0 0
      %3024 = vmatpush.bf16.msra.mxu0 0
      %3025 = vmatpush.bf16.msra.mxu0 %v3016
      %3026 = vmatmul.bf16.gmra.mxu0 %v2962
      %v3027 = vpop.f32.mrf.mxu0
      %v3028 = vadd.f32 0.0, %v3027
      %v3029 = vpop.f32.mrf.mxu0
      %v3030 = vadd.f32 0.0, %v3029
      %3031 = vmatmul.bf16.gmra.mxu0 %v2965
      %v3032 = vpop.f32.mrf.mxu0
      %v3033 = vadd.f32 0.0, %v3032
      %v3034 = vpop.f32.mrf.mxu0
      %v3035 = vadd.f32 0.0, %v3034
      %3036 = vmatmul.bf16.gmra.mxu0 %v2968
      %v3037 = vpop.f32.mrf.mxu0
      %v3038 = vadd.f32 0.0, %v3037
      %v3039 = vpop.f32.mrf.mxu0
      %v3040 = vadd.f32 0.0, %v3039
      %3041 = vmatmul.bf16.gmra.mxu0 %v2971
      %v3042 = vpop.f32.mrf.mxu0
      %v3043 = vadd.f32 0.0, %v3042
      %v3044 = vpop.f32.mrf.mxu0
      %v3045 = vadd.f32 0.0, %v3044
      %3046 = vmatmul.bf16.gmra.mxu0 %v2974
      %v3047 = vpop.f32.mrf.mxu0
      %v3048 = vadd.f32 0.0, %v3047
      %v3049 = vpop.f32.mrf.mxu0
      %v3050 = vadd.f32 0.0, %v3049
      %3051 = vmatmul.bf16.gmra.mxu0 %v2977
      %v3052 = vpop.f32.mrf.mxu0
      %v3053 = vadd.f32 0.0, %v3052
      %v3054 = vpop.f32.mrf.mxu0
      %v3055 = vadd.f32 0.0, %v3054
      %3056 = vmatmul.bf16.gmra.mxu0 %v2980
      %v3057 = vpop.f32.mrf.mxu0
      %v3058 = vadd.f32 0.0, %v3057
      %v3059 = vpop.f32.mrf.mxu0
      %v3060 = vadd.f32 0.0, %v3059
      %3061 = vmatmul.bf16.gmra.mxu0 %v2983
      %v3062 = vpop.f32.mrf.mxu0
      %v3063 = vadd.f32 0.0, %v3062
      %v3064 = vpop.f32.mrf.mxu0
      %v3065 = vadd.f32 0.0, %v3064
      %3066 = vmatmul.bf16.gmra.mxu0 %v2986
      %v3067 = vpop.f32.mrf.mxu0
      %v3068 = vadd.f32 0.0, %v3067
      %v3069 = vpop.f32.mrf.mxu0
      %v3070 = vadd.f32 0.0, %v3069
      %3071 = vmatmul.bf16.gmra.mxu0 %v2989
      %v3072 = vpop.f32.mrf.mxu0
      %v3073 = vadd.f32 0.0, %v3072
      %v3074 = vpop.f32.mrf.mxu0
      %v3075 = vadd.f32 0.0, %v3074
      %3076 = vmatmul.bf16.gmra.mxu0 %v2992
      %v3077 = vpop.f32.mrf.mxu0
      %v3078 = vadd.f32 0.0, %v3077
      %v3079 = vpop.f32.mrf.mxu0
      %v3080 = vadd.f32 0.0, %v3079
      %3081 = vmatmul.bf16.gmra.mxu0 %v2995
      %v3082 = vpop.f32.mrf.mxu0
      %v3083 = vadd.f32 0.0, %v3082
      %v3084 = vpop.f32.mrf.mxu0
      %v3085 = vadd.f32 0.0, %v3084
      %3086 = vmatmul.bf16.gmra.mxu0 %v2998
      %v3087 = vpop.f32.mrf.mxu0
      %v3088 = vadd.f32 0.0, %v3087
      %v3089 = vpop.f32.mrf.mxu0
      %v3090 = vadd.f32 0.0, %v3089
      %3091 = vmatmul.bf16.gmra.mxu0 %v3001
      %v3092 = vpop.f32.mrf.mxu0
      %v3093 = vadd.f32 0.0, %v3092
      %v3094 = vpop.f32.mrf.mxu0
      %v3095 = vadd.f32 0.0, %v3094
      %3096 = vmatmul.bf16.gmra.mxu0 %v3004
      %v3097 = vpop.f32.mrf.mxu0
      %v3098 = vadd.f32 0.0, %v3097
      %v3099 = vpop.f32.mrf.mxu0
      %v3100 = vadd.f32 0.0, %v3099
      %3101 = vmatmul.bf16.gmra.mxu0 %v3007
      %v3102 = vpop.f32.mrf.mxu0
      %v3103 = vadd.f32 0.0, %v3102
      %v3104 = vpop.f32.mrf.mxu0
      %v3105 = vadd.f32 0.0, %v3104
      %3106 = vmatmul.bf16.gmra.mxu0 %v3010
      %v3107 = vpop.f32.mrf.mxu0
      %v3108 = vadd.f32 0.0, %v3107
      %v3109 = vpop.f32.mrf.mxu0
      %v3110 = vadd.f32 0.0, %v3109
      %3111 = vmatmul.bf16.gmra.mxu0 %v3013
      %v3112 = vpop.f32.mrf.mxu0
      %v3113 = vadd.f32 0.0, %v3112
      %v3114 = vpop.f32.mrf.mxu0
      %v3115 = vadd.f32 0.0, %v3114
      %3116 = vdwg.mxu0
      %v3117 = vadd.f32 %v2756, %v3028
      %v3118 = vadd.f32 %v2757, %v3030
      %v3119 = vadd.f32 %v2758, %v3033
      %v3120 = vadd.f32 %v2759, %v3035
      %v3121 = vadd.f32 %v2760, %v3038
      %v3122 = vadd.f32 %v2761, %v3040
      %v3123 = vadd.f32 %v2762, %v3043
      %v3124 = vadd.f32 %v2763, %v3045
      %v3125 = vadd.f32 %v2764, %v3048
      %v3126 = vadd.f32 %v2765, %v3050
      %v3127 = vadd.f32 %v2766, %v3053
      %v3128 = vadd.f32 %v2767, %v3055
      %v3129 = vadd.f32 %v2768, %v3058
      %v3130 = vadd.f32 %v2769, %v3060
      %v3131 = vadd.f32 %v2770, %v3063
      %v3132 = vadd.f32 %v2771, %v3065
      %v3133 = vadd.f32 %v2772, %v3068
      %v3134 = vadd.f32 %v2773, %v3070
      %v3135 = vadd.f32 %v2774, %v3073
      %v3136 = vadd.f32 %v2775, %v3075
      %v3137 = vadd.f32 %v2776, %v3078
      %v3138 = vadd.f32 %v2777, %v3080
      %v3139 = vadd.f32 %v2778, %v3083
      %v3140 = vadd.f32 %v2779, %v3085
      %v3141 = vadd.f32 %v2780, %v3088
      %v3142 = vadd.f32 %v2781, %v3090
      %v3143 = vadd.f32 %v2782, %v3093
      %v3144 = vadd.f32 %v2783, %v3095
      %v3145 = vadd.f32 %v2784, %v3098
      %v3146 = vadd.f32 %v2785, %v3100
      %v3147 = vadd.f32 %v2786, %v3103
      %v3148 = vadd.f32 %v2787, %v3105
      %v3149 = vadd.f32 %v2788, %v3108
      %v3150 = vadd.f32 %v2789, %v3110
      %v3151 = vadd.f32 %v2790, %v3113
      %v3152 = vadd.f32 %v2791, %v3115
      %v3153 = vld [vmem:[#allocation2 + $0xa0] sm:$0x7]
      %s3154 = scalar_lea.vmem %s4, 14
      %v3155 = vld [vmem:[%s3154] sm:$0x3]
      %v3157 = vunpack.c.l.b16 %v3153
      %v3158 = vpack.c.b16 %v3157, %v3157
      %vm3159 = vsmask.f32 5376
      %v3161 = vshrl.u32 %v2905, 16
      %v3163 = vrot.slane %v3161, 2
      %v3164 = vshll.u32 %v2905, 16
      %v3166 = vrot.slane %v3164, 3
      %v3167 = vor.u32 %v3163, %v3166
      %v3169 = vshrl.u32 %v2906, 16
      %v3171 = vrot.slane %v3169, 2
      %v3172 = vshll.u32 %v2906, 16
      %v3174 = vrot.slane %v3172, 3
      %v3175 = vor.u32 %v3171, %v3174
      %v3176 = vsel %vm3159, %v3167, %v3175
      %v3178 = vshrl.u32 %v2907, 16
      %v3180 = vrot.slane %v3178, 2
      %v3181 = vshll.u32 %v2907, 16
      %v3183 = vrot.slane %v3181, 3
      %v3184 = vor.u32 %v3180, %v3183
      %v3185 = vsel %vm3159, %v3175, %v3184
      %v3187 = vshrl.u32 %v2908, 16
      %v3189 = vrot.slane %v3187, 2
      %v3190 = vshll.u32 %v2908, 16
      %v3192 = vrot.slane %v3190, 3
      %v3193 = vor.u32 %v3189, %v3192
      %v3194 = vsel %vm3159, %v3184, %v3193
      %v3196 = vshrl.u32 %v2909, 16
      %v3198 = vrot.slane %v3196, 2
      %v3199 = vshll.u32 %v2909, 16
      %v3201 = vrot.slane %v3199, 3
      %v3202 = vor.u32 %v3198, %v3201
      %v3203 = vsel %vm3159, %v3193, %v3202
      %v3205 = vshrl.u32 %v2910, 16
      %v3207 = vrot.slane %v3205, 2
      %v3208 = vshll.u32 %v2910, 16
      %v3210 = vrot.slane %v3208, 3
      %v3211 = vor.u32 %v3207, %v3210
      %v3212 = vsel %vm3159, %v3202, %v3211
      %v3214 = vshrl.u32 %v2911, 16
      %v3216 = vrot.slane %v3214, 2
      %v3217 = vshll.u32 %v2911, 16
      %v3219 = vrot.slane %v3217, 3
      %v3220 = vor.u32 %v3216, %v3219
      %v3221 = vsel %vm3159, %v3211, %v3220
      %v3223 = vshrl.u32 %v2912, 16
      %v3225 = vrot.slane %v3223, 2
      %v3226 = vshll.u32 %v2912, 16
      %v3228 = vrot.slane %v3226, 3
      %v3229 = vor.u32 %v3225, %v3228
      %v3230 = vsel %vm3159, %v3220, %v3229
      %v3232 = vshrl.u32 %v2913, 16
      %v3234 = vrot.slane %v3232, 2
      %v3235 = vshll.u32 %v2913, 16
      %v3237 = vrot.slane %v3235, 3
      %v3238 = vor.u32 %v3234, %v3237
      %v3239 = vsel %vm3159, %v3229, %v3238
      %v3241 = vshrl.u32 %v2914, 16
      %v3243 = vrot.slane %v3241, 2
      %v3244 = vshll.u32 %v2914, 16
      %v3246 = vrot.slane %v3244, 3
      %v3247 = vor.u32 %v3243, %v3246
      %v3248 = vsel %vm3159, %v3238, %v3247
      %v3250 = vshrl.u32 %v2915, 16
      %v3252 = vrot.slane %v3250, 2
      %v3253 = vshll.u32 %v2915, 16
      %v3255 = vrot.slane %v3253, 3
      %v3256 = vor.u32 %v3252, %v3255
      %v3257 = vsel %vm3159, %v3247, %v3256
      %v3259 = vshrl.u32 %v2916, 16
      %v3261 = vrot.slane %v3259, 2
      %v3262 = vshll.u32 %v2916, 16
      %v3264 = vrot.slane %v3262, 3
      %v3265 = vor.u32 %v3261, %v3264
      %v3266 = vsel %vm3159, %v3256, %v3265
      %v3268 = vshrl.u32 %v2917, 16
      %v3270 = vrot.slane %v3268, 2
      %v3271 = vshll.u32 %v2917, 16
      %v3273 = vrot.slane %v3271, 3
      %v3274 = vor.u32 %v3270, %v3273
      %v3275 = vsel %vm3159, %v3265, %v3274
      %v3277 = vshrl.u32 %v2918, 16
      %v3279 = vrot.slane %v3277, 2
      %v3280 = vshll.u32 %v2918, 16
      %v3282 = vrot.slane %v3280, 3
      %v3283 = vor.u32 %v3279, %v3282
      %v3284 = vsel %vm3159, %v3274, %v3283
      %v3286 = vshrl.u32 %v2919, 16
      %v3288 = vrot.slane %v3286, 2
      %v3289 = vshll.u32 %v2919, 16
      %v3291 = vrot.slane %v3289, 3
      %v3292 = vor.u32 %v3288, %v3291
      %v3293 = vsel %vm3159, %v3283, %v3292
      %v3295 = vshrl.u32 %v2920, 16
      %v3297 = vrot.slane %v3295, 2
      %v3298 = vshll.u32 %v2920, 16
      %v3300 = vrot.slane %v3298, 3
      %v3301 = vor.u32 %v3297, %v3300
      %v3302 = vsel %vm3159, %v3292, %v3301
      %v3304 = vshrl.u32 %v2921, 16
      %v3306 = vrot.slane %v3304, 2
      %v3307 = vshll.u32 %v2921, 16
      %v3309 = vrot.slane %v3307, 3
      %v3310 = vor.u32 %v3306, %v3309
      %v3311 = vsel %vm3159, %v3301, %v3310
      %v3313 = vshrl.u32 %v2922, 16
      %v3315 = vrot.slane %v3313, 2
      %v3316 = vshll.u32 %v2922, 16
      %v3318 = vrot.slane %v3316, 3
      %v3319 = vor.u32 %v3315, %v3318
      %v3320 = vsel %vm3159, %v3310, %v3319
      %v3322 = vshrl.u32 %v3158, 16
      %v3324 = vrot.slane %v3322, 2
      %v3325 = vshll.u32 %v3158, 16
      %v3327 = vrot.slane %v3325, 3
      %v3328 = vor.u32 %v3324, %v3327
      %v3329 = vsel %vm3159, %v3319, %v3328
      %v3331 = vsel %vm1294, %v3176, 0
      %v3334 = vsel %vm1294, %v3185, 0
      %v3337 = vsel %vm1294, %v3194, 0
      %v3340 = vsel %vm1294, %v3203, 0
      %v3343 = vsel %vm1294, %v3212, 0
      %v3346 = vsel %vm1294, %v3221, 0
      %v3349 = vsel %vm1294, %v3230, 0
      %v3352 = vsel %vm1294, %v3239, 0
      %v3355 = vsel %vm1294, %v3248, 0
      %v3358 = vsel %vm1294, %v3257, 0
      %v3361 = vsel %vm1294, %v3266, 0
      %v3364 = vsel %vm1294, %v3275, 0
      %v3367 = vsel %vm1294, %v3284, 0
      %v3370 = vsel %vm1294, %v3293, 0
      %v3373 = vsel %vm1294, %v3302, 0
      %v3376 = vsel %vm1294, %v3311, 0
      %v3379 = vsel %vm1294, %v3320, 0
      %v3382 = vsel %vm1294, %v3329, 0
      %v3385 = vsel %vm1349, %v3155, 0
      %3387 = vmatpush.bf16.msra.mxu0 0
      %3388 = vmatpush.bf16.msra.mxu0 0
      %3389 = vmatpush.bf16.msra.mxu0 0
      %3390 = vmatpush.bf16.msra.mxu0 0
      %3391 = vmatpush.bf16.msra.mxu0 0
      %3392 = vmatpush.bf16.msra.mxu0 0
      %3393 = vmatpush.bf16.msra.mxu0 0
      %3394 = vmatpush.bf16.msra.mxu0 %v3385
      %3395 = vmatmul.bf16.gmra.mxu0 %v3331
      %v3396 = vpop.f32.mrf.mxu0
      %v3397 = vadd.f32 0.0, %v3396
      %v3398 = vpop.f32.mrf.mxu0
      %v3399 = vadd.f32 0.0, %v3398
      %3400 = vmatmul.bf16.gmra.mxu0 %v3334
      %v3401 = vpop.f32.mrf.mxu0
      %v3402 = vadd.f32 0.0, %v3401
      %v3403 = vpop.f32.mrf.mxu0
      %v3404 = vadd.f32 0.0, %v3403
      %3405 = vmatmul.bf16.gmra.mxu0 %v3337
      %v3406 = vpop.f32.mrf.mxu0
      %v3407 = vadd.f32 0.0, %v3406
      %v3408 = vpop.f32.mrf.mxu0
      %v3409 = vadd.f32 0.0, %v3408
      %3410 = vmatmul.bf16.gmra.mxu0 %v3340
      %v3411 = vpop.f32.mrf.mxu0
      %v3412 = vadd.f32 0.0, %v3411
      %v3413 = vpop.f32.mrf.mxu0
      %v3414 = vadd.f32 0.0, %v3413
      %3415 = vmatmul.bf16.gmra.mxu0 %v3343
      %v3416 = vpop.f32.mrf.mxu0
      %v3417 = vadd.f32 0.0, %v3416
      %v3418 = vpop.f32.mrf.mxu0
      %v3419 = vadd.f32 0.0, %v3418
      %3420 = vmatmul.bf16.gmra.mxu0 %v3346
      %v3421 = vpop.f32.mrf.mxu0
      %v3422 = vadd.f32 0.0, %v3421
      %v3423 = vpop.f32.mrf.mxu0
      %v3424 = vadd.f32 0.0, %v3423
      %3425 = vmatmul.bf16.gmra.mxu0 %v3349
      %v3426 = vpop.f32.mrf.mxu0
      %v3427 = vadd.f32 0.0, %v3426
      %v3428 = vpop.f32.mrf.mxu0
      %v3429 = vadd.f32 0.0, %v3428
      %3430 = vmatmul.bf16.gmra.mxu0 %v3352
      %v3431 = vpop.f32.mrf.mxu0
      %v3432 = vadd.f32 0.0, %v3431
      %v3433 = vpop.f32.mrf.mxu0
      %v3434 = vadd.f32 0.0, %v3433
      %3435 = vmatmul.bf16.gmra.mxu0 %v3355
      %v3436 = vpop.f32.mrf.mxu0
      %v3437 = vadd.f32 0.0, %v3436
      %v3438 = vpop.f32.mrf.mxu0
      %v3439 = vadd.f32 0.0, %v3438
      %3440 = vmatmul.bf16.gmra.mxu0 %v3358
      %v3441 = vpop.f32.mrf.mxu0
      %v3442 = vadd.f32 0.0, %v3441
      %v3443 = vpop.f32.mrf.mxu0
      %v3444 = vadd.f32 0.0, %v3443
      %3445 = vmatmul.bf16.gmra.mxu0 %v3361
      %v3446 = vpop.f32.mrf.mxu0
      %v3447 = vadd.f32 0.0, %v3446
      %v3448 = vpop.f32.mrf.mxu0
      %v3449 = vadd.f32 0.0, %v3448
      %3450 = vmatmul.bf16.gmra.mxu0 %v3364
      %v3451 = vpop.f32.mrf.mxu0
      %v3452 = vadd.f32 0.0, %v3451
      %v3453 = vpop.f32.mrf.mxu0
      %v3454 = vadd.f32 0.0, %v3453
      %3455 = vmatmul.bf16.gmra.mxu0 %v3367
      %v3456 = vpop.f32.mrf.mxu0
      %v3457 = vadd.f32 0.0, %v3456
      %v3458 = vpop.f32.mrf.mxu0
      %v3459 = vadd.f32 0.0, %v3458
      %3460 = vmatmul.bf16.gmra.mxu0 %v3370
      %v3461 = vpop.f32.mrf.mxu0
      %v3462 = vadd.f32 0.0, %v3461
      %v3463 = vpop.f32.mrf.mxu0
      %v3464 = vadd.f32 0.0, %v3463
      %3465 = vmatmul.bf16.gmra.mxu0 %v3373
      %v3466 = vpop.f32.mrf.mxu0
      %v3467 = vadd.f32 0.0, %v3466
      %v3468 = vpop.f32.mrf.mxu0
      %v3469 = vadd.f32 0.0, %v3468
      %3470 = vmatmul.bf16.gmra.mxu0 %v3376
      %v3471 = vpop.f32.mrf.mxu0
      %v3472 = vadd.f32 0.0, %v3471
      %v3473 = vpop.f32.mrf.mxu0
      %v3474 = vadd.f32 0.0, %v3473
      %3475 = vmatmul.bf16.gmra.mxu0 %v3379
      %v3476 = vpop.f32.mrf.mxu0
      %v3477 = vadd.f32 0.0, %v3476
      %v3478 = vpop.f32.mrf.mxu0
      %v3479 = vadd.f32 0.0, %v3478
      %3480 = vmatmul.bf16.gmra.mxu0 %v3382
      %v3481 = vpop.f32.mrf.mxu0
      %v3482 = vadd.f32 0.0, %v3481
      %v3483 = vpop.f32.mrf.mxu0
      %v3484 = vadd.f32 0.0, %v3483
      %3485 = vdwg.mxu0
      %v3486 = vadd.f32 %v3117, %v3397
      %v3487 = vadd.f32 %v3118, %v3399
      %v3488 = vadd.f32 %v3119, %v3402
      %v3489 = vadd.f32 %v3120, %v3404
      %v3490 = vadd.f32 %v3121, %v3407
      %v3491 = vadd.f32 %v3122, %v3409
      %v3492 = vadd.f32 %v3123, %v3412
      %v3493 = vadd.f32 %v3124, %v3414
      %v3494 = vadd.f32 %v3125, %v3417
      %v3495 = vadd.f32 %v3126, %v3419
      %v3496 = vadd.f32 %v3127, %v3422
      %v3497 = vadd.f32 %v3128, %v3424
      %v3498 = vadd.f32 %v3129, %v3427
      %v3499 = vadd.f32 %v3130, %v3429
      %v3500 = vadd.f32 %v3131, %v3432
      %v3501 = vadd.f32 %v3132, %v3434
      %v3502 = vadd.f32 %v3133, %v3437
      %v3503 = vadd.f32 %v3134, %v3439
      %v3504 = vadd.f32 %v3135, %v3442
      %v3505 = vadd.f32 %v3136, %v3444
      %v3506 = vadd.f32 %v3137, %v3447
      %v3507 = vadd.f32 %v3138, %v3449
      %v3508 = vadd.f32 %v3139, %v3452
      %v3509 = vadd.f32 %v3140, %v3454
      %v3510 = vadd.f32 %v3141, %v3457
      %v3511 = vadd.f32 %v3142, %v3459
      %v3512 = vadd.f32 %v3143, %v3462
      %v3513 = vadd.f32 %v3144, %v3464
      %v3514 = vadd.f32 %v3145, %v3467
      %v3515 = vadd.f32 %v3146, %v3469
      %v3516 = vadd.f32 %v3147, %v3472
      %v3517 = vadd.f32 %v3148, %v3474
      %v3518 = vadd.f32 %v3149, %v3477
      %v3519 = vadd.f32 %v3150, %v3479
      %v3520 = vadd.f32 %v3151, %v3482
      %v3521 = vadd.f32 %v3152, %v3484
      %v3522 = vld [vmem:[#allocation2 + $0x10] sm:$0x8]
      %s3523 = scalar_lea.vmem %s4, 16
      %v3524 = vld [vmem:[%s3523] sm:$0x3]
      %v3526 = vunpack.c.l.b16 %v3522
      %v3527 = vpack.c.b16 %v2869, %v3526
      %vm3528 = vcmask 1044480
      %v3529 = vrot.slane %v3527, 3
      %v3530 = vrot.slane %v2906, 3
      %v3531 = vsel %vm3528, %v3529, %v3530
      %v3532 = vrot.slane %v2907, 3
      %v3533 = vsel %vm3528, %v3530, %v3532
      %v3534 = vrot.slane %v2908, 3
      %v3535 = vsel %vm3528, %v3532, %v3534
      %v3536 = vrot.slane %v2909, 3
      %v3537 = vsel %vm3528, %v3534, %v3536
      %v3538 = vrot.slane %v2910, 3
      %v3539 = vsel %vm3528, %v3536, %v3538
      %v3540 = vrot.slane %v2911, 3
      %v3541 = vsel %vm3528, %v3538, %v3540
      %v3542 = vrot.slane %v2912, 3
      %v3543 = vsel %vm3528, %v3540, %v3542
      %v3544 = vrot.slane %v2913, 3
      %v3545 = vsel %vm3528, %v3542, %v3544
      %v3546 = vrot.slane %v2914, 3
      %v3547 = vsel %vm3528, %v3544, %v3546
      %v3548 = vrot.slane %v2915, 3
      %v3549 = vsel %vm3528, %v3546, %v3548
      %v3550 = vrot.slane %v2916, 3
      %v3551 = vsel %vm3528, %v3548, %v3550
      %v3552 = vrot.slane %v2917, 3
      %v3553 = vsel %vm3528, %v3550, %v3552
      %v3554 = vrot.slane %v2918, 3
      %v3555 = vsel %vm3528, %v3552, %v3554
      %v3556 = vrot.slane %v2919, 3
      %v3557 = vsel %vm3528, %v3554, %v3556
      %v3558 = vrot.slane %v2920, 3
      %v3559 = vsel %vm3528, %v3556, %v3558
      %v3560 = vrot.slane %v2921, 3
      %v3561 = vsel %vm3528, %v3558, %v3560
      %v3562 = vrot.slane %v2922, 3
      %v3563 = vsel %vm3528, %v3560, %v3562
      %v3564 = vrot.slane %v3158, 3
      %v3565 = vsel %vm3528, %v3562, %v3564
      %v3567 = vsel %vm1294, %v3531, 0
      %v3570 = vsel %vm1294, %v3533, 0
      %v3573 = vsel %vm1294, %v3535, 0
      %v3576 = vsel %vm1294, %v3537, 0
      %v3579 = vsel %vm1294, %v3539, 0
      %v3582 = vsel %vm1294, %v3541, 0
      %v3585 = vsel %vm1294, %v3543, 0
      %v3588 = vsel %vm1294, %v3545, 0
      %v3591 = vsel %vm1294, %v3547, 0
      %v3594 = vsel %vm1294, %v3549, 0
      %v3597 = vsel %vm1294, %v3551, 0
      %v3600 = vsel %vm1294, %v3553, 0
      %v3603 = vsel %vm1294, %v3555, 0
      %v3606 = vsel %vm1294, %v3557, 0
      %v3609 = vsel %vm1294, %v3559, 0
      %v3612 = vsel %vm1294, %v3561, 0
      %v3615 = vsel %vm1294, %v3563, 0
      %v3618 = vsel %vm1294, %v3565, 0
      %v3621 = vsel %vm1349, %v3524, 0
      %3623 = vmatpush.bf16.msra.mxu0 0
      %3624 = vmatpush.bf16.msra.mxu0 0
      %3625 = vmatpush.bf16.msra.mxu0 0
      %3626 = vmatpush.bf16.msra.mxu0 0
      %3627 = vmatpush.bf16.msra.mxu0 0
      %3628 = vmatpush.bf16.msra.mxu0 0
      %3629 = vmatpush.bf16.msra.mxu0 0
      %3630 = vmatpush.bf16.msra.mxu0 %v3621
      %3631 = vmatmul.bf16.gmra.mxu0 %v3567
      %v3632 = vpop.f32.mrf.mxu0
      %v3633 = vadd.f32 0.0, %v3632
      %v3634 = vpop.f32.mrf.mxu0
      %v3635 = vadd.f32 0.0, %v3634
      %3636 = vmatmul.bf16.gmra.mxu0 %v3570
      %v3637 = vpop.f32.mrf.mxu0
      %v3638 = vadd.f32 0.0, %v3637
      %v3639 = vpop.f32.mrf.mxu0
      %v3640 = vadd.f32 0.0, %v3639
      %3641 = vmatmul.bf16.gmra.mxu0 %v3573
      %v3642 = vpop.f32.mrf.mxu0
      %v3643 = vadd.f32 0.0, %v3642
      %v3644 = vpop.f32.mrf.mxu0
      %v3645 = vadd.f32 0.0, %v3644
      %3646 = vmatmul.bf16.gmra.mxu0 %v3576
      %v3647 = vpop.f32.mrf.mxu0
      %v3648 = vadd.f32 0.0, %v3647
      %v3649 = vpop.f32.mrf.mxu0
      %v3650 = vadd.f32 0.0, %v3649
      %3651 = vmatmul.bf16.gmra.mxu0 %v3579
      %v3652 = vpop.f32.mrf.mxu0
      %v3653 = vadd.f32 0.0, %v3652
      %v3654 = vpop.f32.mrf.mxu0
      %v3655 = vadd.f32 0.0, %v3654
      %3656 = vmatmul.bf16.gmra.mxu0 %v3582
      %v3657 = vpop.f32.mrf.mxu0
      %v3658 = vadd.f32 0.0, %v3657
      %v3659 = vpop.f32.mrf.mxu0
      %v3660 = vadd.f32 0.0, %v3659
      %3661 = vmatmul.bf16.gmra.mxu0 %v3585
      %v3662 = vpop.f32.mrf.mxu0
      %v3663 = vadd.f32 0.0, %v3662
      %v3664 = vpop.f32.mrf.mxu0
      %v3665 = vadd.f32 0.0, %v3664
      %3666 = vmatmul.bf16.gmra.mxu0 %v3588
      %v3667 = vpop.f32.mrf.mxu0
      %v3668 = vadd.f32 0.0, %v3667
      %v3669 = vpop.f32.mrf.mxu0
      %v3670 = vadd.f32 0.0, %v3669
      %3671 = vmatmul.bf16.gmra.mxu0 %v3591
      %v3672 = vpop.f32.mrf.mxu0
      %v3673 = vadd.f32 0.0, %v3672
      %v3674 = vpop.f32.mrf.mxu0
      %v3675 = vadd.f32 0.0, %v3674
      %3676 = vmatmul.bf16.gmra.mxu0 %v3594
      %v3677 = vpop.f32.mrf.mxu0
      %v3678 = vadd.f32 0.0, %v3677
      %v3679 = vpop.f32.mrf.mxu0
      %v3680 = vadd.f32 0.0, %v3679
      %3681 = vmatmul.bf16.gmra.mxu0 %v3597
      %v3682 = vpop.f32.mrf.mxu0
      %v3683 = vadd.f32 0.0, %v3682
      %v3684 = vpop.f32.mrf.mxu0
      %v3685 = vadd.f32 0.0, %v3684
      %3686 = vmatmul.bf16.gmra.mxu0 %v3600
      %v3687 = vpop.f32.mrf.mxu0
      %v3688 = vadd.f32 0.0, %v3687
      %v3689 = vpop.f32.mrf.mxu0
      %v3690 = vadd.f32 0.0, %v3689
      %3691 = vmatmul.bf16.gmra.mxu0 %v3603
      %v3692 = vpop.f32.mrf.mxu0
      %v3693 = vadd.f32 0.0, %v3692
      %v3694 = vpop.f32.mrf.mxu0
      %v3695 = vadd.f32 0.0, %v3694
      %3696 = vmatmul.bf16.gmra.mxu0 %v3606
      %v3697 = vpop.f32.mrf.mxu0
      %v3698 = vadd.f32 0.0, %v3697
      %v3699 = vpop.f32.mrf.mxu0
      %v3700 = vadd.f32 0.0, %v3699
      %3701 = vmatmul.bf16.gmra.mxu0 %v3609
      %v3702 = vpop.f32.mrf.mxu0
      %v3703 = vadd.f32 0.0, %v3702
      %v3704 = vpop.f32.mrf.mxu0
      %v3705 = vadd.f32 0.0, %v3704
      %3706 = vmatmul.bf16.gmra.mxu0 %v3612
      %v3707 = vpop.f32.mrf.mxu0
      %v3708 = vadd.f32 0.0, %v3707
      %v3709 = vpop.f32.mrf.mxu0
      %v3710 = vadd.f32 0.0, %v3709
      %3711 = vmatmul.bf16.gmra.mxu0 %v3615
      %v3712 = vpop.f32.mrf.mxu0
      %v3713 = vadd.f32 0.0, %v3712
      %v3714 = vpop.f32.mrf.mxu0
      %v3715 = vadd.f32 0.0, %v3714
      %3716 = vmatmul.bf16.gmra.mxu0 %v3618
      %v3717 = vpop.f32.mrf.mxu0
      %v3718 = vadd.f32 0.0, %v3717
      %v3719 = vpop.f32.mrf.mxu0
      %v3720 = vadd.f32 0.0, %v3719
      %3721 = vdwg.mxu0
      %v3722 = vadd.f32 %v3486, %v3633
      %v3723 = vadd.f32 %v3487, %v3635
      %v3724 = vadd.f32 %v3488, %v3638
      %v3725 = vadd.f32 %v3489, %v3640
      %v3726 = vadd.f32 %v3490, %v3643
      %v3727 = vadd.f32 %v3491, %v3645
      %v3728 = vadd.f32 %v3492, %v3648
      %v3729 = vadd.f32 %v3493, %v3650
      %v3730 = vadd.f32 %v3494, %v3653
      %v3731 = vadd.f32 %v3495, %v3655
      %v3732 = vadd.f32 %v3496, %v3658
      %v3733 = vadd.f32 %v3497, %v3660
      %v3734 = vadd.f32 %v3498, %v3663
      %v3735 = vadd.f32 %v3499, %v3665
      %v3736 = vadd.f32 %v3500, %v3668
      %v3737 = vadd.f32 %v3501, %v3670
      %v3738 = vadd.f32 %v3502, %v3673
      %v3739 = vadd.f32 %v3503, %v3675
      %v3740 = vadd.f32 %v3504, %v3678
      %v3741 = vadd.f32 %v3505, %v3680
      %v3742 = vadd.f32 %v3506, %v3683
      %v3743 = vadd.f32 %v3507, %v3685
      %v3744 = vadd.f32 %v3508, %v3688
      %v3745 = vadd.f32 %v3509, %v3690
      %v3746 = vadd.f32 %v3510, %v3693
      %v3747 = vadd.f32 %v3511, %v3695
      %v3748 = vadd.f32 %v3512, %v3698
      %v3749 = vadd.f32 %v3513, %v3700
      %v3750 = vadd.f32 %v3514, %v3703
      %v3751 = vadd.f32 %v3515, %v3705
      %v3752 = vadd.f32 %v3516, %v3708
      %v3753 = vadd.f32 %v3517, %v3710
      %v3754 = vadd.f32 %v3518, %v3713
      %v3755 = vadd.f32 %v3519, %v3715
      %v3756 = vadd.f32 %v3520, %v3718
      %v3757 = vadd.f32 %v3521, %v3720
      %v3758 = vld [vmem:[%s5] sm:$0x1]
      %v3760 = vperm.slane %v3758, 0
      %v3762 = vadd.f32 %v3722, %v3760
      %v3763 = vadd.f32 %v3723, %v3760
      %v3764 = vadd.f32 %v3724, %v3760
      %v3765 = vadd.f32 %v3725, %v3760
      %v3766 = vadd.f32 %v3726, %v3760
      %v3767 = vadd.f32 %v3727, %v3760
      %v3768 = vadd.f32 %v3728, %v3760
      %v3769 = vadd.f32 %v3729, %v3760
      %v3770 = vadd.f32 %v3730, %v3760
      %v3771 = vadd.f32 %v3731, %v3760
      %v3772 = vadd.f32 %v3732, %v3760
      %v3773 = vadd.f32 %v3733, %v3760
      %v3774 = vadd.f32 %v3734, %v3760
      %v3775 = vadd.f32 %v3735, %v3760
      %v3776 = vadd.f32 %v3736, %v3760
      %v3777 = vadd.f32 %v3737, %v3760
      %v3778 = vadd.f32 %v3738, %v3760
      %v3779 = vadd.f32 %v3739, %v3760
      %v3780 = vadd.f32 %v3740, %v3760
      %v3781 = vadd.f32 %v3741, %v3760
      %v3782 = vadd.f32 %v3742, %v3760
      %v3783 = vadd.f32 %v3743, %v3760
      %v3784 = vadd.f32 %v3744, %v3760
      %v3785 = vadd.f32 %v3745, %v3760
      %v3786 = vadd.f32 %v3746, %v3760
      %v3787 = vadd.f32 %v3747, %v3760
      %v3788 = vadd.f32 %v3748, %v3760
      %v3789 = vadd.f32 %v3749, %v3760
      %v3790 = vadd.f32 %v3750, %v3760
      %v3791 = vadd.f32 %v3751, %v3760
      %v3792 = vadd.f32 %v3752, %v3760
      %v3793 = vadd.f32 %v3753, %v3760
      %v3794 = vadd.f32 %v3754, %v3760
      %v3795 = vadd.f32 %v3755, %v3760
      %v3796 = vadd.f32 %v3756, %v3760
      %v3797 = vadd.f32 %v3757, %v3760
      %v3798 = vmax.f32 %v3762, 0.0
      %v3799 = vmax.f32 %v3763, 0.0
      %v3800 = vmax.f32 %v3764, 0.0
      %v3801 = vmax.f32 %v3765, 0.0
      %v3802 = vmax.f32 %v3766, 0.0
      %v3803 = vmax.f32 %v3767, 0.0
      %v3804 = vmax.f32 %v3768, 0.0
      %v3805 = vmax.f32 %v3769, 0.0
      %v3806 = vmax.f32 %v3770, 0.0
      %v3807 = vmax.f32 %v3771, 0.0
      %v3808 = vmax.f32 %v3772, 0.0
      %v3809 = vmax.f32 %v3773, 0.0
      %v3810 = vmax.f32 %v3774, 0.0
      %v3811 = vmax.f32 %v3775, 0.0
      %v3812 = vmax.f32 %v3776, 0.0
      %v3813 = vmax.f32 %v3777, 0.0
      %v3814 = vmax.f32 %v3778, 0.0
      %v3815 = vmax.f32 %v3779, 0.0
      %v3816 = vmax.f32 %v3780, 0.0
      %v3817 = vmax.f32 %v3781, 0.0
      %v3818 = vmax.f32 %v3782, 0.0
      %v3819 = vmax.f32 %v3783, 0.0
      %v3820 = vmax.f32 %v3784, 0.0
      %v3821 = vmax.f32 %v3785, 0.0
      %v3822 = vmax.f32 %v3786, 0.0
      %v3823 = vmax.f32 %v3787, 0.0
      %v3824 = vmax.f32 %v3788, 0.0
      %v3825 = vmax.f32 %v3789, 0.0
      %v3826 = vmax.f32 %v3790, 0.0
      %v3827 = vmax.f32 %v3791, 0.0
      %v3828 = vmax.f32 %v3792, 0.0
      %v3829 = vmax.f32 %v3793, 0.0
      %v3830 = vmax.f32 %v3794, 0.0
      %v3831 = vmax.f32 %v3795, 0.0
      %v3832 = vmax.f32 %v3796, 0.0
      %v3833 = vmax.f32 %v3797, 0.0
      %v3834 = vpack.c.bf16 %v3799, %v3798
      %v3835 = vpack.c.bf16 %v3801, %v3800
      %v3836 = vpack.c.bf16 %v3803, %v3802
      %v3837 = vpack.c.bf16 %v3805, %v3804
      %v3838 = vpack.c.bf16 %v3807, %v3806
      %v3839 = vpack.c.bf16 %v3809, %v3808
      %v3840 = vpack.c.bf16 %v3811, %v3810
      %v3841 = vpack.c.bf16 %v3813, %v3812
      %v3842 = vpack.c.bf16 %v3815, %v3814
      %v3843 = vpack.c.bf16 %v3817, %v3816
      %v3844 = vpack.c.bf16 %v3819, %v3818
      %v3845 = vpack.c.bf16 %v3821, %v3820
      %v3846 = vpack.c.bf16 %v3823, %v3822
      %v3847 = vpack.c.bf16 %v3825, %v3824
      %v3848 = vpack.c.bf16 %v3827, %v3826
      %v3849 = vpack.c.bf16 %v3829, %v3828
      %v3850 = vpack.c.bf16 %v3831, %v3830
      %v3851 = vpack.c.bf16 %v3833, %v3832
      %v3852 = vld [vmem:[%s6] sm:$0x3]
      %v3853 = vld [vmem:[%s7] sm:$0x1]
      %v3855 = vperm.slane %v3853, 0
      %v3858 = vsel %vm1294, %v3834, 0
      %v3861 = vsel %vm1294, %v3835, 0
      %v3864 = vsel %vm1294, %v3836, 0
      %v3867 = vsel %vm1294, %v3837, 0
      %v3870 = vsel %vm1294, %v3838, 0
      %v3873 = vsel %vm1294, %v3839, 0
      %v3876 = vsel %vm1294, %v3840, 0
      %v3879 = vsel %vm1294, %v3841, 0
      %v3882 = vsel %vm1294, %v3842, 0
      %v3885 = vsel %vm1294, %v3843, 0
      %v3888 = vsel %vm1294, %v3844, 0
      %v3891 = vsel %vm1294, %v3845, 0
      %v3894 = vsel %vm1294, %v3846, 0
      %v3897 = vsel %vm1294, %v3847, 0
      %v3900 = vsel %vm1294, %v3848, 0
      %v3903 = vsel %vm1294, %v3849, 0
      %v3906 = vsel %vm1294, %v3850, 0
      %v3909 = vsel %vm1294, %v3851, 0
      %v3912 = vsel %vm1349, %v3852, 0
      %3914 = vmatpush.bf16.msra.mxu0 0
      %3915 = vmatpush.bf16.msra.mxu0 0
      %3916 = vmatpush.bf16.msra.mxu0 0
      %3917 = vmatpush.bf16.msra.mxu0 0
      %3918 = vmatpush.bf16.msra.mxu0 0
      %3919 = vmatpush.bf16.msra.mxu0 0
      %3920 = vmatpush.bf16.msra.mxu0 0
      %3921 = vmatpush.bf16.msra.mxu0 %v3912
      %3922 = vmatmul.bf16.gmra.mxu0 %v3858
      %v3923 = vpop.f32.mrf.mxu0
      %v3924 = vadd.f32 %v3855, %v3923
      %v3925 = vpop.f32.mrf.mxu0
      %v3926 = vadd.f32 %v3855, %v3925
      %3927 = vmatmul.bf16.gmra.mxu0 %v3861
      %v3928 = vpop.f32.mrf.mxu0
      %v3929 = vadd.f32 %v3855, %v3928
      %v3930 = vpop.f32.mrf.mxu0
      %v3931 = vadd.f32 %v3855, %v3930
      %3932 = vmatmul.bf16.gmra.mxu0 %v3864
      %v3933 = vpop.f32.mrf.mxu0
      %v3934 = vadd.f32 %v3855, %v3933
      %v3935 = vpop.f32.mrf.mxu0
      %v3936 = vadd.f32 %v3855, %v3935
      %3937 = vmatmul.bf16.gmra.mxu0 %v3867
      %v3938 = vpop.f32.mrf.mxu0
      %v3939 = vadd.f32 %v3855, %v3938
      %v3940 = vpop.f32.mrf.mxu0
      %v3941 = vadd.f32 %v3855, %v3940
      %3942 = vmatmul.bf16.gmra.mxu0 %v3870
      %v3943 = vpop.f32.mrf.mxu0
      %v3944 = vadd.f32 %v3855, %v3943
      %v3945 = vpop.f32.mrf.mxu0
      %v3946 = vadd.f32 %v3855, %v3945
      %3947 = vmatmul.bf16.gmra.mxu0 %v3873
      %v3948 = vpop.f32.mrf.mxu0
      %v3949 = vadd.f32 %v3855, %v3948
      %v3950 = vpop.f32.mrf.mxu0
      %v3951 = vadd.f32 %v3855, %v3950
      %3952 = vmatmul.bf16.gmra.mxu0 %v3876
      %v3953 = vpop.f32.mrf.mxu0
      %v3954 = vadd.f32 %v3855, %v3953
      %v3955 = vpop.f32.mrf.mxu0
      %v3956 = vadd.f32 %v3855, %v3955
      %3957 = vmatmul.bf16.gmra.mxu0 %v3879
      %v3958 = vpop.f32.mrf.mxu0
      %v3959 = vadd.f32 %v3855, %v3958
      %v3960 = vpop.f32.mrf.mxu0
      %v3961 = vadd.f32 %v3855, %v3960
      %3962 = vmatmul.bf16.gmra.mxu0 %v3882
      %v3963 = vpop.f32.mrf.mxu0
      %v3964 = vadd.f32 %v3855, %v3963
      %v3965 = vpop.f32.mrf.mxu0
      %v3966 = vadd.f32 %v3855, %v3965
      %3967 = vmatmul.bf16.gmra.mxu0 %v3885
      %v3968 = vpop.f32.mrf.mxu0
      %v3969 = vadd.f32 %v3855, %v3968
      %v3970 = vpop.f32.mrf.mxu0
      %v3971 = vadd.f32 %v3855, %v3970
      %3972 = vmatmul.bf16.gmra.mxu0 %v3888
      %v3973 = vpop.f32.mrf.mxu0
      %v3974 = vadd.f32 %v3855, %v3973
      %v3975 = vpop.f32.mrf.mxu0
      %v3976 = vadd.f32 %v3855, %v3975
      %3977 = vmatmul.bf16.gmra.mxu0 %v3891
      %v3978 = vpop.f32.mrf.mxu0
      %v3979 = vadd.f32 %v3855, %v3978
      %v3980 = vpop.f32.mrf.mxu0
      %v3981 = vadd.f32 %v3855, %v3980
      %3982 = vmatmul.bf16.gmra.mxu0 %v3894
      %v3983 = vpop.f32.mrf.mxu0
      %v3984 = vadd.f32 %v3855, %v3983
      %v3985 = vpop.f32.mrf.mxu0
      %v3986 = vadd.f32 %v3855, %v3985
      %3987 = vmatmul.bf16.gmra.mxu0 %v3897
      %v3988 = vpop.f32.mrf.mxu0
      %v3989 = vadd.f32 %v3855, %v3988
      %v3990 = vpop.f32.mrf.mxu0
      %v3991 = vadd.f32 %v3855, %v3990
      %3992 = vmatmul.bf16.gmra.mxu0 %v3900
      %v3993 = vpop.f32.mrf.mxu0
      %v3994 = vadd.f32 %v3855, %v3993
      %v3995 = vpop.f32.mrf.mxu0
      %v3996 = vadd.f32 %v3855, %v3995
      %3997 = vmatmul.bf16.gmra.mxu0 %v3903
      %v3998 = vpop.f32.mrf.mxu0
      %v3999 = vadd.f32 %v3855, %v3998
      %v4000 = vpop.f32.mrf.mxu0
      %v4001 = vadd.f32 %v3855, %v4000
      %4002 = vmatmul.bf16.gmra.mxu0 %v3906
      %v4003 = vpop.f32.mrf.mxu0
      %v4004 = vadd.f32 %v3855, %v4003
      %v4005 = vpop.f32.mrf.mxu0
      %v4006 = vadd.f32 %v3855, %v4005
      %4007 = vmatmul.bf16.gmra.mxu0 %v3909
      %v4008 = vpop.f32.mrf.mxu0
      %v4009 = vadd.f32 %v3855, %v4008
      %v4010 = vpop.f32.mrf.mxu0
      %v4011 = vadd.f32 %v3855, %v4010
      %4012 = vdwg.mxu0
      %vm4050 = vcmask 1044480
      %v4051 = vrot.slane %v309, 3
      %v4052 = vrot.slane %v310, 3
      %v4053 = vsel %vm4050, %v4051, %v4052
      %v4054 = vrot.slane %v311, 3
      %v4055 = vsel %vm4050, %v4052, %v4054
      %v4056 = vrot.slane %v312, 3
      %v4057 = vsel %vm4050, %v4054, %v4056
      %v4058 = vrot.slane %v313, 3
      %v4059 = vsel %vm4050, %v4056, %v4058
      %v4060 = vrot.slane %v314, 3
      %v4061 = vsel %vm4050, %v4058, %v4060
      %v4062 = vrot.slane %v315, 3
      %v4063 = vsel %vm4050, %v4060, %v4062
      %v4064 = vrot.slane %v316, 3
      %v4065 = vsel %vm4050, %v4062, %v4064
      %v4066 = vrot.slane %v317, 3
      %v4067 = vsel %vm4050, %v4064, %v4066
      %v4068 = vrot.slane %v318, 3
      %v4069 = vsel %vm4050, %v4066, %v4068
      %v4070 = vrot.slane %v319, 3
      %v4071 = vsel %vm4050, %v4068, %v4070
      %v4072 = vrot.slane %v320, 3
      %v4073 = vsel %vm4050, %v4070, %v4072
      %v4074 = vrot.slane %v321, 3
      %v4075 = vsel %vm4050, %v4072, %v4074
      %v4076 = vrot.slane %v322, 3
      %v4077 = vsel %vm4050, %v4074, %v4076
      %v4078 = vrot.slane %v323, 3
      %v4079 = vsel %vm4050, %v4076, %v4078
      %v4080 = vrot.slane %v324, 3
      %v4081 = vsel %vm4050, %v4078, %v4080
      %v4082 = vrot.slane %v325, 3
      %v4083 = vsel %vm4050, %v4080, %v4082
      %v4084 = vrot.slane %v326, 3
      %v4085 = vsel %vm4050, %v4082, %v4084
      %v4086 = vrot.slane %v327, 3
      %v4087 = vsel %vm4050, %v4084, %v4086
      %v4088 = vrot.slane %v328, 3
      %v4089 = vsel %vm4050, %v4086, %v4088
      %v4090 = vrot.slane %v329, 3
      %v4091 = vsel %vm4050, %v4088, %v4090
      %v4092 = vrot.slane %v330, 3
      %v4093 = vsel %vm4050, %v4090, %v4092
      %v4094 = vrot.slane %v331, 3
      %v4095 = vsel %vm4050, %v4092, %v4094
      %v4096 = vrot.slane %v332, 3
      %v4097 = vsel %vm4050, %v4094, %v4096
      %v4098 = vrot.slane %v333, 3
      %v4099 = vsel %vm4050, %v4096, %v4098
      %v4100 = vrot.slane %v334, 3
      %v4101 = vsel %vm4050, %v4098, %v4100
      %v4102 = vrot.slane %v335, 3
      %v4103 = vsel %vm4050, %v4100, %v4102
      %v4104 = vrot.slane %v336, 3
      %v4105 = vsel %vm4050, %v4102, %v4104
      %v4106 = vrot.slane %v337, 3
      %v4107 = vsel %vm4050, %v4104, %v4106
      %v4108 = vrot.slane %v338, 3
      %v4109 = vsel %vm4050, %v4106, %v4108
      %v4110 = vrot.slane %v339, 3
      %v4111 = vsel %vm4050, %v4108, %v4110
      %v4112 = vrot.slane %v340, 3
      %v4113 = vsel %vm4050, %v4110, %v4112
      %v4114 = vrot.slane %v341, 3
      %v4115 = vsel %vm4050, %v4112, %v4114
      %v4116 = vrot.slane %v342, 3
      %v4117 = vsel %vm4050, %v4114, %v4116
      %v4118 = vrot.slane %v343, 3
      %v4119 = vsel %vm4050, %v4116, %v4118
      %v4120 = vrot.slane %v344, 3
      %v4121 = vsel %vm4050, %v4118, %v4120
      %v4122 = vrot.slane %v345, 3
      %v4123 = vsel %vm4050, %v4120, %v4122
      %v4160 = vadd.f32 %v3924, %v4053
      %v4161 = vadd.f32 %v3926, %v4055
      %v4162 = vadd.f32 %v3929, %v4057
      %v4163 = vadd.f32 %v3931, %v4059
      %v4164 = vadd.f32 %v3934, %v4061
      %v4165 = vadd.f32 %v3936, %v4063
      %v4166 = vadd.f32 %v3939, %v4065
      %v4167 = vadd.f32 %v3941, %v4067
      %v4168 = vadd.f32 %v3944, %v4069
      %v4169 = vadd.f32 %v3946, %v4071
      %v4170 = vadd.f32 %v3949, %v4073
      %v4171 = vadd.f32 %v3951, %v4075
      %v4172 = vadd.f32 %v3954, %v4077
      %v4173 = vadd.f32 %v3956, %v4079
      %v4174 = vadd.f32 %v3959, %v4081
      %v4175 = vadd.f32 %v3961, %v4083
      %v4176 = vadd.f32 %v3964, %v4085
      %v4177 = vadd.f32 %v3966, %v4087
      %v4178 = vadd.f32 %v3969, %v4089
      %v4179 = vadd.f32 %v3971, %v4091
      %v4180 = vadd.f32 %v3974, %v4093
      %v4181 = vadd.f32 %v3976, %v4095
      %v4182 = vadd.f32 %v3979, %v4097
      %v4183 = vadd.f32 %v3981, %v4099
      %v4184 = vadd.f32 %v3984, %v4101
      %v4185 = vadd.f32 %v3986, %v4103
      %v4186 = vadd.f32 %v3989, %v4105
      %v4187 = vadd.f32 %v3991, %v4107
      %v4188 = vadd.f32 %v3994, %v4109
      %v4189 = vadd.f32 %v3996, %v4111
      %v4190 = vadd.f32 %v3999, %v4113
      %v4191 = vadd.f32 %v4001, %v4115
      %v4192 = vadd.f32 %v4004, %v4117
      %v4193 = vadd.f32 %v4006, %v4119
      %v4194 = vadd.f32 %v4009, %v4121
      %v4195 = vadd.f32 %v4011, %v4123
      %v4196 = vmax.f32 %v4160, 0.0
      %v4197 = vmax.f32 %v4161, 0.0
      %v4198 = vmax.f32 %v4162, 0.0
      %v4199 = vmax.f32 %v4163, 0.0
      %v4200 = vmax.f32 %v4164, 0.0
      %v4201 = vmax.f32 %v4165, 0.0
      %v4202 = vmax.f32 %v4166, 0.0
      %v4203 = vmax.f32 %v4167, 0.0
      %v4204 = vmax.f32 %v4168, 0.0
      %v4205 = vmax.f32 %v4169, 0.0
      %v4206 = vmax.f32 %v4170, 0.0
      %v4207 = vmax.f32 %v4171, 0.0
      %v4208 = vmax.f32 %v4172, 0.0
      %v4209 = vmax.f32 %v4173, 0.0
      %v4210 = vmax.f32 %v4174, 0.0
      %v4211 = vmax.f32 %v4175, 0.0
      %v4212 = vmax.f32 %v4176, 0.0
      %v4213 = vmax.f32 %v4177, 0.0
      %v4214 = vmax.f32 %v4178, 0.0
      %v4215 = vmax.f32 %v4179, 0.0
      %v4216 = vmax.f32 %v4180, 0.0
      %v4217 = vmax.f32 %v4181, 0.0
      %v4218 = vmax.f32 %v4182, 0.0
      %v4219 = vmax.f32 %v4183, 0.0
      %v4220 = vmax.f32 %v4184, 0.0
      %v4221 = vmax.f32 %v4185, 0.0
      %v4222 = vmax.f32 %v4186, 0.0
      %v4223 = vmax.f32 %v4187, 0.0
      %v4224 = vmax.f32 %v4188, 0.0
      %v4225 = vmax.f32 %v4189, 0.0
      %v4226 = vmax.f32 %v4190, 0.0
      %v4227 = vmax.f32 %v4191, 0.0
      %v4228 = vmax.f32 %v4192, 0.0
      %v4229 = vmax.f32 %v4193, 0.0
      %v4230 = vmax.f32 %v4194, 0.0
      %v4231 = vmax.f32 %v4195, 0.0
      %4232 = vst.msk [vmem:[%s305] sm:$0xff] %vm381, %v4196
      %4233 = vst.msk [vmem:[%s305 + $0x8] sm:$0xff] %vm381, %v4197
      %4234 = vst.msk [vmem:[%s305 + $0x10] sm:$0xff] %vm381, %v4198
      %4235 = vst.msk [vmem:[%s305 + $0x18] sm:$0xff] %vm381, %v4199
      %4236 = vst.msk [vmem:[%s305 + $0x20] sm:$0xff] %vm381, %v4200
      %4237 = vst.msk [vmem:[%s305 + $0x28] sm:$0xff] %vm381, %v4201
      %4238 = vst.msk [vmem:[%s305 + $0x30] sm:$0xff] %vm381, %v4202
      %4239 = vst.msk [vmem:[%s305 + $0x38] sm:$0xff] %vm381, %v4203
      %4240 = vst.msk [vmem:[%s305 + $0x40] sm:$0xff] %vm381, %v4204
      %4241 = vst.msk [vmem:[%s305 + $0x48] sm:$0xff] %vm381, %v4205
      %4242 = vst.msk [vmem:[%s305 + $0x50] sm:$0xff] %vm381, %v4206
      %4243 = vst.msk [vmem:[%s305 + $0x58] sm:$0xff] %vm381, %v4207
      %4244 = vst.msk [vmem:[%s305 + $0x60] sm:$0xff] %vm381, %v4208
      %4245 = vst.msk [vmem:[%s305 + $0x68] sm:$0xff] %vm381, %v4209
      %4246 = vst.msk [vmem:[%s305 + $0x70] sm:$0xff] %vm381, %v4210
      %4247 = vst.msk [vmem:[%s305 + $0x78] sm:$0xff] %vm381, %v4211
      %4248 = vst.msk [vmem:[%s305 + $0x80] sm:$0xff] %vm381, %v4212
      %4249 = vst.msk [vmem:[%s305 + $0x88] sm:$0xff] %vm381, %v4213
      %4250 = vst.msk [vmem:[%s305 + $0x90] sm:$0xff] %vm381, %v4214
      %4251 = vst.msk [vmem:[%s305 + $0x98] sm:$0xff] %vm381, %v4215
      %4252 = vst.msk [vmem:[%s305 + $0xa0] sm:$0xff] %vm381, %v4216
      %4253 = vst.msk [vmem:[%s305 + $0xa8] sm:$0xff] %vm381, %v4217
      %4254 = vst.msk [vmem:[%s305 + $0xb0] sm:$0xff] %vm381, %v4218
      %4255 = vst.msk [vmem:[%s305 + $0xb8] sm:$0xff] %vm381, %v4219
      %4256 = vst.msk [vmem:[%s305 + $0xc0] sm:$0xff] %vm381, %v4220
      %4257 = vst.msk [vmem:[%s305 + $0xc8] sm:$0xff] %vm381, %v4221
      %4258 = vst.msk [vmem:[%s305 + $0xd0] sm:$0xff] %vm381, %v4222
      %4259 = vst.msk [vmem:[%s305 + $0xd8] sm:$0xff] %vm381, %v4223
      %4260 = vst.msk [vmem:[%s305 + $0xe0] sm:$0xff] %vm381, %v4224
      %4261 = vst.msk [vmem:[%s305 + $0xe8] sm:$0xff] %vm381, %v4225
      %4262 = vst.msk [vmem:[%s305 + $0xf0] sm:$0xff] %vm381, %v4226
      %4263 = vst.msk [vmem:[%s305 + $0xf8] sm:$0xff] %vm381, %v4227
      %4264 = vst.msk [vmem:[%s305 + $0x100] sm:$0xff] %vm381, %v4228
      %4265 = vst.msk [vmem:[%s305 + $0x108] sm:$0xff] %vm381, %v4229
      %4266 = vst.msk [vmem:[%s305 + $0x110] sm:$0xff] %vm381, %v4230
      %4267 = vst.msk [vmem:[%s305 + $0x118] sm:$0xff] %vm381, %v4231
      %p4268 = scmp.lt.s32.totalorder %s19, 1
      %s4269 = scalar_select %p4268, %s19, 1
      %s4270 = smul.addr %s4269, 36
      %s4271 = smul.addr %s4270, 8
      %s4272 = scalar_lea.vmem %s8, %s4271
      // Predicated region
      $region53: #{tpu_custom_call.1} parent=51 // pred_check
        %p4273 = pneg %p210
      $region54: #{tpu_custom_call.1} parent=51 // pred_check_branch
        %4275 = sbr.rel (%p4273) target = $region56
      $region55: #{tpu_custom_call.1} parent=51 // pred_region
        _
      $region56: #{tpu_custom_call.1} parent=51 // pred_fallthru
        _
    $region52: #{tpu_custom_call.1} parent=5 // pred_fallthru
      _
    %p4276 = scmp.le.s32.totalorder 2, %s14
    // Predicated region
    $region57: #{tpu_custom_call.1} parent=5 // pred_check
      %p4277 = pneg %p4276
    $region58: #{tpu_custom_call.1} parent=5 // pred_check_branch
      %4279 = sbr.rel (%p4277) target = $region60
    $region59: #{tpu_custom_call.1} parent=5 // pred_region
      %s4280 = ssub.s32 %s14, 2
      // Predicated region
      $region61: #{tpu_custom_call.1} parent=59 // pred_check
        %p4281 = pneg %p216
      $region62: #{tpu_custom_call.1} parent=59 // pred_check_branch
        %4283 = sbr.rel (%p4281) target = $region64
      $region63: #{tpu_custom_call.1} parent=59 // pred_region
        %p4284 = scmp.lt.s32.totalorder %s20, 1
        %s4285 = scalar_select %p4284, %s20, 1
        %s4286 = smul.addr %s4285, 36
        %s4287 = smul.addr %s4286, 8
        %s4288 = scalar_lea.vmem %s8, %s4287
      $region64: #{tpu_custom_call.1} parent=59 // pred_fallthru
        _
    $region60: #{tpu_custom_call.1} parent=5 // pred_fallthru
      _
  $region6: #{tpu_custom_call.1} parent=0 // loop_footer
    %s18 = sadd.s32 1, %s14
  $region7: #{tpu_custom_call.1} parent=0 // loop_footer_branch
    %13 = sbr.rel target = $region3
  $region8: #{tpu_custom_call.1} parent=0 // loop_exit
    _

</llo_original>
